<compile_context>
chip_gen: v6e
topology: v6e:2x2x1
jax: 0.10.0
libtpu: 0.0.40
codegen_flags: <defaults>
</compile_context>

<pallas_src>
import jax
import jax.numpy as jnp
from jax import lax
from jax.experimental import pallas as pl
from jax.experimental.pallas import tpu as pltpu


def _round_up(x, m):
    return (x + m - 1) // m * m


def bottleneck_kernel(x_ref, w1_ref, b1_ref, w2_ref, b2_ref, w3_ref, b3_ref,
                      o_ref, pad_ref):
    # x_ref:   (Nb, H, W, Cin)          bf16   Nb images of the batch
    # w1_ref:  (Cin, width)             bf16   1x1 conv (BN1 scale folded)
    # w2_ref:  (9*width, width)         bf16   3x3 conv, HWIO flattened (BN2 folded)
    # w3_ref:  (width, Cout)            bf16   1x1 conv (BN3 scale folded)
    # b*_ref:  (1, C)                   f32    folded BatchNorm biases
    # pad_ref: (Nb, H+2, Wp, width)     bf16   zero-padded conv2 input (VMEM scratch)
    Nb, H, W, Cin = x_ref.shape
    width = w1_ref.shape[1]
    Cout = w3_ref.shape[1]
    M = Nb * H * W

    # ---- conv1 (1x1) + bn1 + relu (scale pre-folded into w1) -----------
    x2d = x_ref[...].reshape(M, Cin)                      # bf16
    h1 = jnp.dot(x2d, w1_ref[...], preferred_element_type=jnp.float32)
    h1 = jnp.maximum(h1 + b1_ref[...], 0.0)               # (M, width) f32

    # ---- conv2 (3x3, stride=1, padding=1) + bn2 + relu -----------------
    # Zero only the halo that is actually read (perimeter of the (H+2, W+2)
    # window); the interior is fully rewritten every step, so this stays
    # correct when the 'parallel' axis is sharded across TensorCores.
    pad_ref[:, 0:1, :, :] = jnp.zeros(
        (Nb, 1, pad_ref.shape[2], width), jnp.bfloat16)
    pad_ref[:, H + 1:H + 2, :, :] = jnp.zeros(
        (Nb, 1, pad_ref.shape[2], width), jnp.bfloat16)
    pad_ref[:, :, 0:1, :] = jnp.zeros((Nb, H + 2, 1, width), jnp.bfloat16)
    pad_ref[:, :, W + 1:W + 2, :] = jnp.zeros((Nb, H + 2, 1, width), jnp.bfloat16)
    pad_ref[:, 1:H + 1, 1:W + 1, :] = h1.astype(jnp.bfloat16).reshape(
        Nb, H, W, width)

    # 9 shifted matmuls accumulated in f32 (no explicit im2col buffer).
    acc = None
    for dy in range(3):
        for dx in range(3):
            j = dy * 3 + dx
            patch = pad_ref[:, dy:dy + H, dx:dx + W, :].reshape(M, width)
            part = jnp.dot(patch, w2_ref[j * width:(j + 1) * width, :],
                           preferred_element_type=jnp.float32)
            acc = part if acc is None else acc + part
    h2 = jnp.maximum(acc + b2_ref[...], 0.0)               # (M, width) f32

    # ---- conv3 (1x1) + bn3 + residual add + relu ------------------------
    h3 = jnp.dot(h2.astype(jnp.bfloat16), w3_ref[...],
                 preferred_element_type=jnp.float32)
    h3 = h3 + b3_ref[...]
    # Identity residual: re-read x only now (short f32 live range).
    xres = x_ref[...].reshape(M, Cin).astype(jnp.float32)
    out = jnp.maximum(h3 + xres, 0.0)
    o_ref[...] = out.reshape(Nb, H, W, Cout).astype(o_ref.dtype)


def _step_footprint_bytes(Nb, H, W, Cin, width, Cout):
    """Rough per-grid-step VMEM footprint (double-buffered I/O + scratch)."""
    Wp = _round_up(W + 2, 8)
    bpe = 2  # bf16
    in_blk = Nb * H * W * Cin * bpe
    out_blk = Nb * H * W * Cout * bpe
    pad = Nb * (H + 2) * Wp * width * bpe
    inter = Nb * H * W * (3 * width + Cout) * 4            # f32 h1/h2/acc/h3
    wts = (Cin * width + 9 * width * width + width * Cout) * bpe
    return 2 * in_blk + 2 * out_blk + pad + inter + wts


def _pick_images_per_block(N, H, W, Cin, width, Cout, *,
                           m_target=512, vmem_budget=48 << 20):
    """Largest divisor of N that keeps matmul M near m_target, keeps the
    'parallel' grid >= 2 steps (megacore), and fits the VMEM budget.
    Falls back to 1 (perf-only: M may drop below the MXU-filling target)."""
    nb_cap = max(1, m_target // (H * W))
    if N >= 2:
        nb_cap = min(nb_cap, N // 2)
    nb_cap = max(1, min(nb_cap, N))
    for nb in range(nb_cap, 0, -1):
        if N % nb == 0 and _step_footprint_bytes(
                nb, H, W, Cin, width, Cout) <= vmem_budget:
            return nb
    return 1


def bottleneck_forward(x_nhwc, w1, b1, w2_flat, b2, w3, b3, *,
                       images_per_block=None):
    N, H, W, Cin = x_nhwc.shape
    width = w1.shape[1]
    Cout = w3.shape[1]
    assert Cin == Cout, (
        "identity residual requires inplanes == planes * expansion "
        "(stride>1 / downsample branch not implemented)")
    assert w2_flat.shape == (9 * width, width)

    if images_per_block is None:
        images_per_block = _pick_images_per_block(N, H, W, Cin, width, Cout)
    Nb = images_per_block
    assert N % Nb == 0, "images_per_block must divide the batch"

    Wp = _round_up(W + 2, 8)
    footprint = _step_footprint_bytes(Nb, H, W, Cin, width, Cout)
    vmem_limit = min(max(2 * footprint + (8 << 20), 32 << 20), 96 << 20)

    x_bf = x_nhwc.astype(jnp.bfloat16)

    grid_spec = pltpu.PrefetchScalarGridSpec(
        num_scalar_prefetch=0,
        grid=(N // Nb,),
        in_specs=[
            pl.BlockSpec((Nb, H, W, Cin), lambda n: (n, 0, 0, 0)),
            pl.BlockSpec((Cin, width), lambda n: (0, 0)),
            pl.BlockSpec((1, width), lambda n: (0, 0)),
            pl.BlockSpec((9 * width, width), lambda n: (0, 0)),
            pl.BlockSpec((1, width), lambda n: (0, 0)),
            pl.BlockSpec((width, Cout), lambda n: (0, 0)),
            pl.BlockSpec((1, Cout), lambda n: (0, 0)),
        ],
        out_specs=pl.BlockSpec((Nb, H, W, Cout), lambda n: (n, 0, 0, 0)),
        scratch_shapes=[
            pltpu.VMEM((Nb, H + 2, Wp, width), jnp.bfloat16),   # padded act
        ],
    )
    return pl.pallas_call(
        bottleneck_kernel,
        out_shape=jax.ShapeDtypeStruct((N, H, W, Cout), jnp.bfloat16),
        grid_spec=grid_spec,
        compiler_params=pltpu.CompilerParams(
            dimension_semantics=("parallel",),
            vmem_limit_bytes=int(vmem_limit)),
    )(x_bf, w1, b1, w2_flat, b2, w3, b3)


def fold_bn_into_conv(w, gamma, beta, mean, var, eps=1e-5):
    """Fold inference BatchNorm into a conv weight whose LAST axis is the
    output-channel axis (channel-matmul / HWIO layouts). Returns (w*scale,
    bias[(1, C)])."""
    scale = gamma / jnp.sqrt(var + eps)
    bias = beta - mean * scale
    return w * scale, bias[None, :].astype(jnp.float32)


def reference_forward(x_bf16, w1b, b1, w2b_hwio, b2, w3b, b3):
    """lax reference mirroring the kernel's inference realization:
    BN scale folded into bf16 weights, bf16 conv operands, f32 accumulation,
    f32 bias/ReLU/residual, bf16 output."""
    dn = ("NHWC", "HWIO", "NHWC")
    h = lax.conv_general_dilated(
        x_bf16, w1b[None, None], (1, 1), "VALID",
        dimension_numbers=dn, preferred_element_type=jnp.float32)
    h = jnp.maximum(h + b1, 0.0)
    h = lax.conv_general_dilated(
        h.astype(jnp.bfloat16), w2b_hwio, (1, 1), ((1, 1), (1, 1)),
        dimension_numbers=dn, preferred_element_type=jnp.float32)
    h = jnp.maximum(h + b2, 0.0)
    h = lax.conv_general_dilated(
        h.astype(jnp.bfloat16), w3b[None, None], (1, 1), "VALID",
        dimension_numbers=dn, preferred_element_type=jnp.float32)
    h = h + b3
    out = jnp.maximum(h + x_bf16.astype(jnp.float32), 0.0)
    return out.astype(jnp.bfloat16)


if __name__ == "__main__":
    # Bottleneck(inplanes=64, planes=16): width = 16, out channels = 64.
    N, H, W = 4, 8, 8
    inplanes, planes = 64, 16
    width = planes               # base_width=64, groups=1
    cout = planes * 4            # expansion = 4

    key = jax.random.PRNGKey(0)
    keys = jax.random.split(key, 16)

    # Input in PyTorch NCHW convention, then moved to NHWC for the kernel.
    x_nchw = jax.random.normal(keys[0], (N, inplanes, H, W), jnp.float32)
    x_nhwc = jnp.transpose(x_nchw, (0, 2, 3, 1))

    # Conv weights (channel-matmul / HWIO layouts).
    w1 = 0.1 * jax.random.normal(keys[1], (inplanes, width), jnp.float32)
    w2 = 0.1 * jax.random.normal(keys[2], (3, 3, width, width), jnp.float32)
    w3 = 0.1 * jax.random.normal(keys[3], (width, cout), jnp.float32)

    # BatchNorm parameters (gamma, beta, running_mean, running_var).
    def bn_params(k, c):
        ka, kb, kc, kd = jax.random.split(k, 4)
        gamma = jax.random.uniform(ka, (c,), jnp.float32, 0.5, 1.5)
        beta = 0.1 * jax.random.normal(kb, (c,), jnp.float32)
        mean = 0.1 * jax.random.normal(kc, (c,), jnp.float32)
        var = jax.random.uniform(kd, (c,), jnp.float32, 0.5, 1.5)
        return gamma, beta, mean, var

    # Host-side prep: fold BN scale into conv weights, cast MXU weights to bf16.
    w1f, b1 = fold_bn_into_conv(w1, *bn_params(keys[4], width))
    w2f, b2 = fold_bn_into_conv(w2, *bn_params(keys[5], width))
    w3f, b3 = fold_bn_into_conv(w3, *bn_params(keys[6], cout))

    w1b = w1f.astype(jnp.bfloat16)                          # (Cin, width)
    w2b_hwio = w2f.astype(jnp.bfloat16)                     # (3, 3, width, width)
    w2b = w2b_hwio.reshape(9 * width, width)                # HWIO flattened
    w3b = w3f.astype(jnp.bfloat16)                          # (width, Cout)

    out = bottleneck_forward(x_nhwc, w1b, b1, w2b, b2, w3b, b3)
    out = jax.block_until_ready(out)

    ref = reference_forward(x_nhwc.astype(jnp.bfloat16), w1b, b1,
                            w2b_hwio, b2, w3b, b3)
    assert out.shape == (N, H, W, cout)
    assert jnp.allclose(out.astype(jnp.float32), ref.astype(jnp.float32),
                        rtol=3e-2, atol=3e-2), "mismatch vs reference"

    print("KERNEL_OK")
</pallas_src>

<mosaic_0001>
module attributes {stable_mosaic.version = 11 : i64} {
  func.func @bottleneck_kernel(%arg0: i32, %arg1: memref<2x8x8x64xbf16, #tpu.memory_space<vmem>>, %arg2: memref<64x16xbf16, #tpu.memory_space<vmem>>, %arg3: memref<1x16xf32, #tpu.memory_space<vmem>>, %arg4: memref<144x16xbf16, #tpu.memory_space<vmem>>, %arg5: memref<1x16xf32, #tpu.memory_space<vmem>>, %arg6: memref<16x64xbf16, #tpu.memory_space<vmem>>, %arg7: memref<1x64xf32, #tpu.memory_space<vmem>>, %arg8: memref<2x8x8x64xbf16, #tpu.memory_space<vmem>>, %arg9: memref<2x10x16x16xbf16, #tpu.memory_space<vmem>>) attributes {dimension_semantics = [#tpu.dimension_semantics<parallel>], iteration_bounds = array<i64: 2>, scalar_prefetch = 0 : i64, scratch_operands = 1 : i64, tpu.core_type = #tpu.core_type<tc>, window_params = [{transform_indices = @transform_0, window_bounds = array<i64: 2, 8, 8, 64>}, {pipeline_mode = #tpu.pipeline_mode<synchronous>, transform_indices = @transform_1, window_bounds = array<i64: 64, 16>}, {pipeline_mode = #tpu.pipeline_mode<synchronous>, transform_indices = @transform_2, window_bounds = array<i64: 1, 16>}, {pipeline_mode = #tpu.pipeline_mode<synchronous>, transform_indices = @transform_3, window_bounds = array<i64: 144, 16>}, {pipeline_mode = #tpu.pipeline_mode<synchronous>, transform_indices = @transform_4, window_bounds = array<i64: 1, 16>}, {pipeline_mode = #tpu.pipeline_mode<synchronous>, transform_indices = @transform_5, window_bounds = array<i64: 16, 64>}, {pipeline_mode = #tpu.pipeline_mode<synchronous>, transform_indices = @transform_6, window_bounds = array<i64: 1, 64>}, {transform_indices = @transform_7, window_bounds = array<i64: 2, 8, 8, 64>}]} {
    %c0 = arith.constant 0 : index
    %c0_0 = arith.constant 0 : index
    %c0_1 = arith.constant 0 : index
    %c0_2 = arith.constant 0 : index
    %0 = vector.load %arg1[%c0, %c0_0, %c0_1, %c0_2] : memref<2x8x8x64xbf16, #tpu.memory_space<vmem>>, vector<2x8x8x64xbf16>
    %1 = vector.shape_cast %0 : vector<2x8x8x64xbf16> to vector<128x64xbf16>
    %c0_3 = arith.constant 0 : index
    %c0_4 = arith.constant 0 : index
    %2 = vector.load %arg2[%c0_3, %c0_4] : memref<64x16xbf16, #tpu.memory_space<vmem>>, vector<64x16xbf16>
    %cst = arith.constant dense<0.000000e+00> : vector<128x16xf32>
    %3 = tpu.matmul %1, %2, %cst {dimension_numbers = #tpu.dot_dimension_numbers<[1], [0], [0], [1], [0, 0, 1, 1], [], []>} : vector<128x64xbf16>, vector<64x16xbf16>, vector<128x16xf32> -> vector<128x16xf32>
    %c0_5 = arith.constant 0 : index
    %c0_6 = arith.constant 0 : index
    %4 = vector.load %arg3[%c0_5, %c0_6] : memref<1x16xf32, #tpu.memory_space<vmem>>, vector<1x16xf32>
    %5 = vector.broadcast %4 : vector<1x16xf32> to vector<128x16xf32>
    %6 = arith.addf %3, %5 : vector<128x16xf32>
    %cst_7 = arith.constant 0.000000e+00 : f32
    %7 = vector.broadcast %cst_7 : f32 to vector<128x16xf32>
    %8 = arith.maximumf %6, %7 : vector<128x16xf32>
    %cst_8 = arith.constant 0.000000e+00 : bf16
    %9 = vector.broadcast %cst_8 : bf16 to vector<2x1x16x16xbf16>
    %c0_9 = arith.constant 0 : index
    %c0_10 = arith.constant 0 : index
    %c0_11 = arith.constant 0 : index
    %c0_12 = arith.constant 0 : index
    %10 = vector.load %arg9[%c0_9, %c0_10, %c0_11, %c0_12] : memref<2x10x16x16xbf16, #tpu.memory_space<vmem>>, vector<2x1x16x16xbf16>
    tpu.vector_store %arg9[%c0_9, %c0_10, %c0_11, %c0_12], %9 {strides = array<i32>} : memref<2x10x16x16xbf16, #tpu.memory_space<vmem>>, vector<2x1x16x16xbf16>,
    %cst_13 = arith.constant 0.000000e+00 : bf16
    %11 = vector.broadcast %cst_13 : bf16 to vector<2x1x16x16xbf16>
    %c0_14 = arith.constant 0 : index
    %c9 = arith.constant 9 : index
    %c0_15 = arith.constant 0 : index
    %c0_16 = arith.constant 0 : index
    %12 = vector.load %arg9[%c0_14, %c9, %c0_15, %c0_16] : memref<2x10x16x16xbf16, #tpu.memory_space<vmem>>, vector<2x1x16x16xbf16>
    tpu.vector_store %arg9[%c0_14, %c9, %c0_15, %c0_16], %11 {strides = array<i32>} : memref<2x10x16x16xbf16, #tpu.memory_space<vmem>>, vector<2x1x16x16xbf16>,
    %cst_17 = arith.constant 0.000000e+00 : bf16
    %13 = vector.broadcast %cst_17 : bf16 to vector<2x10x1x16xbf16>
    %c0_18 = arith.constant 0 : index
    %c0_19 = arith.constant 0 : index
    %c0_20 = arith.constant 0 : index
    %c0_21 = arith.constant 0 : index
    %14 = vector.load %arg9[%c0_18, %c0_19, %c0_20, %c0_21] : memref<2x10x16x16xbf16, #tpu.memory_space<vmem>>, vector<2x10x1x16xbf16>
    tpu.vector_store %arg9[%c0_18, %c0_19, %c0_20, %c0_21], %13 {strides = array<i32>} : memref<2x10x16x16xbf16, #tpu.memory_space<vmem>>, vector<2x10x1x16xbf16>,
    %cst_22 = arith.constant 0.000000e+00 : bf16
    %15 = vector.broadcast %cst_22 : bf16 to vector<2x10x1x16xbf16>
    %c0_23 = arith.constant 0 : index
    %c0_24 = arith.constant 0 : index
    %c9_25 = arith.constant 9 : index
    %c0_26 = arith.constant 0 : index
    %16 = vector.load %arg9[%c0_23, %c0_24, %c9_25, %c0_26] : memref<2x10x16x16xbf16, #tpu.memory_space<vmem>>, vector<2x10x1x16xbf16>
    tpu.vector_store %arg9[%c0_23, %c0_24, %c9_25, %c0_26], %15 {strides = array<i32>} : memref<2x10x16x16xbf16, #tpu.memory_space<vmem>>, vector<2x10x1x16xbf16>,
    %17 = arith.truncf %8 : vector<128x16xf32> to vector<128x16xbf16>
    %18 = vector.shape_cast %17 : vector<128x16xbf16> to vector<2x8x8x16xbf16>
    %c0_27 = arith.constant 0 : index
    %c1 = arith.constant 1 : index
    %c1_28 = arith.constant 1 : index
    %c0_29 = arith.constant 0 : index
    %19 = vector.load %arg9[%c0_27, %c1, %c1_28, %c0_29] : memref<2x10x16x16xbf16, #tpu.memory_space<vmem>>, vector<2x8x8x16xbf16>
    tpu.vector_store %arg9[%c0_27, %c1, %c1_28, %c0_29], %18 {strides = array<i32>} : memref<2x10x16x16xbf16, #tpu.memory_space<vmem>>, vector<2x8x8x16xbf16>,
    %c0_30 = arith.constant 0 : index
    %c0_31 = arith.constant 0 : index
    %c0_32 = arith.constant 0 : index
    %c0_33 = arith.constant 0 : index
    %20 = vector.load %arg9[%c0_30, %c0_31, %c0_32, %c0_33] : memref<2x10x16x16xbf16, #tpu.memory_space<vmem>>, vector<2x8x8x16xbf16>
    %21 = vector.shape_cast %20 : vector<2x8x8x16xbf16> to vector<128x16xbf16>
    %c0_34 = arith.constant 0 : index
    %c0_35 = arith.constant 0 : index
    %22 = vector.load %arg4[%c0_34, %c0_35] : memref<144x16xbf16, #tpu.memory_space<vmem>>, vector<16x16xbf16>
    %cst_36 = arith.constant dense<0.000000e+00> : vector<128x16xf32>
    %23 = tpu.matmul %21, %22, %cst_36 {dimension_numbers = #tpu.dot_dimension_numbers<[1], [0], [0], [1], [0, 0, 1, 1], [], []>} : vector<128x16xbf16>, vector<16x16xbf16>, vector<128x16xf32> -> vector<128x16xf32>
    %c0_37 = arith.constant 0 : index
    %c0_38 = arith.constant 0 : index
    %c1_39 = arith.constant 1 : index
    %c0_40 = arith.constant 0 : index
    %24 = vector.load %arg9[%c0_37, %c0_38, %c1_39, %c0_40] : memref<2x10x16x16xbf16, #tpu.memory_space<vmem>>, vector<2x8x8x16xbf16>
    %25 = vector.shape_cast %24 : vector<2x8x8x16xbf16> to vector<128x16xbf16>
    %c16 = arith.constant 16 : index
    %c0_41 = arith.constant 0 : index
    %26 = vector.load %arg4[%c16, %c0_41] : memref<144x16xbf16, #tpu.memory_space<vmem>>, vector<16x16xbf16>
    %cst_42 = arith.constant dense<0.000000e+00> : vector<128x16xf32>
    %27 = tpu.matmul %25, %26, %cst_42 {dimension_numbers = #tpu.dot_dimension_numbers<[1], [0], [0], [1], [0, 0, 1, 1], [], []>} : vector<128x16xbf16>, vector<16x16xbf16>, vector<128x16xf32> -> vector<128x16xf32>
    %28 = arith.addf %23, %27 : vector<128x16xf32>
    %c0_43 = arith.constant 0 : index
    %c0_44 = arith.constant 0 : index
    %c2 = arith.constant 2 : index
    %c0_45 = arith.constant 0 : index
    %29 = vector.load %arg9[%c0_43, %c0_44, %c2, %c0_45] : memref<2x10x16x16xbf16, #tpu.memory_space<vmem>>, vector<2x8x8x16xbf16>
    %30 = vector.shape_cast %29 : vector<2x8x8x16xbf16> to vector<128x16xbf16>
    %c32 = arith.constant 32 : index
    %c0_46 = arith.constant 0 : index
    %31 = vector.load %arg4[%c32, %c0_46] : memref<144x16xbf16, #tpu.memory_space<vmem>>, vector<16x16xbf16>
    %cst_47 = arith.constant dense<0.000000e+00> : vector<128x16xf32>
    %32 = tpu.matmul %30, %31, %cst_47 {dimension_numbers = #tpu.dot_dimension_numbers<[1], [0], [0], [1], [0, 0, 1, 1], [], []>} : vector<128x16xbf16>, vector<16x16xbf16>, vector<128x16xf32> -> vector<128x16xf32>
    %33 = arith.addf %28, %32 : vector<128x16xf32>
    %c0_48 = arith.constant 0 : index
    %c1_49 = arith.constant 1 : index
    %c0_50 = arith.constant 0 : index
    %c0_51 = arith.constant 0 : index
    %34 = vector.load %arg9[%c0_48, %c1_49, %c0_50, %c0_51] : memref<2x10x16x16xbf16, #tpu.memory_space<vmem>>, vector<2x8x8x16xbf16>
    %35 = vector.shape_cast %34 : vector<2x8x8x16xbf16> to vector<128x16xbf16>
    %c48 = arith.constant 48 : index
    %c0_52 = arith.constant 0 : index
    %36 = vector.load %arg4[%c48, %c0_52] : memref<144x16xbf16, #tpu.memory_space<vmem>>, vector<16x16xbf16>
    %cst_53 = arith.constant dense<0.000000e+00> : vector<128x16xf32>
    %37 = tpu.matmul %35, %36, %cst_53 {dimension_numbers = #tpu.dot_dimension_numbers<[1], [0], [0], [1], [0, 0, 1, 1], [], []>} : vector<128x16xbf16>, vector<16x16xbf16>, vector<128x16xf32> -> vector<128x16xf32>
    %38 = arith.addf %33, %37 : vector<128x16xf32>
    %c0_54 = arith.constant 0 : index
    %c1_55 = arith.constant 1 : index
    %c1_56 = arith.constant 1 : index
    %c0_57 = arith.constant 0 : index
    %39 = vector.load %arg9[%c0_54, %c1_55, %c1_56, %c0_57] : memref<2x10x16x16xbf16, #tpu.memory_space<vmem>>, vector<2x8x8x16xbf16>
    %40 = vector.shape_cast %39 : vector<2x8x8x16xbf16> to vector<128x16xbf16>
    %c64 = arith.constant 64 : index
    %c0_58 = arith.constant 0 : index
    %41 = vector.load %arg4[%c64, %c0_58] : memref<144x16xbf16, #tpu.memory_space<vmem>>, vector<16x16xbf16>
    %cst_59 = arith.constant dense<0.000000e+00> : vector<128x16xf32>
    %42 = tpu.matmul %40, %41, %cst_59 {dimension_numbers = #tpu.dot_dimension_numbers<[1], [0], [0], [1], [0, 0, 1, 1], [], []>} : vector<128x16xbf16>, vector<16x16xbf16>, vector<128x16xf32> -> vector<128x16xf32>
    %43 = arith.addf %38, %42 : vector<128x16xf32>
    %c0_60 = arith.constant 0 : index
    %c1_61 = arith.constant 1 : index
    %c2_62 = arith.constant 2 : index
    %c0_63 = arith.constant 0 : index
    %44 = vector.load %arg9[%c0_60, %c1_61, %c2_62, %c0_63] : memref<2x10x16x16xbf16, #tpu.memory_space<vmem>>, vector<2x8x8x16xbf16>
    %45 = vector.shape_cast %44 : vector<2x8x8x16xbf16> to vector<128x16xbf16>
    %c80 = arith.constant 80 : index
    %c0_64 = arith.constant 0 : index
    %46 = vector.load %arg4[%c80, %c0_64] : memref<144x16xbf16, #tpu.memory_space<vmem>>, vector<16x16xbf16>
    %cst_65 = arith.constant dense<0.000000e+00> : vector<128x16xf32>
    %47 = tpu.matmul %45, %46, %cst_65 {dimension_numbers = #tpu.dot_dimension_numbers<[1], [0], [0], [1], [0, 0, 1, 1], [], []>} : vector<128x16xbf16>, vector<16x16xbf16>, vector<128x16xf32> -> vector<128x16xf32>
    %48 = arith.addf %43, %47 : vector<128x16xf32>
    %c0_66 = arith.constant 0 : index
    %c2_67 = arith.constant 2 : index
    %c0_68 = arith.constant 0 : index
    %c0_69 = arith.constant 0 : index
    %49 = vector.load %arg9[%c0_66, %c2_67, %c0_68, %c0_69] : memref<2x10x16x16xbf16, #tpu.memory_space<vmem>>, vector<2x8x8x16xbf16>
    %50 = vector.shape_cast %49 : vector<2x8x8x16xbf16> to vector<128x16xbf16>
    %c96 = arith.constant 96 : index
    %c0_70 = arith.constant 0 : index
    %51 = vector.load %arg4[%c96, %c0_70] : memref<144x16xbf16, #tpu.memory_space<vmem>>, vector<16x16xbf16>
    %cst_71 = arith.constant dense<0.000000e+00> : vector<128x16xf32>
    %52 = tpu.matmul %50, %51, %cst_71 {dimension_numbers = #tpu.dot_dimension_numbers<[1], [0], [0], [1], [0, 0, 1, 1], [], []>} : vector<128x16xbf16>, vector<16x16xbf16>, vector<128x16xf32> -> vector<128x16xf32>
    %53 = arith.addf %48, %52 : vector<128x16xf32>
    %c0_72 = arith.constant 0 : index
    %c2_73 = arith.constant 2 : index
    %c1_74 = arith.constant 1 : index
    %c0_75 = arith.constant 0 : index
    %54 = vector.load %arg9[%c0_72, %c2_73, %c1_74, %c0_75] : memref<2x10x16x16xbf16, #tpu.memory_space<vmem>>, vector<2x8x8x16xbf16>
    %55 = vector.shape_cast %54 : vector<2x8x8x16xbf16> to vector<128x16xbf16>
    %c112 = arith.constant 112 : index
    %c0_76 = arith.constant 0 : index
    %56 = vector.load %arg4[%c112, %c0_76] : memref<144x16xbf16, #tpu.memory_space<vmem>>, vector<16x16xbf16>
    %cst_77 = arith.constant dense<0.000000e+00> : vector<128x16xf32>
    %57 = tpu.matmul %55, %56, %cst_77 {dimension_numbers = #tpu.dot_dimension_numbers<[1], [0], [0], [1], [0, 0, 1, 1], [], []>} : vector<128x16xbf16>, vector<16x16xbf16>, vector<128x16xf32> -> vector<128x16xf32>
    %58 = arith.addf %53, %57 : vector<128x16xf32>
    %c0_78 = arith.constant 0 : index
    %c2_79 = arith.constant 2 : index
    %c2_80 = arith.constant 2 : index
    %c0_81 = arith.constant 0 : index
    %59 = vector.load %arg9[%c0_78, %c2_79, %c2_80, %c0_81] : memref<2x10x16x16xbf16, #tpu.memory_space<vmem>>, vector<2x8x8x16xbf16>
    %60 = vector.shape_cast %59 : vector<2x8x8x16xbf16> to vector<128x16xbf16>
    %c128 = arith.constant 128 : index
    %c0_82 = arith.constant 0 : index
    %61 = vector.load %arg4[%c128, %c0_82] : memref<144x16xbf16, #tpu.memory_space<vmem>>, vector<16x16xbf16>
    %cst_83 = arith.constant dense<0.000000e+00> : vector<128x16xf32>
    %62 = tpu.matmul %60, %61, %cst_83 {dimension_numbers = #tpu.dot_dimension_numbers<[1], [0], [0], [1], [0, 0, 1, 1], [], []>} : vector<128x16xbf16>, vector<16x16xbf16>, vector<128x16xf32> -> vector<128x16xf32>
    %63 = arith.addf %58, %62 : vector<128x16xf32>
    %c0_84 = arith.constant 0 : index
    %c0_85 = arith.constant 0 : index
    %64 = vector.load %arg5[%c0_84, %c0_85] : memref<1x16xf32, #tpu.memory_space<vmem>>, vector<1x16xf32>
    %65 = vector.broadcast %64 : vector<1x16xf32> to vector<128x16xf32>
    %66 = arith.addf %63, %65 : vector<128x16xf32>
    %cst_86 = arith.constant 0.000000e+00 : f32
    %67 = vector.broadcast %cst_86 : f32 to vector<128x16xf32>
    %68 = arith.maximumf %66, %67 : vector<128x16xf32>
    %69 = arith.truncf %68 : vector<128x16xf32> to vector<128x16xbf16>
    %c0_87 = arith.constant 0 : index
    %c0_88 = arith.constant 0 : index
    %70 = vector.load %arg6[%c0_87, %c0_88] : memref<16x64xbf16, #tpu.memory_space<vmem>>, vector<16x64xbf16>
    %cst_89 = arith.constant dense<0.000000e+00> : vector<128x64xf32>
    %71 = tpu.matmul %69, %70, %cst_89 {dimension_numbers = #tpu.dot_dimension_numbers<[1], [0], [0], [1], [0, 0, 1, 1], [], []>} : vector<128x16xbf16>, vector<16x64xbf16>, vector<128x64xf32> -> vector<128x64xf32>
    %c0_90 = arith.constant 0 : index
    %c0_91 = arith.constant 0 : index
    %72 = vector.load %arg7[%c0_90, %c0_91] : memref<1x64xf32, #tpu.memory_space<vmem>>, vector<1x64xf32>
    %73 = vector.broadcast %72 : vector<1x64xf32> to vector<128x64xf32>
    %74 = arith.addf %71, %73 : vector<128x64xf32>
    %c0_92 = arith.constant 0 : index
    %c0_93 = arith.constant 0 : index
    %c0_94 = arith.constant 0 : index
    %c0_95 = arith.constant 0 : index
    %75 = vector.load %arg1[%c0_92, %c0_93, %c0_94, %c0_95] : memref<2x8x8x64xbf16, #tpu.memory_space<vmem>>, vector<2x8x8x64xbf16>
    %76 = vector.shape_cast %75 : vector<2x8x8x64xbf16> to vector<128x64xbf16>
    %77 = arith.extf %76 : vector<128x64xbf16> to vector<128x64xf32>
    %78 = arith.addf %74, %77 : vector<128x64xf32>
    %cst_96 = arith.constant 0.000000e+00 : f32
    %79 = vector.broadcast %cst_96 : f32 to vector<128x64xf32>
    %80 = arith.maximumf %78, %79 : vector<128x64xf32>
    %81 = vector.shape_cast %80 : vector<128x64xf32> to vector<2x8x8x64xf32>
    %82 = arith.truncf %81 : vector<2x8x8x64xf32> to vector<2x8x8x64xbf16>
    %c0_97 = arith.constant 0 : index
    %c0_98 = arith.constant 0 : index
    %c0_99 = arith.constant 0 : index
    %c0_100 = arith.constant 0 : index
    %83 = vector.load %arg8[%c0_97, %c0_98, %c0_99, %c0_100] : memref<2x8x8x64xbf16, #tpu.memory_space<vmem>>, vector<2x8x8x64xbf16>
    tpu.vector_store %arg8[%c0_97, %c0_98, %c0_99, %c0_100], %82 {strides = array<i32>} : memref<2x8x8x64xbf16, #tpu.memory_space<vmem>>, vector<2x8x8x64xbf16>,
    return
  }
  func.func @transform_0(%arg0: i32) -> (i32, i32, i32, i32) {
    %c0_i32 = arith.constant 0 : i32
    %c0_i32_0 = arith.constant 0 : i32
    %c0_i32_1 = arith.constant 0 : i32
    %c0_i32_2 = arith.constant 0 : i32
    return %arg0, %c0_i32, %c0_i32_0, %c0_i32_1 : i32, i32, i32, i32
  }
  func.func @transform_1(%arg0: i32) -> (i32, i32) {
    %c0_i32 = arith.constant 0 : i32
    %c0_i32_0 = arith.constant 0 : i32
    %c0_i32_1 = arith.constant 0 : i32
    return %c0_i32, %c0_i32_0 : i32, i32
  }
  func.func @transform_2(%arg0: i32) -> (i32, i32) {
    %c0_i32 = arith.constant 0 : i32
    %c0_i32_0 = arith.constant 0 : i32
    %c0_i32_1 = arith.constant 0 : i32
    return %c0_i32, %c0_i32_0 : i32, i32
  }
  func.func @transform_3(%arg0: i32) -> (i32, i32) {
    %c0_i32 = arith.constant 0 : i32
    %c0_i32_0 = arith.constant 0 : i32
    %c0_i32_1 = arith.constant 0 : i32
    return %c0_i32, %c0_i32_0 : i32, i32
  }
  func.func @transform_4(%arg0: i32) -> (i32, i32) {
    %c0_i32 = arith.constant 0 : i32
    %c0_i32_0 = arith.constant 0 : i32
    %c0_i32_1 = arith.constant 0 : i32
    return %c0_i32, %c0_i32_0 : i32, i32
  }
  func.func @transform_5(%arg0: i32) -> (i32, i32) {
    %c0_i32 = arith.constant 0 : i32
    %c0_i32_0 = arith.constant 0 : i32
    %c0_i32_1 = arith.constant 0 : i32
    return %c0_i32, %c0_i32_0 : i32, i32
  }
  func.func @transform_6(%arg0: i32) -> (i32, i32) {
    %c0_i32 = arith.constant 0 : i32
    %c0_i32_0 = arith.constant 0 : i32
    %c0_i32_1 = arith.constant 0 : i32
    return %c0_i32, %c0_i32_0 : i32, i32
  }
  func.func @transform_7(%arg0: i32) -> (i32, i32, i32, i32) {
    %c0_i32 = arith.constant 0 : i32
    %c0_i32_0 = arith.constant 0 : i32
    %c0_i32_1 = arith.constant 0 : i32
    %c0_i32_2 = arith.constant 0 : i32
    return %arg0, %c0_i32, %c0_i32_0, %c0_i32_1 : i32, i32, i32, i32
  }
}

</mosaic_0001>

<llo_original>
// kernel: tpu_custom_call.1
$region0: #{tpu_custom_call.1}
  #allocation0 [shape = 'u32[]', space=smem, size = 0x4, offset = 0x4, fixed_abs, tag = 'smem constant byte address 0x4 - core index']
  #allocation1 [shape = 'u32[144,128]{1,0:T(1,128)}', space=vmem, size = 0x12000, scoped, tag = 'internal scratch']
  #allocation2 [shape = 'bf16[2,10,16,16]{3,2,1,0:T(8,128)(2,1)}', space=vmem, size = 0x14000, scoped, tag = 'scratch operand']
  %s0 = inlined_call_operand.hbm [shape: bf16[4,8,8,64], index: 0, kind: input, shape index: {}]
  %s1 = inlined_call_operand.vmem [shape: bf16[64,16], index: 1, kind: input, shape index: {}]
  %s2 = inlined_call_operand.vmem [shape: f32[1,16], index: 2, kind: input, shape index: {}]
  %s3 = inlined_call_operand.vmem [shape: bf16[144,16], index: 3, kind: input, shape index: {}]
  %s4 = inlined_call_operand.vmem [shape: f32[1,16], index: 4, kind: input, shape index: {}]
  %s5 = inlined_call_operand.vmem [shape: bf16[16,64], index: 5, kind: input, shape index: {}]
  %s6 = inlined_call_operand.vmem [shape: f32[1,64], index: 6, kind: input, shape index: {}]
  %s7 = inlined_call_operand.hbm [shape: bf16[4,8,8,64], index: 7, kind: output, shape index: {}]
  %s8 = sld [smem:[#allocation0]]
  $region65: #{tpu_custom_call.1} parent=0
    _
  %s10 = ssub.s32 1, %s8
  %s11 = scalar_select 0, %s10, %s8
  $region1: #{tpu_custom_call.1} parent=0
    #allocation3 [shape = 'u8[65536]{0}', space=vmem, size = 0x10000, scoped, tag = 'input window, operand 0']
    #allocation4 [shape = 's32[2]{0}', space=sflag, size = 0x8, scoped, tag = 'scoped memory for tpu_custom_call.1']
    #allocation5 [shape = 's32[2]{0}', space=sflag, size = 0x8, scoped, tag = 'scoped memory for tpu_custom_call.1']
    #allocation6 [shape = 'u8[65536]{0}', space=vmem, size = 0x10000, scoped, tag = 'output window, operand 0']
    %12 = vsyncpa [#allocation4], 0
    %s13 = scalar_lea.sflag [#allocation4], 1
    %14 = vsyncpa %s13, 0
    %15 = vsyncpa [#allocation5], 0
    %s16 = scalar_lea.sflag [#allocation5], 1
    %17 = vsyncpa %s16, 0
    loop: start=0, step=1, limit=4
    $region2: #{tpu_custom_call.1} parent=1 // loop_pre_header
      _
    $region3: #{tpu_custom_call.1} parent=1 // loop_header
      %s19 = sphi 0, %s23
      %p20 = scmp.ge.s32.totalorder %s19, 4
      %s29 = sphi 0, %s31
      %s32 = sphi 0, %s29
      %s33 = sphi 0, %s32
      %s49 = sphi 0, %s33
      %s53 = sphi 0, %s53
      %s55 = sphi 0, %s53
      %s56 = sphi 0, %s55
      %s70 = sphi 0, %s56
      %s74 = sphi 0, %s74
      %s76 = sphi 0, %s74
      %s77 = sphi 0, %s76
      %s91 = sphi 0, %s77
      %s95 = sphi 0, %s95
      %s97 = sphi 0, %s95
      %s98 = sphi 0, %s97
      %s112 = sphi 0, %s98
      %s116 = sphi 0, %s116
      %s118 = sphi 0, %s116
      %s119 = sphi 0, %s118
      %s133 = sphi 0, %s119
      %s137 = sphi 0, %s137
      %s139 = sphi 0, %s137
      %s140 = sphi 0, %s139
      %s154 = sphi 0, %s140
      %s158 = sphi 0, %s158
      %s160 = sphi 0, %s158
      %s161 = sphi 0, %s160
      %s175 = sphi 0, %s161
      %s181 = sphi 0, %s183
      %s184 = sphi 0, %s181
      %s185 = sphi 0, %s184
      %s201 = sphi 0, %s185
    $region4: #{tpu_custom_call.1} parent=1 // loop_header_branch
      %22 = sbr.rel (%p20) target = $region8
    $region5: #{tpu_custom_call.1} parent=1 // loop_body
      %s24 = ssub.s32 %s19, 1
      %s25 = ssub.s32 %s19, 2
      %s26 = sadd.s32 %s19, 1
      %s27 = ssub.s32 %s19, %s26
      %p28 = scmp.eq.s32.totalorder %s27, 0
      %s30 = sadd.s32 %s29, 1
      %s31 = scalar_select %p28, %s29, %s30
      %p34 = pneg %p28
      %p35 = scmp.eq.s32.totalorder %s19, 1
      %p36 = por %p34, %p35
      %p37 = scmp.ne.s32.totalorder %s29, %s32
      %p38 = scmp.eq.s32.totalorder %s19, 0
      %p39 = por %p37, %p38
      %p40 = scmp.ne.s32.totalorder %s29, %s32
      %p41 = scmp.eq.s32.totalorder %s24, 1
      %p42 = por %p40, %p41
      %p43 = scmp.ne.s32.totalorder %s32, %s33
      %p44 = scmp.eq.s32.totalorder %s24, 0
      %p45 = por %p43, %p44
      %p46 = scmp.ne.s32.totalorder %s32, %s33
      %p47 = scmp.eq.s32.totalorder %s25, 1
      %p48 = por %p46, %p47
      %p50 = scmp.ne.s32.totalorder %s33, %s49
      %p51 = scmp.eq.s32.totalorder %s25, 0
      %p52 = por %p50, %p51
      %s54 = sadd.s32 %s53, 1
      %p57 = scmp.eq.s32.totalorder %s19, 1
      %p58 = scmp.ne.s32.totalorder %s53, %s55
      %p59 = scmp.eq.s32.totalorder %s19, 0
      %p60 = por %p58, %p59
      %p61 = scmp.ne.s32.totalorder %s53, %s55
      %p62 = scmp.eq.s32.totalorder %s24, 1
      %p63 = por %p61, %p62
      %p64 = scmp.ne.s32.totalorder %s55, %s56
      %p65 = scmp.eq.s32.totalorder %s24, 0
      %p66 = por %p64, %p65
      %p67 = scmp.ne.s32.totalorder %s55, %s56
      %p68 = scmp.eq.s32.totalorder %s25, 1
      %p69 = por %p67, %p68
      %p71 = scmp.ne.s32.totalorder %s56, %s70
      %p72 = scmp.eq.s32.totalorder %s25, 0
      %p73 = por %p71, %p72
      %s75 = sadd.s32 %s74, 1
      %p78 = scmp.eq.s32.totalorder %s19, 1
      %p79 = scmp.ne.s32.totalorder %s74, %s76
      %p80 = scmp.eq.s32.totalorder %s19, 0
      %p81 = por %p79, %p80
      %p82 = scmp.ne.s32.totalorder %s74, %s76
      %p83 = scmp.eq.s32.totalorder %s24, 1
      %p84 = por %p82, %p83
      %p85 = scmp.ne.s32.totalorder %s76, %s77
      %p86 = scmp.eq.s32.totalorder %s24, 0
      %p87 = por %p85, %p86
      %p88 = scmp.ne.s32.totalorder %s76, %s77
      %p89 = scmp.eq.s32.totalorder %s25, 1
      %p90 = por %p88, %p89
      %p92 = scmp.ne.s32.totalorder %s77, %s91
      %p93 = scmp.eq.s32.totalorder %s25, 0
      %p94 = por %p92, %p93
      %s96 = sadd.s32 %s95, 1
      %p99 = scmp.eq.s32.totalorder %s19, 1
      %p100 = scmp.ne.s32.totalorder %s95, %s97
      %p101 = scmp.eq.s32.totalorder %s19, 0
      %p102 = por %p100, %p101
      %p103 = scmp.ne.s32.totalorder %s95, %s97
      %p104 = scmp.eq.s32.totalorder %s24, 1
      %p105 = por %p103, %p104
      %p106 = scmp.ne.s32.totalorder %s97, %s98
      %p107 = scmp.eq.s32.totalorder %s24, 0
      %p108 = por %p106, %p107
      %p109 = scmp.ne.s32.totalorder %s97, %s98
      %p110 = scmp.eq.s32.totalorder %s25, 1
      %p111 = por %p109, %p110
      %p113 = scmp.ne.s32.totalorder %s98, %s112
      %p114 = scmp.eq.s32.totalorder %s25, 0
      %p115 = por %p113, %p114
      %s117 = sadd.s32 %s116, 1
      %p120 = scmp.eq.s32.totalorder %s19, 1
      %p121 = scmp.ne.s32.totalorder %s116, %s118
      %p122 = scmp.eq.s32.totalorder %s19, 0
      %p123 = por %p121, %p122
      %p124 = scmp.ne.s32.totalorder %s116, %s118
      %p125 = scmp.eq.s32.totalorder %s24, 1
      %p126 = por %p124, %p125
      %p127 = scmp.ne.s32.totalorder %s118, %s119
      %p128 = scmp.eq.s32.totalorder %s24, 0
      %p129 = por %p127, %p128
      %p130 = scmp.ne.s32.totalorder %s118, %s119
      %p131 = scmp.eq.s32.totalorder %s25, 1
      %p132 = por %p130, %p131
      %p134 = scmp.ne.s32.totalorder %s119, %s133
      %p135 = scmp.eq.s32.totalorder %s25, 0
      %p136 = por %p134, %p135
      %s138 = sadd.s32 %s137, 1
      %p141 = scmp.eq.s32.totalorder %s19, 1
      %p142 = scmp.ne.s32.totalorder %s137, %s139
      %p143 = scmp.eq.s32.totalorder %s19, 0
      %p144 = por %p142, %p143
      %p145 = scmp.ne.s32.totalorder %s137, %s139
      %p146 = scmp.eq.s32.totalorder %s24, 1
      %p147 = por %p145, %p146
      %p148 = scmp.ne.s32.totalorder %s139, %s140
      %p149 = scmp.eq.s32.totalorder %s24, 0
      %p150 = por %p148, %p149
      %p151 = scmp.ne.s32.totalorder %s139, %s140
      %p152 = scmp.eq.s32.totalorder %s25, 1
      %p153 = por %p151, %p152
      %p155 = scmp.ne.s32.totalorder %s140, %s154
      %p156 = scmp.eq.s32.totalorder %s25, 0
      %p157 = por %p155, %p156
      %s159 = sadd.s32 %s158, 1
      %p162 = scmp.eq.s32.totalorder %s19, 1
      %p163 = scmp.ne.s32.totalorder %s158, %s160
      %p164 = scmp.eq.s32.totalorder %s19, 0
      %p165 = por %p163, %p164
      %p166 = scmp.ne.s32.totalorder %s158, %s160
      %p167 = scmp.eq.s32.totalorder %s24, 1
      %p168 = por %p166, %p167
      %p169 = scmp.ne.s32.totalorder %s160, %s161
      %p170 = scmp.eq.s32.totalorder %s24, 0
      %p171 = por %p169, %p170
      %p172 = scmp.ne.s32.totalorder %s160, %s161
      %p173 = scmp.eq.s32.totalorder %s25, 1
      %p174 = por %p172, %p173
      %p176 = scmp.ne.s32.totalorder %s161, %s175
      %p177 = scmp.eq.s32.totalorder %s25, 0
      %p178 = por %p176, %p177
      %s179 = ssub.s32 %s19, %s26
      %p180 = scmp.eq.s32.totalorder %s179, 0
      %s182 = sadd.s32 %s181, 1
      %s183 = scalar_select %p180, %s181, %s182
      %p186 = pneg %p180
      %p187 = scmp.eq.s32.totalorder %s19, 1
      %p188 = por %p186, %p187
      %p189 = scmp.ne.s32.totalorder %s181, %s184
      %p190 = scmp.eq.s32.totalorder %s19, 0
      %p191 = por %p189, %p190
      %p192 = scmp.ne.s32.totalorder %s181, %s184
      %p193 = scmp.eq.s32.totalorder %s24, 1
      %p194 = por %p192, %p193
      %p195 = scmp.ne.s32.totalorder %s184, %s185
      %p196 = scmp.eq.s32.totalorder %s24, 0
      %p197 = por %p195, %p196
      %p198 = scmp.ne.s32.totalorder %s184, %s185
      %p199 = scmp.eq.s32.totalorder %s25, 1
      %p200 = por %p198, %p199
      %p202 = scmp.ne.s32.totalorder %s185, %s201
      %p203 = scmp.eq.s32.totalorder %s25, 0
      %p204 = por %p202, %p203
      %p205 = scmp.le.s32.totalorder 1, %s19
      %p206 = scmp.lt.s32.totalorder %s19, 3
      %p207 = pnand %p205, %p206
      %p208 = pneg %p207
      // Predicated region
      $region9: #{tpu_custom_call.1} parent=5 // pred_check
        _
      $region10: #{tpu_custom_call.1} parent=5 // pred_check_branch
        %210 = sbr.rel (%p207) target = $region12
      $region11: #{tpu_custom_call.1} parent=5 // pred_region
        %s211 = ssub.s32 %s19, 1
        // Predicated region
        $region13: #{tpu_custom_call.1} parent=11 // pred_check
          %p212 = pneg %p66
        $region14: #{tpu_custom_call.1} parent=11 // pred_check_branch
          %214 = sbr.rel (%p212) target = $region16
        $region15: #{tpu_custom_call.1} parent=11 // pred_region
          _
        $region16: #{tpu_custom_call.1} parent=11 // pred_fallthru
          _
        // Predicated region
        $region17: #{tpu_custom_call.1} parent=11 // pred_check
          %p215 = pneg %p87
        $region18: #{tpu_custom_call.1} parent=11 // pred_check_branch
          %217 = sbr.rel (%p215) target = $region20
        $region19: #{tpu_custom_call.1} parent=11 // pred_region
          _
        $region20: #{tpu_custom_call.1} parent=11 // pred_fallthru
          _
        // Predicated region
        $region21: #{tpu_custom_call.1} parent=11 // pred_check
          %p218 = pneg %p108
        $region22: #{tpu_custom_call.1} parent=11 // pred_check_branch
          %220 = sbr.rel (%p218) target = $region24
        $region23: #{tpu_custom_call.1} parent=11 // pred_region
          _
        $region24: #{tpu_custom_call.1} parent=11 // pred_fallthru
          _
        // Predicated region
        $region25: #{tpu_custom_call.1} parent=11 // pred_check
          %p221 = pneg %p129
        $region26: #{tpu_custom_call.1} parent=11 // pred_check_branch
          %223 = sbr.rel (%p221) target = $region28
        $region27: #{tpu_custom_call.1} parent=11 // pred_region
          _
        $region28: #{tpu_custom_call.1} parent=11 // pred_fallthru
          _
        // Predicated region
        $region29: #{tpu_custom_call.1} parent=11 // pred_check
          %p224 = pneg %p150
        $region30: #{tpu_custom_call.1} parent=11 // pred_check_branch
          %226 = sbr.rel (%p224) target = $region32
        $region31: #{tpu_custom_call.1} parent=11 // pred_region
          _
        $region32: #{tpu_custom_call.1} parent=11 // pred_fallthru
          _
        // Predicated region
        $region33: #{tpu_custom_call.1} parent=11 // pred_check
          %p227 = pneg %p171
        $region34: #{tpu_custom_call.1} parent=11 // pred_check_branch
          %229 = sbr.rel (%p227) target = $region36
        $region35: #{tpu_custom_call.1} parent=11 // pred_region
          _
        $region36: #{tpu_custom_call.1} parent=11 // pred_fallthru
          _
      $region12: #{tpu_custom_call.1} parent=5 // pred_fallthru
        _
      %p230 = scmp.lt.s32.totalorder %s19, 2
      // Predicated region
      $region37: #{tpu_custom_call.1} parent=5 // pred_check
        %p231 = pneg %p230
      $region38: #{tpu_custom_call.1} parent=5 // pred_check_branch
        %233 = sbr.rel (%p231) target = $region40
      $region39: #{tpu_custom_call.1} parent=5 // pred_region
        // Predicated region
        $region41: #{tpu_custom_call.1} parent=39 // pred_check
          %p234 = pneg %p39
        $region42: #{tpu_custom_call.1} parent=39 // pred_check_branch
          %236 = sbr.rel (%p234) target = $region44
        $region43: #{tpu_custom_call.1} parent=39 // pred_region
          %s237 = sand.u32 %s29, 1
          %s238 = scalar_lea.sflag [#allocation4], %s237
          %s239 = sand.u32 %s29, 1
          %s240 = smul.addr %s239, 64
          %s241 = scalar_lea.vmem [#allocation3], %s240
          %s242 = smul.u32 2, %s19
          %s244 = ssub.s32 1024, 1024
          %245 = vsyncadd %s238, %s244
          %s246 = smul.addr %s242, 8
          %s247 = smul.addr %s246, 64
          %s248 = scalar_lea.hbm %s0, %s247
          %s249 = sshll.u32 %s241, 4
          %s250 = int_to_ptr.vmem [resolvable:$true] %s249
          %255 = dma.hbm_to_vmem [thread:$0]  %s248, 1024, %s250, %s238, 64, 64, 4
        $region44: #{tpu_custom_call.1} parent=39 // pred_fallthru
          _
      $region40: #{tpu_custom_call.1} parent=5 // pred_fallthru
        _
      %p256 = scmp.le.s32.totalorder 1, %s19
      %p257 = scmp.lt.s32.totalorder %s19, 3
      %p258 = pnand %p256, %p257
      %p259 = pneg %p258
      // Predicated region
      $region45: #{tpu_custom_call.1} parent=5 // pred_check
        _
      $region46: #{tpu_custom_call.1} parent=5 // pred_check_branch
        %261 = sbr.rel (%p258) target = $region48
      $region47: #{tpu_custom_call.1} parent=5 // pred_region
        %s262 = ssub.s32 %s19, 1
        %s263 = sand.u32 %s32, 1
        %s264 = scalar_lea.sflag [#allocation4], %s263
        %s265 = sand.u32 %s32, 1
        %s266 = smul.addr %s265, 64
        %s267 = scalar_lea.vmem [#allocation3], %s266
        // Predicated region
        $region49: #{tpu_custom_call.1} parent=47 // pred_check
          %p268 = pneg %p45
        $region50: #{tpu_custom_call.1} parent=47 // pred_check_branch
          %270 = sbr.rel (%p268) target = $region52
        $region51: #{tpu_custom_call.1} parent=47 // pred_region
          %271 = dma.done %s264, 1024
        $region52: #{tpu_custom_call.1} parent=47 // pred_fallthru
          _
        %s272 = sand.u32 %s32, 1
        %s273 = scalar_lea.sflag [#allocation4], %s272
        %s274 = sand.u32 %s32, 1
        %s275 = smul.addr %s274, 64
        %s276 = scalar_lea.vmem [#allocation3], %s275
        %p277 = pneg %p45
        %p278 = pneg %p42
        %p279 = pneg %p66
        %p280 = pneg %p63
        %p281 = pneg %p87
        %p282 = pneg %p84
        %p283 = pneg %p108
        %p284 = pneg %p105
        %p285 = pneg %p129
        %p286 = pneg %p126
        %p287 = pneg %p150
        %p288 = pneg %p147
        %p289 = pneg %p171
        %p290 = pneg %p168
        %p291 = pneg %p197
        %p292 = pneg %p194
        %s293 = sand.u32 %s184, 1
        %s294 = scalar_lea.sflag [#allocation5], %s293
        %s295 = sand.u32 %s184, 1
        %s296 = smul.addr %s295, 64
        %s297 = scalar_lea.vmem [#allocation6], %s296
        %s298 = smul.u32 2, %s24
        %s299 = smul.u32 2, %s24
        %v301 = vld [vmem:[%s267] sm:$0xf]
        %v302 = vld [vmem:[%s267 + $0x4] sm:$0xf]
        %v303 = vld [vmem:[%s267 + $0x8] sm:$0xf]
        %v304 = vld [vmem:[%s267 + $0xc] sm:$0xf]
        %v305 = vld [vmem:[%s267 + $0x10] sm:$0xf]
        %v306 = vld [vmem:[%s267 + $0x14] sm:$0xf]
        %v307 = vld [vmem:[%s267 + $0x18] sm:$0xf]
        %v308 = vld [vmem:[%s267 + $0x1c] sm:$0xf]
        %v309 = vld [vmem:[%s267 + $0x20] sm:$0xf]
        %v310 = vld [vmem:[%s267 + $0x24] sm:$0xf]
        %v311 = vld [vmem:[%s267 + $0x28] sm:$0xf]
        %v312 = vld [vmem:[%s267 + $0x2c] sm:$0xf]
        %v313 = vld [vmem:[%s267 + $0x30] sm:$0xf]
        %v314 = vld [vmem:[%s267 + $0x34] sm:$0xf]
        %v315 = vld [vmem:[%s267 + $0x38] sm:$0xf]
        %v316 = vld [vmem:[%s267 + $0x3c] sm:$0xf]
        %v317 = vld [vmem:[%s1] sm:$0xf]
        %v318 = vld [vmem:[%s1 + $0x4] sm:$0xf]
        %v319 = vld [vmem:[%s1 + $0x8] sm:$0xf]
        %v320 = vld [vmem:[%s1 + $0xc] sm:$0xf]
        %v321 = vld [vmem:[%s1 + $0x10] sm:$0xf]
        %v322 = vld [vmem:[%s1 + $0x14] sm:$0xf]
        %v323 = vld [vmem:[%s1 + $0x18] sm:$0xf]
        %v324 = vld [vmem:[%s1 + $0x1c] sm:$0xf]
        %v325 = vld [vmem:[%s2] sm:$0x1]
        %v327 = vlaneseq
        %v328 = vshrl.u32 %v327, 7
        %v329 = vsub.s32 0, %v328
        %v330 = vrot.slane %v325, %v329
        %v348 = vunpack.c.l.b16 %v301
        %v349 = vunpack.c.l.b16 %v302
        %v350 = vunpack.c.l.b16 %v303
        %v351 = vunpack.c.l.b16 %v304
        %v352 = vunpack.c.l.b16 %v305
        %v353 = vunpack.c.l.b16 %v306
        %v354 = vunpack.c.l.b16 %v307
        %v355 = vunpack.c.l.b16 %v308
        %v356 = vunpack.c.l.b16 %v309
        %v357 = vunpack.c.l.b16 %v310
        %v358 = vunpack.c.l.b16 %v311
        %v359 = vunpack.c.l.b16 %v312
        %v360 = vunpack.c.l.b16 %v313
        %v361 = vunpack.c.l.b16 %v314
        %v362 = vunpack.c.l.b16 %v315
        %v363 = vunpack.c.l.b16 %v316
        %v364 = vpack.c.b16 %v349, %v348
        %v365 = vpack.c.b16 %v351, %v350
        %v366 = vpack.c.b16 %v353, %v352
        %v367 = vpack.c.b16 %v355, %v354
        %v368 = vpack.c.b16 %v357, %v356
        %v369 = vpack.c.b16 %v359, %v358
        %v370 = vpack.c.b16 %v361, %v360
        %v371 = vpack.c.b16 %v363, %v362
        %v380 = vunpack.c.l.b16 %v317
        %v381 = vunpack.c.l.b16 %v318
        %v382 = vunpack.c.l.b16 %v319
        %v383 = vunpack.c.l.b16 %v320
        %v384 = vunpack.c.l.b16 %v321
        %v385 = vunpack.c.l.b16 %v322
        %v386 = vunpack.c.l.b16 %v323
        %v387 = vunpack.c.l.b16 %v324
        %v388 = vpack.c.b16 %v381, %v380
        %v389 = vpack.c.b16 %v383, %v382
        %v390 = vpack.c.b16 %v385, %v384
        %v391 = vpack.c.b16 %v387, %v386
        %vm396 = vcmask 523264
        %v398 = vsel %vm396, %v364, 0
        %v401 = vsel %vm396, %v365, 0
        %v404 = vsel %vm396, %v366, 0
        %v407 = vsel %vm396, %v367, 0
        %v410 = vsel %vm396, %v368, 0
        %v413 = vsel %vm396, %v369, 0
        %v416 = vsel %vm396, %v370, 0
        %v419 = vsel %vm396, %v371, 0
        %421 = vmatprep.subr.bf16.mxu0 0
        %422 = vmatpush1.bf16.msra.mxu0 0
        %423 = vmatprep.subr.bf16.mxu0 0
        %424 = vmatpush1.bf16.msra.mxu0 0
        %425 = vmatprep.subr.bf16.mxu0 0
        %426 = vmatpush1.bf16.msra.mxu0 0
        %427 = vmatprep.subr.bf16.mxu0 0
        %428 = vmatpush1.bf16.msra.mxu0 0
        %429 = vmatprep.subr.bf16.mxu0 0
        %430 = vmatpush1.bf16.msra.mxu0 %v391
        %431 = vmatprep.subr.bf16.mxu0 0
        %432 = vmatpush1.bf16.msra.mxu0 %v390
        %433 = vmatprep.subr.bf16.mxu0 0
        %434 = vmatpush1.bf16.msra.mxu0 %v389
        %435 = vmatprep.subr.bf16.mxu0 0
        %436 = vmatpush1.bf16.msra.mxu0 %v388
        %437 = vmatprep.subr.bf16.mxu0 0
        %438 = vmatpush2.bf16.msra.mxu0 0
        %439 = vmatprep.subr.bf16.mxu0 0
        %440 = vmatpush2.bf16.msra.mxu0 0
        %441 = vmatprep.subr.bf16.mxu0 0
        %442 = vmatpush2.bf16.msra.mxu0 0
        %443 = vmatprep.subr.bf16.mxu0 0
        %444 = vmatpush2.bf16.msra.mxu0 0
        %445 = vmatprep.subr.bf16.mxu0 0
        %446 = vmatpush2.bf16.msra.mxu0 0
        %447 = vmatprep.subr.bf16.mxu0 0
        %448 = vmatpush2.bf16.msra.mxu0 0
        %449 = vmatprep.subr.bf16.mxu0 0
        %450 = vmatpush2.bf16.msra.mxu0 0
        %451 = vmatprep.subr.bf16.mxu0 0
        %452 = vmatpush2.bf16.msra.mxu0 0
        %453 = vmatprep.mubr.bf16.mxu0 0
        %454 = vmatmul.mubr.bf16.gmra.mxu0 %v398
        %v455 = vpop.f32.mrf.mxu0
        %v456 = vadd.f32 %v330, %v455
        %v457 = vpop.f32.mrf.mxu0
        %v458 = vpop.f32.mrf.mxu0
        %v459 = vadd.f32 %v330, %v458
        %v460 = vpop.f32.mrf.mxu0
        %461 = vmatprep.mubr.bf16.mxu0 0
        %462 = vmatmul.mubr.bf16.gmra.mxu0 %v401
        %v463 = vpop.f32.mrf.mxu0
        %v464 = vadd.f32 %v330, %v463
        %v465 = vpop.f32.mrf.mxu0
        %v466 = vpop.f32.mrf.mxu0
        %v467 = vadd.f32 %v330, %v466
        %v468 = vpop.f32.mrf.mxu0
        %469 = vmatprep.mubr.bf16.mxu0 0
        %470 = vmatmul.mubr.bf16.gmra.mxu0 %v404
        %v471 = vpop.f32.mrf.mxu0
        %v472 = vadd.f32 %v330, %v471
        %v473 = vpop.f32.mrf.mxu0
        %v474 = vpop.f32.mrf.mxu0
        %v475 = vadd.f32 %v330, %v474
        %v476 = vpop.f32.mrf.mxu0
        %477 = vmatprep.mubr.bf16.mxu0 0
        %478 = vmatmul.mubr.bf16.gmra.mxu0 %v407
        %v479 = vpop.f32.mrf.mxu0
        %v480 = vadd.f32 %v330, %v479
        %v481 = vpop.f32.mrf.mxu0
        %v482 = vpop.f32.mrf.mxu0
        %v483 = vadd.f32 %v330, %v482
        %v484 = vpop.f32.mrf.mxu0
        %485 = vmatprep.mubr.bf16.mxu0 0
        %486 = vmatmul.mubr.bf16.gmra.mxu0 %v410
        %v487 = vpop.f32.mrf.mxu0
        %v488 = vadd.f32 %v330, %v487
        %v489 = vpop.f32.mrf.mxu0
        %v490 = vpop.f32.mrf.mxu0
        %v491 = vadd.f32 %v330, %v490
        %v492 = vpop.f32.mrf.mxu0
        %493 = vmatprep.mubr.bf16.mxu0 0
        %494 = vmatmul.mubr.bf16.gmra.mxu0 %v413
        %v495 = vpop.f32.mrf.mxu0
        %v496 = vadd.f32 %v330, %v495
        %v497 = vpop.f32.mrf.mxu0
        %v498 = vpop.f32.mrf.mxu0
        %v499 = vadd.f32 %v330, %v498
        %v500 = vpop.f32.mrf.mxu0
        %501 = vmatprep.mubr.bf16.mxu0 0
        %502 = vmatmul.mubr.bf16.gmra.mxu0 %v416
        %v503 = vpop.f32.mrf.mxu0
        %v504 = vadd.f32 %v330, %v503
        %v505 = vpop.f32.mrf.mxu0
        %v506 = vpop.f32.mrf.mxu0
        %v507 = vadd.f32 %v330, %v506
        %v508 = vpop.f32.mrf.mxu0
        %509 = vmatprep.mubr.bf16.mxu0 0
        %510 = vmatmul.mubr.bf16.gmra.mxu0 %v419
        %v511 = vpop.f32.mrf.mxu0
        %v512 = vadd.f32 %v330, %v511
        %v513 = vpop.f32.mrf.mxu0
        %v514 = vpop.f32.mrf.mxu0
        %v515 = vadd.f32 %v330, %v514
        %v516 = vpop.f32.mrf.mxu0
        %517 = vdwg.mxu0
        %v518 = vmax.f32 %v456, 0.0
        %v519 = vmax.f32 %v459, 0.0
        %v520 = vmax.f32 %v464, 0.0
        %v521 = vmax.f32 %v467, 0.0
        %v522 = vmax.f32 %v472, 0.0
        %v523 = vmax.f32 %v475, 0.0
        %v524 = vmax.f32 %v480, 0.0
        %v525 = vmax.f32 %v483, 0.0
        %v526 = vmax.f32 %v488, 0.0
        %v527 = vmax.f32 %v491, 0.0
        %v528 = vmax.f32 %v496, 0.0
        %v529 = vmax.f32 %v499, 0.0
        %v530 = vmax.f32 %v504, 0.0
        %v531 = vmax.f32 %v507, 0.0
        %v532 = vmax.f32 %v512, 0.0
        %v533 = vmax.f32 %v515, 0.0
        %vm534 = vcmask 125952
        %535 = vst.msk [vmem:[#allocation2] sm:$0xf] %vm534, 0
        %536 = vst.msk [vmem:[#allocation2 + $0x4] sm:$0xf] %vm534, 0
        %537 = vst.msk [vmem:[#allocation2 + $0x50] sm:$0xf] %vm534, 0
        %538 = vst.msk [vmem:[#allocation2 + $0x54] sm:$0xf] %vm534, 0
        %s539 = scalar_lea.vmem [#allocation2], 72
        %540 = vst.msk [vmem:[%s539] sm:$0xf] %vm534, 0
        %541 = vst.msk [vmem:[%s539 + $0x4] sm:$0xf] %vm534, 0
        %542 = vst.msk [vmem:[%s539 + $0x50] sm:$0xf] %vm534, 0
        %543 = vst.msk [vmem:[%s539 + $0x54] sm:$0xf] %vm534, 0
        %vm544 = vcmask 122880
        %vm545 = vsmask.f32 256
        %vm546 = vmand %vm544, %vm545
        %v547 = vld [vmem:[#allocation2] sm:$0x1]
        %v548 = vsel %vm546, 0, %v547
        %549 = vst [vmem:[#allocation2] sm:$0x1] %v548
        %v550 = vld [vmem:[#allocation2 + $0x8] sm:$0x1]
        %v551 = vsel %vm546, 0, %v550
        %552 = vst [vmem:[#allocation2 + $0x8] sm:$0x1] %v551
        %v553 = vld [vmem:[#allocation2 + $0x10] sm:$0x1]
        %v554 = vsel %vm546, 0, %v553
        %555 = vst [vmem:[#allocation2 + $0x10] sm:$0x1] %v554
        %v556 = vld [vmem:[#allocation2 + $0x18] sm:$0x1]
        %v557 = vsel %vm546, 0, %v556
        %558 = vst [vmem:[#allocation2 + $0x18] sm:$0x1] %v557
        %v559 = vld [vmem:[#allocation2 + $0x20] sm:$0x1]
        %v560 = vsel %vm546, 0, %v559
        %561 = vst [vmem:[#allocation2 + $0x20] sm:$0x1] %v560
        %v562 = vld [vmem:[#allocation2 + $0x28] sm:$0x1]
        %v563 = vsel %vm546, 0, %v562
        %564 = vst [vmem:[#allocation2 + $0x28] sm:$0x1] %v563
        %v565 = vld [vmem:[#allocation2 + $0x30] sm:$0x1]
        %v566 = vsel %vm546, 0, %v565
        %567 = vst [vmem:[#allocation2 + $0x30] sm:$0x1] %v566
        %v568 = vld [vmem:[#allocation2 + $0x38] sm:$0x1]
        %v569 = vsel %vm546, 0, %v568
        %570 = vst [vmem:[#allocation2 + $0x38] sm:$0x1] %v569
        %v571 = vld [vmem:[#allocation2 + $0x40] sm:$0x1]
        %v572 = vsel %vm546, 0, %v571
        %573 = vst [vmem:[#allocation2 + $0x40] sm:$0x1] %v572
        %v574 = vld [vmem:[#allocation2 + $0x48] sm:$0x1]
        %v575 = vsel %vm546, 0, %v574
        %576 = vst [vmem:[#allocation2 + $0x48] sm:$0x1] %v575
        %v577 = vld [vmem:[#allocation2 + $0x50] sm:$0x1]
        %v578 = vsel %vm546, 0, %v577
        %579 = vst [vmem:[#allocation2 + $0x50] sm:$0x1] %v578
        %v580 = vld [vmem:[#allocation2 + $0x58] sm:$0x1]
        %v581 = vsel %vm546, 0, %v580
        %582 = vst [vmem:[#allocation2 + $0x58] sm:$0x1] %v581
        %v583 = vld [vmem:[#allocation2 + $0x60] sm:$0x1]
        %v584 = vsel %vm546, 0, %v583
        %585 = vst [vmem:[#allocation2 + $0x60] sm:$0x1] %v584
        %v586 = vld [vmem:[#allocation2 + $0x68] sm:$0x1]
        %v587 = vsel %vm546, 0, %v586
        %588 = vst [vmem:[#allocation2 + $0x68] sm:$0x1] %v587
        %v589 = vld [vmem:[#allocation2 + $0x70] sm:$0x1]
        %v590 = vsel %vm546, 0, %v589
        %591 = vst [vmem:[#allocation2 + $0x70] sm:$0x1] %v590
        %v592 = vld [vmem:[#allocation2 + $0x78] sm:$0x1]
        %v593 = vsel %vm546, 0, %v592
        %594 = vst [vmem:[#allocation2 + $0x78] sm:$0x1] %v593
        %v595 = vld [vmem:[#allocation2 + $0x80] sm:$0x1]
        %v596 = vsel %vm546, 0, %v595
        %597 = vst [vmem:[#allocation2 + $0x80] sm:$0x1] %v596
        %v598 = vld [vmem:[#allocation2 + $0x88] sm:$0x1]
        %v599 = vsel %vm546, 0, %v598
        %600 = vst [vmem:[#allocation2 + $0x88] sm:$0x1] %v599
        %v601 = vld [vmem:[#allocation2 + $0x90] sm:$0x1]
        %v602 = vsel %vm546, 0, %v601
        %603 = vst [vmem:[#allocation2 + $0x90] sm:$0x1] %v602
        %v604 = vld [vmem:[#allocation2 + $0x98] sm:$0x1]
        %v605 = vsel %vm546, 0, %v604
        %606 = vst [vmem:[#allocation2 + $0x98] sm:$0x1] %v605
        %vm607 = vsmask.f32 7938
        %vm608 = vmand %vm544, %vm607
        %v609 = vld [vmem:[#allocation2 + $0x4] sm:$0x1]
        %v610 = vsel %vm608, 0, %v609
        %611 = vst [vmem:[#allocation2 + $0x4] sm:$0x1] %v610
        %v612 = vld [vmem:[#allocation2 + $0xc] sm:$0x1]
        %v613 = vsel %vm608, 0, %v612
        %614 = vst [vmem:[#allocation2 + $0xc] sm:$0x1] %v613
        %v615 = vld [vmem:[#allocation2 + $0x14] sm:$0x1]
        %v616 = vsel %vm608, 0, %v615
        %617 = vst [vmem:[#allocation2 + $0x14] sm:$0x1] %v616
        %v618 = vld [vmem:[#allocation2 + $0x1c] sm:$0x1]
        %v619 = vsel %vm608, 0, %v618
        %620 = vst [vmem:[#allocation2 + $0x1c] sm:$0x1] %v619
        %v621 = vld [vmem:[#allocation2 + $0x24] sm:$0x1]
        %v622 = vsel %vm608, 0, %v621
        %623 = vst [vmem:[#allocation2 + $0x24] sm:$0x1] %v622
        %v624 = vld [vmem:[#allocation2 + $0x2c] sm:$0x1]
        %v625 = vsel %vm608, 0, %v624
        %626 = vst [vmem:[#allocation2 + $0x2c] sm:$0x1] %v625
        %v627 = vld [vmem:[#allocation2 + $0x34] sm:$0x1]
        %v628 = vsel %vm608, 0, %v627
        %629 = vst [vmem:[#allocation2 + $0x34] sm:$0x1] %v628
        %v630 = vld [vmem:[#allocation2 + $0x3c] sm:$0x1]
        %v631 = vsel %vm608, 0, %v630
        %632 = vst [vmem:[#allocation2 + $0x3c] sm:$0x1] %v631
        %v633 = vld [vmem:[#allocation2 + $0x44] sm:$0x1]
        %v634 = vsel %vm608, 0, %v633
        %635 = vst [vmem:[#allocation2 + $0x44] sm:$0x1] %v634
        %v636 = vld [vmem:[#allocation2 + $0x4c] sm:$0x1]
        %v637 = vsel %vm608, 0, %v636
        %638 = vst [vmem:[#allocation2 + $0x4c] sm:$0x1] %v637
        %v639 = vld [vmem:[#allocation2 + $0x54] sm:$0x1]
        %v640 = vsel %vm608, 0, %v639
        %641 = vst [vmem:[#allocation2 + $0x54] sm:$0x1] %v640
        %v642 = vld [vmem:[#allocation2 + $0x5c] sm:$0x1]
        %v643 = vsel %vm608, 0, %v642
        %644 = vst [vmem:[#allocation2 + $0x5c] sm:$0x1] %v643
        %v645 = vld [vmem:[#allocation2 + $0x64] sm:$0x1]
        %v646 = vsel %vm608, 0, %v645
        %647 = vst [vmem:[#allocation2 + $0x64] sm:$0x1] %v646
        %v648 = vld [vmem:[#allocation2 + $0x6c] sm:$0x1]
        %v649 = vsel %vm608, 0, %v648
        %650 = vst [vmem:[#allocation2 + $0x6c] sm:$0x1] %v649
        %v651 = vld [vmem:[#allocation2 + $0x74] sm:$0x1]
        %v652 = vsel %vm608, 0, %v651
        %653 = vst [vmem:[#allocation2 + $0x74] sm:$0x1] %v652
        %v654 = vld [vmem:[#allocation2 + $0x7c] sm:$0x1]
        %v655 = vsel %vm608, 0, %v654
        %656 = vst [vmem:[#allocation2 + $0x7c] sm:$0x1] %v655
        %v657 = vld [vmem:[#allocation2 + $0x84] sm:$0x1]
        %v658 = vsel %vm608, 0, %v657
        %659 = vst [vmem:[#allocation2 + $0x84] sm:$0x1] %v658
        %v660 = vld [vmem:[#allocation2 + $0x8c] sm:$0x1]
        %v661 = vsel %vm608, 0, %v660
        %662 = vst [vmem:[#allocation2 + $0x8c] sm:$0x1] %v661
        %v663 = vld [vmem:[#allocation2 + $0x94] sm:$0x1]
        %v664 = vsel %vm608, 0, %v663
        %665 = vst [vmem:[#allocation2 + $0x94] sm:$0x1] %v664
        %v666 = vld [vmem:[#allocation2 + $0x9c] sm:$0x1]
        %v667 = vsel %vm608, 0, %v666
        %668 = vst [vmem:[#allocation2 + $0x9c] sm:$0x1] %v667
        %v669 = vpack.c.bf16 %v519, %v518
        %v670 = vpack.c.bf16 %v521, %v520
        %v671 = vpack.c.bf16 %v523, %v522
        %v672 = vpack.c.bf16 %v525, %v524
        %v673 = vpack.c.bf16 %v527, %v526
        %v674 = vpack.c.bf16 %v529, %v528
        %v675 = vpack.c.bf16 %v531, %v530
        %v676 = vpack.c.bf16 %v533, %v532
        %v685 = vunpack.c.l.b16 %v669
        %v686 = vunpack.c.h.b16 %v669
        %v687 = vunpack.c.l.b16 %v670
        %v688 = vunpack.c.h.b16 %v670
        %v689 = vunpack.c.l.b16 %v671
        %v690 = vunpack.c.h.b16 %v671
        %v691 = vunpack.c.l.b16 %v672
        %v692 = vunpack.c.h.b16 %v672
        %v693 = vunpack.c.l.b16 %v673
        %v694 = vunpack.c.h.b16 %v673
        %v695 = vunpack.c.l.b16 %v674
        %v696 = vunpack.c.h.b16 %v674
        %v697 = vunpack.c.l.b16 %v675
        %v698 = vunpack.c.h.b16 %v675
        %v699 = vunpack.c.l.b16 %v676
        %v700 = vunpack.c.h.b16 %v676
        %v701 = vpack.c.b16 %v685, %v685
        %v702 = vpack.c.b16 %v686, %v686
        %v703 = vpack.c.b16 %v687, %v687
        %v704 = vpack.c.b16 %v688, %v688
        %v705 = vpack.c.b16 %v689, %v689
        %v706 = vpack.c.b16 %v690, %v690
        %v707 = vpack.c.b16 %v691, %v691
        %v708 = vpack.c.b16 %v692, %v692
        %v709 = vpack.c.b16 %v693, %v693
        %v710 = vpack.c.b16 %v694, %v694
        %v711 = vpack.c.b16 %v695, %v695
        %v712 = vpack.c.b16 %v696, %v696
        %v713 = vpack.c.b16 %v697, %v697
        %v714 = vpack.c.b16 %v698, %v698
        %v715 = vpack.c.b16 %v699, %v699
        %v716 = vpack.c.b16 %v700, %v700
        %v718 = vshrl.u32 %v701, 16
        %v720 = vrot.slane %v718, 7
        %v721 = vshll.u32 %v701, 16
        %v723 = vor.u32 %v720, %v721
        %v724 = vrot.slane %v720, 4
        %v726 = vshrl.u32 %v702, 16
        %v728 = vrot.slane %v726, 7
        %v729 = vshll.u32 %v702, 16
        %v731 = vor.u32 %v728, %v729
        %v732 = vrot.slane %v728, 4
        %v734 = vshrl.u32 %v703, 16
        %v736 = vrot.slane %v734, 7
        %v737 = vshll.u32 %v703, 16
        %v739 = vor.u32 %v736, %v737
        %v740 = vrot.slane %v736, 4
        %v742 = vshrl.u32 %v704, 16
        %v744 = vrot.slane %v742, 7
        %v745 = vshll.u32 %v704, 16
        %v747 = vor.u32 %v744, %v745
        %v748 = vrot.slane %v744, 4
        %v750 = vshrl.u32 %v705, 16
        %v752 = vrot.slane %v750, 7
        %v753 = vshll.u32 %v705, 16
        %v755 = vor.u32 %v752, %v753
        %v756 = vrot.slane %v752, 4
        %v758 = vshrl.u32 %v706, 16
        %v760 = vrot.slane %v758, 7
        %v761 = vshll.u32 %v706, 16
        %v763 = vor.u32 %v760, %v761
        %v764 = vrot.slane %v760, 4
        %v766 = vshrl.u32 %v707, 16
        %v768 = vrot.slane %v766, 7
        %v769 = vshll.u32 %v707, 16
        %v771 = vor.u32 %v768, %v769
        %v772 = vrot.slane %v768, 4
        %v774 = vshrl.u32 %v708, 16
        %v776 = vrot.slane %v774, 7
        %v777 = vshll.u32 %v708, 16
        %v779 = vor.u32 %v776, %v777
        %v780 = vrot.slane %v776, 4
        %v782 = vshrl.u32 %v709, 16
        %v784 = vrot.slane %v782, 7
        %v785 = vshll.u32 %v709, 16
        %v787 = vor.u32 %v784, %v785
        %v788 = vrot.slane %v784, 4
        %v790 = vshrl.u32 %v710, 16
        %v792 = vrot.slane %v790, 7
        %v793 = vshll.u32 %v710, 16
        %v795 = vor.u32 %v792, %v793
        %v796 = vrot.slane %v792, 4
        %v798 = vshrl.u32 %v711, 16
        %v800 = vrot.slane %v798, 7
        %v801 = vshll.u32 %v711, 16
        %v803 = vor.u32 %v800, %v801
        %v804 = vrot.slane %v800, 4
        %v806 = vshrl.u32 %v712, 16
        %v808 = vrot.slane %v806, 7
        %v809 = vshll.u32 %v712, 16
        %v811 = vor.u32 %v808, %v809
        %v812 = vrot.slane %v808, 4
        %v814 = vshrl.u32 %v713, 16
        %v816 = vrot.slane %v814, 7
        %v817 = vshll.u32 %v713, 16
        %v819 = vor.u32 %v816, %v817
        %v820 = vrot.slane %v816, 4
        %v822 = vshrl.u32 %v714, 16
        %v824 = vrot.slane %v822, 7
        %v825 = vshll.u32 %v714, 16
        %v827 = vor.u32 %v824, %v825
        %v828 = vrot.slane %v824, 4
        %v830 = vshrl.u32 %v715, 16
        %v832 = vrot.slane %v830, 7
        %v833 = vshll.u32 %v715, 16
        %v835 = vor.u32 %v832, %v833
        %v836 = vrot.slane %v832, 4
        %v838 = vshrl.u32 %v716, 16
        %v840 = vrot.slane %v838, 7
        %v841 = vshll.u32 %v716, 16
        %v843 = vor.u32 %v840, %v841
        %v844 = vrot.slane %v840, 4
        %s877 = scalar_lea.vmem [#allocation2], 8
        %vm878 = vcmask 125952
        %vm879 = vmand %vm878, %vm607
        %v880 = vld [vmem:[%s877] sm:$0xf]
        %v881 = vsel %vm879, %v723, %v880
        %882 = vst [vmem:[%s877] sm:$0xf] %v881
        %v883 = vld [vmem:[%s877 + $0x4] sm:$0x1]
        %v884 = vsel %vm546, %v724, %v883
        %885 = vst [vmem:[%s877 + $0x4] sm:$0x1] %v884
        %v886 = vld [vmem:[%s877 + $0x8] sm:$0xf]
        %v887 = vsel %vm879, %v731, %v886
        %888 = vst [vmem:[%s877 + $0x8] sm:$0xf] %v887
        %v889 = vld [vmem:[%s877 + $0xc] sm:$0x1]
        %v890 = vsel %vm546, %v732, %v889
        %891 = vst [vmem:[%s877 + $0xc] sm:$0x1] %v890
        %v892 = vld [vmem:[%s877 + $0x10] sm:$0xf]
        %v893 = vsel %vm879, %v739, %v892
        %894 = vst [vmem:[%s877 + $0x10] sm:$0xf] %v893
        %v895 = vld [vmem:[%s877 + $0x14] sm:$0x1]
        %v896 = vsel %vm546, %v740, %v895
        %897 = vst [vmem:[%s877 + $0x14] sm:$0x1] %v896
        %v898 = vld [vmem:[%s877 + $0x18] sm:$0xf]
        %v899 = vsel %vm879, %v747, %v898
        %900 = vst [vmem:[%s877 + $0x18] sm:$0xf] %v899
        %v901 = vld [vmem:[%s877 + $0x1c] sm:$0x1]
        %v902 = vsel %vm546, %v748, %v901
        %903 = vst [vmem:[%s877 + $0x1c] sm:$0x1] %v902
        %v904 = vld [vmem:[%s877 + $0x20] sm:$0xf]
        %v905 = vsel %vm879, %v755, %v904
        %906 = vst [vmem:[%s877 + $0x20] sm:$0xf] %v905
        %v907 = vld [vmem:[%s877 + $0x24] sm:$0x1]
        %v908 = vsel %vm546, %v756, %v907
        %909 = vst [vmem:[%s877 + $0x24] sm:$0x1] %v908
        %v910 = vld [vmem:[%s877 + $0x28] sm:$0xf]
        %v911 = vsel %vm879, %v763, %v910
        %912 = vst [vmem:[%s877 + $0x28] sm:$0xf] %v911
        %v913 = vld [vmem:[%s877 + $0x2c] sm:$0x1]
        %v914 = vsel %vm546, %v764, %v913
        %915 = vst [vmem:[%s877 + $0x2c] sm:$0x1] %v914
        %v916 = vld [vmem:[%s877 + $0x30] sm:$0xf]
        %v917 = vsel %vm879, %v771, %v916
        %918 = vst [vmem:[%s877 + $0x30] sm:$0xf] %v917
        %v919 = vld [vmem:[%s877 + $0x34] sm:$0x1]
        %v920 = vsel %vm546, %v772, %v919
        %921 = vst [vmem:[%s877 + $0x34] sm:$0x1] %v920
        %v922 = vld [vmem:[%s877 + $0x38] sm:$0xf]
        %v923 = vsel %vm879, %v779, %v922
        %924 = vst [vmem:[%s877 + $0x38] sm:$0xf] %v923
        %v925 = vld [vmem:[%s877 + $0x3c] sm:$0x1]
        %v926 = vsel %vm546, %v780, %v925
        %927 = vst [vmem:[%s877 + $0x3c] sm:$0x1] %v926
        %v928 = vld [vmem:[%s877 + $0x50] sm:$0xf]
        %v929 = vsel %vm879, %v787, %v928
        %930 = vst [vmem:[%s877 + $0x50] sm:$0xf] %v929
        %v931 = vld [vmem:[%s877 + $0x54] sm:$0x1]
        %v932 = vsel %vm546, %v788, %v931
        %933 = vst [vmem:[%s877 + $0x54] sm:$0x1] %v932
        %v934 = vld [vmem:[%s877 + $0x58] sm:$0xf]
        %v935 = vsel %vm879, %v795, %v934
        %936 = vst [vmem:[%s877 + $0x58] sm:$0xf] %v935
        %v937 = vld [vmem:[%s877 + $0x5c] sm:$0x1]
        %v938 = vsel %vm546, %v796, %v937
        %939 = vst [vmem:[%s877 + $0x5c] sm:$0x1] %v938
        %v940 = vld [vmem:[%s877 + $0x60] sm:$0xf]
        %v941 = vsel %vm879, %v803, %v940
        %942 = vst [vmem:[%s877 + $0x60] sm:$0xf] %v941
        %v943 = vld [vmem:[%s877 + $0x64] sm:$0x1]
        %v944 = vsel %vm546, %v804, %v943
        %945 = vst [vmem:[%s877 + $0x64] sm:$0x1] %v944
        %v946 = vld [vmem:[%s877 + $0x68] sm:$0xf]
        %v947 = vsel %vm879, %v811, %v946
        %948 = vst [vmem:[%s877 + $0x68] sm:$0xf] %v947
        %v949 = vld [vmem:[%s877 + $0x6c] sm:$0x1]
        %v950 = vsel %vm546, %v812, %v949
        %951 = vst [vmem:[%s877 + $0x6c] sm:$0x1] %v950
        %v952 = vld [vmem:[%s877 + $0x70] sm:$0xf]
        %v953 = vsel %vm879, %v819, %v952
        %954 = vst [vmem:[%s877 + $0x70] sm:$0xf] %v953
        %v955 = vld [vmem:[%s877 + $0x74] sm:$0x1]
        %v956 = vsel %vm546, %v820, %v955
        %957 = vst [vmem:[%s877 + $0x74] sm:$0x1] %v956
        %v958 = vld [vmem:[%s877 + $0x78] sm:$0xf]
        %v959 = vsel %vm879, %v827, %v958
        %960 = vst [vmem:[%s877 + $0x78] sm:$0xf] %v959
        %v961 = vld [vmem:[%s877 + $0x7c] sm:$0x1]
        %v962 = vsel %vm546, %v828, %v961
        %963 = vst [vmem:[%s877 + $0x7c] sm:$0x1] %v962
        %v964 = vld [vmem:[%s877 + $0x80] sm:$0xf]
        %v965 = vsel %vm879, %v835, %v964
        %966 = vst [vmem:[%s877 + $0x80] sm:$0xf] %v965
        %v967 = vld [vmem:[%s877 + $0x84] sm:$0x1]
        %v968 = vsel %vm546, %v836, %v967
        %969 = vst [vmem:[%s877 + $0x84] sm:$0x1] %v968
        %v970 = vld [vmem:[%s877 + $0x88] sm:$0xf]
        %v971 = vsel %vm879, %v843, %v970
        %972 = vst [vmem:[%s877 + $0x88] sm:$0xf] %v971
        %v973 = vld [vmem:[%s877 + $0x8c] sm:$0x1]
        %v974 = vsel %vm546, %v844, %v973
        %975 = vst [vmem:[%s877 + $0x8c] sm:$0x1] %v974
        %v976 = vld [vmem:[#allocation2] sm:$0xf]
        %v977 = vld [vmem:[#allocation2 + $0x8] sm:$0xf]
        %v978 = vld [vmem:[#allocation2 + $0x10] sm:$0xf]
        %v979 = vld [vmem:[#allocation2 + $0x18] sm:$0xf]
        %v980 = vld [vmem:[#allocation2 + $0x20] sm:$0xf]
        %v981 = vld [vmem:[#allocation2 + $0x28] sm:$0xf]
        %v982 = vld [vmem:[#allocation2 + $0x30] sm:$0xf]
        %v983 = vld [vmem:[#allocation2 + $0x38] sm:$0xf]
        %v984 = vld [vmem:[#allocation2 + $0x50] sm:$0xf]
        %v985 = vld [vmem:[#allocation2 + $0x58] sm:$0xf]
        %v986 = vld [vmem:[#allocation2 + $0x60] sm:$0xf]
        %v987 = vld [vmem:[#allocation2 + $0x68] sm:$0xf]
        %v988 = vld [vmem:[#allocation2 + $0x70] sm:$0xf]
        %v989 = vld [vmem:[#allocation2 + $0x78] sm:$0xf]
        %v990 = vld [vmem:[#allocation2 + $0x80] sm:$0xf]
        %v991 = vld [vmem:[#allocation2 + $0x88] sm:$0xf]
        %v992 = vld [vmem:[%s3] sm:$0xf]
        %v993 = vld [vmem:[%s3 + $0x4] sm:$0xf]
        %v994 = vld [vmem:[#allocation2 + $0x4] sm:$0x1]
        %v995 = vld [vmem:[#allocation2 + $0xc] sm:$0x1]
        %v996 = vld [vmem:[#allocation2 + $0x14] sm:$0x1]
        %v997 = vld [vmem:[#allocation2 + $0x1c] sm:$0x1]
        %v998 = vld [vmem:[#allocation2 + $0x24] sm:$0x1]
        %v999 = vld [vmem:[#allocation2 + $0x2c] sm:$0x1]
        %v1000 = vld [vmem:[#allocation2 + $0x34] sm:$0x1]
        %v1001 = vld [vmem:[#allocation2 + $0x3c] sm:$0x1]
        %v1002 = vld [vmem:[#allocation2 + $0x54] sm:$0x1]
        %v1003 = vld [vmem:[#allocation2 + $0x5c] sm:$0x1]
        %v1004 = vld [vmem:[#allocation2 + $0x64] sm:$0x1]
        %v1005 = vld [vmem:[#allocation2 + $0x6c] sm:$0x1]
        %v1006 = vld [vmem:[#allocation2 + $0x74] sm:$0x1]
        %v1007 = vld [vmem:[#allocation2 + $0x7c] sm:$0x1]
        %v1008 = vld [vmem:[#allocation2 + $0x84] sm:$0x1]
        %v1009 = vld [vmem:[#allocation2 + $0x8c] sm:$0x1]
        %vm1010 = vsmask.f32 3328
        %vm1011 = vsmask.f32 7440
        %vm1012 = vmor %vm1010, %vm1011
        %v1014 = vshrl.u32 %v976, 16
        %v1016 = vrot.slane %v1014, 4
        %v1017 = vshll.u32 %v976, 16
        %v1019 = vrot.slane %v1017, 5
        %v1020 = vor.u32 %v1016, %v1019
        %v1021 = vrot.slane %v1020, 4
        %v1023 = vshll.u32 %v994, 16
        %v1025 = vrot.slane %v1023, 5
        %v1026 = vsel %vm1012, %v1021, %v1025
        %v1028 = vshrl.u32 %v977, 16
        %v1030 = vrot.slane %v1028, 4
        %v1031 = vshll.u32 %v977, 16
        %v1033 = vrot.slane %v1031, 5
        %v1034 = vor.u32 %v1030, %v1033
        %v1035 = vrot.slane %v1034, 4
        %v1037 = vshll.u32 %v995, 16
        %v1039 = vrot.slane %v1037, 5
        %v1040 = vsel %vm1012, %v1035, %v1039
        %v1042 = vshrl.u32 %v978, 16
        %v1044 = vrot.slane %v1042, 4
        %v1045 = vshll.u32 %v978, 16
        %v1047 = vrot.slane %v1045, 5
        %v1048 = vor.u32 %v1044, %v1047
        %v1049 = vrot.slane %v1048, 4
        %v1051 = vshll.u32 %v996, 16
        %v1053 = vrot.slane %v1051, 5
        %v1054 = vsel %vm1012, %v1049, %v1053
        %v1056 = vshrl.u32 %v979, 16
        %v1058 = vrot.slane %v1056, 4
        %v1059 = vshll.u32 %v979, 16
        %v1061 = vrot.slane %v1059, 5
        %v1062 = vor.u32 %v1058, %v1061
        %v1063 = vrot.slane %v1062, 4
        %v1065 = vshll.u32 %v997, 16
        %v1067 = vrot.slane %v1065, 5
        %v1068 = vsel %vm1012, %v1063, %v1067
        %v1070 = vshrl.u32 %v980, 16
        %v1072 = vrot.slane %v1070, 4
        %v1073 = vshll.u32 %v980, 16
        %v1075 = vrot.slane %v1073, 5
        %v1076 = vor.u32 %v1072, %v1075
        %v1077 = vrot.slane %v1076, 4
        %v1079 = vshll.u32 %v998, 16
        %v1081 = vrot.slane %v1079, 5
        %v1082 = vsel %vm1012, %v1077, %v1081
        %v1084 = vshrl.u32 %v981, 16
        %v1086 = vrot.slane %v1084, 4
        %v1087 = vshll.u32 %v981, 16
        %v1089 = vrot.slane %v1087, 5
        %v1090 = vor.u32 %v1086, %v1089
        %v1091 = vrot.slane %v1090, 4
        %v1093 = vshll.u32 %v999, 16
        %v1095 = vrot.slane %v1093, 5
        %v1096 = vsel %vm1012, %v1091, %v1095
        %v1098 = vshrl.u32 %v982, 16
        %v1100 = vrot.slane %v1098, 4
        %v1101 = vshll.u32 %v982, 16
        %v1103 = vrot.slane %v1101, 5
        %v1104 = vor.u32 %v1100, %v1103
        %v1105 = vrot.slane %v1104, 4
        %v1107 = vshll.u32 %v1000, 16
        %v1109 = vrot.slane %v1107, 5
        %v1110 = vsel %vm1012, %v1105, %v1109
        %v1112 = vshrl.u32 %v983, 16
        %v1114 = vrot.slane %v1112, 4
        %v1115 = vshll.u32 %v983, 16
        %v1117 = vrot.slane %v1115, 5
        %v1118 = vor.u32 %v1114, %v1117
        %v1119 = vrot.slane %v1118, 4
        %v1121 = vshll.u32 %v1001, 16
        %v1123 = vrot.slane %v1121, 5
        %v1124 = vsel %vm1012, %v1119, %v1123
        %v1126 = vshrl.u32 %v984, 16
        %v1128 = vrot.slane %v1126, 4
        %v1129 = vshll.u32 %v984, 16
        %v1131 = vrot.slane %v1129, 5
        %v1132 = vor.u32 %v1128, %v1131
        %v1133 = vrot.slane %v1132, 4
        %v1135 = vshll.u32 %v1002, 16
        %v1137 = vrot.slane %v1135, 5
        %v1138 = vsel %vm1012, %v1133, %v1137
        %v1140 = vshrl.u32 %v985, 16
        %v1142 = vrot.slane %v1140, 4
        %v1143 = vshll.u32 %v985, 16
        %v1145 = vrot.slane %v1143, 5
        %v1146 = vor.u32 %v1142, %v1145
        %v1147 = vrot.slane %v1146, 4
        %v1149 = vshll.u32 %v1003, 16
        %v1151 = vrot.slane %v1149, 5
        %v1152 = vsel %vm1012, %v1147, %v1151
        %v1154 = vshrl.u32 %v986, 16
        %v1156 = vrot.slane %v1154, 4
        %v1157 = vshll.u32 %v986, 16
        %v1159 = vrot.slane %v1157, 5
        %v1160 = vor.u32 %v1156, %v1159
        %v1161 = vrot.slane %v1160, 4
        %v1163 = vshll.u32 %v1004, 16
        %v1165 = vrot.slane %v1163, 5
        %v1166 = vsel %vm1012, %v1161, %v1165
        %v1168 = vshrl.u32 %v987, 16
        %v1170 = vrot.slane %v1168, 4
        %v1171 = vshll.u32 %v987, 16
        %v1173 = vrot.slane %v1171, 5
        %v1174 = vor.u32 %v1170, %v1173
        %v1175 = vrot.slane %v1174, 4
        %v1177 = vshll.u32 %v1005, 16
        %v1179 = vrot.slane %v1177, 5
        %v1180 = vsel %vm1012, %v1175, %v1179
        %v1182 = vshrl.u32 %v988, 16
        %v1184 = vrot.slane %v1182, 4
        %v1185 = vshll.u32 %v988, 16
        %v1187 = vrot.slane %v1185, 5
        %v1188 = vor.u32 %v1184, %v1187
        %v1189 = vrot.slane %v1188, 4
        %v1191 = vshll.u32 %v1006, 16
        %v1193 = vrot.slane %v1191, 5
        %v1194 = vsel %vm1012, %v1189, %v1193
        %v1196 = vshrl.u32 %v989, 16
        %v1198 = vrot.slane %v1196, 4
        %v1199 = vshll.u32 %v989, 16
        %v1201 = vrot.slane %v1199, 5
        %v1202 = vor.u32 %v1198, %v1201
        %v1203 = vrot.slane %v1202, 4
        %v1205 = vshll.u32 %v1007, 16
        %v1207 = vrot.slane %v1205, 5
        %v1208 = vsel %vm1012, %v1203, %v1207
        %v1210 = vshrl.u32 %v990, 16
        %v1212 = vrot.slane %v1210, 4
        %v1213 = vshll.u32 %v990, 16
        %v1215 = vrot.slane %v1213, 5
        %v1216 = vor.u32 %v1212, %v1215
        %v1217 = vrot.slane %v1216, 4
        %v1219 = vshll.u32 %v1008, 16
        %v1221 = vrot.slane %v1219, 5
        %v1222 = vsel %vm1012, %v1217, %v1221
        %v1224 = vshrl.u32 %v991, 16
        %v1226 = vrot.slane %v1224, 4
        %v1227 = vshll.u32 %v991, 16
        %v1229 = vrot.slane %v1227, 5
        %v1230 = vor.u32 %v1226, %v1229
        %v1231 = vrot.slane %v1230, 4
        %v1233 = vshll.u32 %v1009, 16
        %v1235 = vrot.slane %v1233, 5
        %v1236 = vsel %vm1012, %v1231, %v1235
        %v1237 = vld [vmem:[%s3 + $0x8] sm:$0xf]
        %v1238 = vld [vmem:[%s3 + $0xc] sm:$0xf]
        %v1239 = vunpack.c.l.b16 %v1026
        %v1240 = vunpack.c.l.b16 %v1040
        %v1241 = vunpack.c.l.b16 %v1054
        %v1242 = vunpack.c.l.b16 %v1068
        %v1243 = vunpack.c.l.b16 %v1082
        %v1244 = vunpack.c.l.b16 %v1096
        %v1245 = vunpack.c.l.b16 %v1110
        %v1246 = vunpack.c.l.b16 %v1124
        %v1247 = vunpack.c.l.b16 %v1138
        %v1248 = vunpack.c.l.b16 %v1152
        %v1249 = vunpack.c.l.b16 %v1166
        %v1250 = vunpack.c.l.b16 %v1180
        %v1251 = vunpack.c.l.b16 %v1194
        %v1252 = vunpack.c.l.b16 %v1208
        %v1253 = vunpack.c.l.b16 %v1222
        %v1254 = vunpack.c.l.b16 %v1236
        %v1255 = vpack.c.b16 %v1240, %v1239
        %v1256 = vpack.c.b16 %v1242, %v1241
        %v1257 = vpack.c.b16 %v1244, %v1243
        %v1258 = vpack.c.b16 %v1246, %v1245
        %v1259 = vpack.c.b16 %v1248, %v1247
        %v1260 = vpack.c.b16 %v1250, %v1249
        %v1261 = vpack.c.b16 %v1252, %v1251
        %v1262 = vpack.c.b16 %v1254, %v1253
        %v1265 = vunpack.c.l.b16 %v1237
        %v1266 = vunpack.c.l.b16 %v1238
        %v1267 = vpack.c.b16 %v1266, %v1265
        %vm1269 = vcmask 130048
        %v1271 = vsel %vm1269, %v1255, 0
        %v1274 = vsel %vm1269, %v1256, 0
        %v1277 = vsel %vm1269, %v1257, 0
        %v1280 = vsel %vm1269, %v1258, 0
        %v1283 = vsel %vm1269, %v1259, 0
        %v1286 = vsel %vm1269, %v1260, 0
        %v1289 = vsel %vm1269, %v1261, 0
        %v1292 = vsel %vm1269, %v1262, 0
        %1294 = vmatprep.subr.bf16.mxu0 0
        %1295 = vmatpush1.bf16.msra.mxu0 0
        %1296 = vmatprep.subr.bf16.mxu0 0
        %1297 = vmatpush1.bf16.msra.mxu0 0
        %1298 = vmatprep.subr.bf16.mxu0 0
        %1299 = vmatpush1.bf16.msra.mxu0 0
        %1300 = vmatprep.subr.bf16.mxu0 0
        %1301 = vmatpush1.bf16.msra.mxu0 0
        %1302 = vmatprep.subr.bf16.mxu0 0
        %1303 = vmatpush1.bf16.msra.mxu0 0
        %1304 = vmatprep.subr.bf16.mxu0 0
        %1305 = vmatpush1.bf16.msra.mxu0 0
        %1306 = vmatprep.subr.bf16.mxu0 0
        %1307 = vmatpush1.bf16.msra.mxu0 0
        %1308 = vmatprep.subr.bf16.mxu0 0
        %1309 = vmatpush1.bf16.msra.mxu0 %v1267
        %1310 = vmatprep.subr.bf16.mxu0 0
        %1311 = vmatpush2.bf16.msra.mxu0 0
        %1312 = vmatprep.subr.bf16.mxu0 0
        %1313 = vmatpush2.bf16.msra.mxu0 0
        %1314 = vmatprep.subr.bf16.mxu0 0
        %1315 = vmatpush2.bf16.msra.mxu0 0
        %1316 = vmatprep.subr.bf16.mxu0 0
        %1317 = vmatpush2.bf16.msra.mxu0 0
        %1318 = vmatprep.subr.bf16.mxu0 0
        %1319 = vmatpush2.bf16.msra.mxu0 0
        %1320 = vmatprep.subr.bf16.mxu0 0
        %1321 = vmatpush2.bf16.msra.mxu0 0
        %1322 = vmatprep.subr.bf16.mxu0 0
        %1323 = vmatpush2.bf16.msra.mxu0 0
        %1324 = vmatprep.subr.bf16.mxu0 0
        %1325 = vmatpush2.bf16.msra.mxu0 0
        %1326 = vmatprep.mubr.bf16.mxu0 0
        %1327 = vmatmul.mubr.bf16.gmra.mxu0 %v1271
        %v1328 = vpop.f32.mrf.mxu0
        %v1329 = vadd.f32 0.0, %v1328
        %v1330 = vpop.f32.mrf.mxu0
        %v1331 = vpop.f32.mrf.mxu0
        %v1332 = vadd.f32 0.0, %v1331
        %v1333 = vpop.f32.mrf.mxu0
        %1334 = vmatprep.mubr.bf16.mxu0 0
        %1335 = vmatmul.mubr.bf16.gmra.mxu0 %v1274
        %v1336 = vpop.f32.mrf.mxu0
        %v1337 = vadd.f32 0.0, %v1336
        %v1338 = vpop.f32.mrf.mxu0
        %v1339 = vpop.f32.mrf.mxu0
        %v1340 = vadd.f32 0.0, %v1339
        %v1341 = vpop.f32.mrf.mxu0
        %1342 = vmatprep.mubr.bf16.mxu0 0
        %1343 = vmatmul.mubr.bf16.gmra.mxu0 %v1277
        %v1344 = vpop.f32.mrf.mxu0
        %v1345 = vadd.f32 0.0, %v1344
        %v1346 = vpop.f32.mrf.mxu0
        %v1347 = vpop.f32.mrf.mxu0
        %v1348 = vadd.f32 0.0, %v1347
        %v1349 = vpop.f32.mrf.mxu0
        %1350 = vmatprep.mubr.bf16.mxu0 0
        %1351 = vmatmul.mubr.bf16.gmra.mxu0 %v1280
        %v1352 = vpop.f32.mrf.mxu0
        %v1353 = vadd.f32 0.0, %v1352
        %v1354 = vpop.f32.mrf.mxu0
        %v1355 = vpop.f32.mrf.mxu0
        %v1356 = vadd.f32 0.0, %v1355
        %v1357 = vpop.f32.mrf.mxu0
        %1358 = vmatprep.mubr.bf16.mxu0 0
        %1359 = vmatmul.mubr.bf16.gmra.mxu0 %v1283
        %v1360 = vpop.f32.mrf.mxu0
        %v1361 = vadd.f32 0.0, %v1360
        %v1362 = vpop.f32.mrf.mxu0
        %v1363 = vpop.f32.mrf.mxu0
        %v1364 = vadd.f32 0.0, %v1363
        %v1365 = vpop.f32.mrf.mxu0
        %1366 = vmatprep.mubr.bf16.mxu0 0
        %1367 = vmatmul.mubr.bf16.gmra.mxu0 %v1286
        %v1368 = vpop.f32.mrf.mxu0
        %v1369 = vadd.f32 0.0, %v1368
        %v1370 = vpop.f32.mrf.mxu0
        %v1371 = vpop.f32.mrf.mxu0
        %v1372 = vadd.f32 0.0, %v1371
        %v1373 = vpop.f32.mrf.mxu0
        %1374 = vmatprep.mubr.bf16.mxu0 0
        %1375 = vmatmul.mubr.bf16.gmra.mxu0 %v1289
        %v1376 = vpop.f32.mrf.mxu0
        %v1377 = vadd.f32 0.0, %v1376
        %v1378 = vpop.f32.mrf.mxu0
        %v1379 = vpop.f32.mrf.mxu0
        %v1380 = vadd.f32 0.0, %v1379
        %v1381 = vpop.f32.mrf.mxu0
        %1382 = vmatprep.mubr.bf16.mxu0 0
        %1383 = vmatmul.mubr.bf16.gmra.mxu0 %v1292
        %v1384 = vpop.f32.mrf.mxu0
        %v1385 = vadd.f32 0.0, %v1384
        %v1386 = vpop.f32.mrf.mxu0
        %v1387 = vpop.f32.mrf.mxu0
        %v1388 = vadd.f32 0.0, %v1387
        %v1389 = vpop.f32.mrf.mxu0
        %1390 = vdwg.mxu0
        %v1407 = vunpack.c.l.b16 %v976
        %v1408 = vunpack.c.l.b16 %v977
        %v1409 = vunpack.c.l.b16 %v978
        %v1410 = vunpack.c.l.b16 %v979
        %v1411 = vunpack.c.l.b16 %v980
        %v1412 = vunpack.c.l.b16 %v981
        %v1413 = vunpack.c.l.b16 %v982
        %v1414 = vunpack.c.l.b16 %v983
        %v1415 = vunpack.c.l.b16 %v984
        %v1416 = vunpack.c.l.b16 %v985
        %v1417 = vunpack.c.l.b16 %v986
        %v1418 = vunpack.c.l.b16 %v987
        %v1419 = vunpack.c.l.b16 %v988
        %v1420 = vunpack.c.l.b16 %v989
        %v1421 = vunpack.c.l.b16 %v990
        %v1422 = vunpack.c.l.b16 %v991
        %v1423 = vpack.c.b16 %v1408, %v1407
        %v1424 = vpack.c.b16 %v1410, %v1409
        %v1425 = vpack.c.b16 %v1412, %v1411
        %v1426 = vpack.c.b16 %v1414, %v1413
        %v1427 = vpack.c.b16 %v1416, %v1415
        %v1428 = vpack.c.b16 %v1418, %v1417
        %v1429 = vpack.c.b16 %v1420, %v1419
        %v1430 = vpack.c.b16 %v1422, %v1421
        %v1433 = vunpack.c.l.b16 %v992
        %v1434 = vunpack.c.l.b16 %v993
        %v1435 = vpack.c.b16 %v1434, %v1433
        %v1438 = vsel %vm1269, %v1423, 0
        %v1441 = vsel %vm1269, %v1424, 0
        %v1444 = vsel %vm1269, %v1425, 0
        %v1447 = vsel %vm1269, %v1426, 0
        %v1450 = vsel %vm1269, %v1427, 0
        %v1453 = vsel %vm1269, %v1428, 0
        %v1456 = vsel %vm1269, %v1429, 0
        %v1459 = vsel %vm1269, %v1430, 0
        %1461 = vmatprep.subr.bf16.mxu0 0
        %1462 = vmatpush1.bf16.msra.mxu0 0
        %1463 = vmatprep.subr.bf16.mxu0 0
        %1464 = vmatpush1.bf16.msra.mxu0 0
        %1465 = vmatprep.subr.bf16.mxu0 0
        %1466 = vmatpush1.bf16.msra.mxu0 0
        %1467 = vmatprep.subr.bf16.mxu0 0
        %1468 = vmatpush1.bf16.msra.mxu0 0
        %1469 = vmatprep.subr.bf16.mxu0 0
        %1470 = vmatpush1.bf16.msra.mxu0 0
        %1471 = vmatprep.subr.bf16.mxu0 0
        %1472 = vmatpush1.bf16.msra.mxu0 0
        %1473 = vmatprep.subr.bf16.mxu0 0
        %1474 = vmatpush1.bf16.msra.mxu0 0
        %1475 = vmatprep.subr.bf16.mxu0 0
        %1476 = vmatpush1.bf16.msra.mxu0 %v1435
        %1477 = vmatprep.subr.bf16.mxu0 0
        %1478 = vmatpush2.bf16.msra.mxu0 0
        %1479 = vmatprep.subr.bf16.mxu0 0
        %1480 = vmatpush2.bf16.msra.mxu0 0
        %1481 = vmatprep.subr.bf16.mxu0 0
        %1482 = vmatpush2.bf16.msra.mxu0 0
        %1483 = vmatprep.subr.bf16.mxu0 0
        %1484 = vmatpush2.bf16.msra.mxu0 0
        %1485 = vmatprep.subr.bf16.mxu0 0
        %1486 = vmatpush2.bf16.msra.mxu0 0
        %1487 = vmatprep.subr.bf16.mxu0 0
        %1488 = vmatpush2.bf16.msra.mxu0 0
        %1489 = vmatprep.subr.bf16.mxu0 0
        %1490 = vmatpush2.bf16.msra.mxu0 0
        %1491 = vmatprep.subr.bf16.mxu0 0
        %1492 = vmatpush2.bf16.msra.mxu0 0
        %1493 = vmatprep.mubr.bf16.mxu0 0
        %1494 = vmatmul.mubr.bf16.gmra.mxu0 %v1438
        %v1495 = vpop.f32.mrf.mxu0
        %v1496 = vadd.f32 %v1329, %v1495
        %v1497 = vpop.f32.mrf.mxu0
        %v1498 = vpop.f32.mrf.mxu0
        %v1499 = vadd.f32 %v1332, %v1498
        %v1500 = vpop.f32.mrf.mxu0
        %1501 = vmatprep.mubr.bf16.mxu0 0
        %1502 = vmatmul.mubr.bf16.gmra.mxu0 %v1441
        %v1503 = vpop.f32.mrf.mxu0
        %v1504 = vadd.f32 %v1337, %v1503
        %v1505 = vpop.f32.mrf.mxu0
        %v1506 = vpop.f32.mrf.mxu0
        %v1507 = vadd.f32 %v1340, %v1506
        %v1508 = vpop.f32.mrf.mxu0
        %1509 = vmatprep.mubr.bf16.mxu0 0
        %1510 = vmatmul.mubr.bf16.gmra.mxu0 %v1444
        %v1511 = vpop.f32.mrf.mxu0
        %v1512 = vadd.f32 %v1345, %v1511
        %v1513 = vpop.f32.mrf.mxu0
        %v1514 = vpop.f32.mrf.mxu0
        %v1515 = vadd.f32 %v1348, %v1514
        %v1516 = vpop.f32.mrf.mxu0
        %1517 = vmatprep.mubr.bf16.mxu0 0
        %1518 = vmatmul.mubr.bf16.gmra.mxu0 %v1447
        %v1519 = vpop.f32.mrf.mxu0
        %v1520 = vadd.f32 %v1353, %v1519
        %v1521 = vpop.f32.mrf.mxu0
        %v1522 = vpop.f32.mrf.mxu0
        %v1523 = vadd.f32 %v1356, %v1522
        %v1524 = vpop.f32.mrf.mxu0
        %1525 = vmatprep.mubr.bf16.mxu0 0
        %1526 = vmatmul.mubr.bf16.gmra.mxu0 %v1450
        %v1527 = vpop.f32.mrf.mxu0
        %v1528 = vadd.f32 %v1361, %v1527
        %v1529 = vpop.f32.mrf.mxu0
        %v1530 = vpop.f32.mrf.mxu0
        %v1531 = vadd.f32 %v1364, %v1530
        %v1532 = vpop.f32.mrf.mxu0
        %1533 = vmatprep.mubr.bf16.mxu0 0
        %1534 = vmatmul.mubr.bf16.gmra.mxu0 %v1453
        %v1535 = vpop.f32.mrf.mxu0
        %v1536 = vadd.f32 %v1369, %v1535
        %v1537 = vpop.f32.mrf.mxu0
        %v1538 = vpop.f32.mrf.mxu0
        %v1539 = vadd.f32 %v1372, %v1538
        %v1540 = vpop.f32.mrf.mxu0
        %1541 = vmatprep.mubr.bf16.mxu0 0
        %1542 = vmatmul.mubr.bf16.gmra.mxu0 %v1456
        %v1543 = vpop.f32.mrf.mxu0
        %v1544 = vadd.f32 %v1377, %v1543
        %v1545 = vpop.f32.mrf.mxu0
        %v1546 = vpop.f32.mrf.mxu0
        %v1547 = vadd.f32 %v1380, %v1546
        %v1548 = vpop.f32.mrf.mxu0
        %1549 = vmatprep.mubr.bf16.mxu0 0
        %1550 = vmatmul.mubr.bf16.gmra.mxu0 %v1459
        %v1551 = vpop.f32.mrf.mxu0
        %v1552 = vadd.f32 %v1385, %v1551
        %v1553 = vpop.f32.mrf.mxu0
        %v1554 = vpop.f32.mrf.mxu0
        %v1555 = vadd.f32 %v1388, %v1554
        %v1556 = vpop.f32.mrf.mxu0
        %1557 = vdwg.mxu0
        %v1558 = vld [vmem:[#allocation2] sm:$0xe]
        %v1559 = vld [vmem:[#allocation2 + $0x8] sm:$0xe]
        %v1560 = vld [vmem:[#allocation2 + $0x10] sm:$0xe]
        %v1561 = vld [vmem:[#allocation2 + $0x18] sm:$0xe]
        %v1562 = vld [vmem:[#allocation2 + $0x20] sm:$0xe]
        %v1563 = vld [vmem:[#allocation2 + $0x28] sm:$0xe]
        %v1564 = vld [vmem:[#allocation2 + $0x30] sm:$0xe]
        %v1565 = vld [vmem:[#allocation2 + $0x38] sm:$0xe]
        %v1566 = vld [vmem:[#allocation2 + $0x50] sm:$0xe]
        %v1567 = vld [vmem:[#allocation2 + $0x58] sm:$0xe]
        %v1568 = vld [vmem:[#allocation2 + $0x60] sm:$0xe]
        %v1569 = vld [vmem:[#allocation2 + $0x68] sm:$0xe]
        %v1570 = vld [vmem:[#allocation2 + $0x70] sm:$0xe]
        %v1571 = vld [vmem:[#allocation2 + $0x78] sm:$0xe]
        %v1572 = vld [vmem:[#allocation2 + $0x80] sm:$0xe]
        %v1573 = vld [vmem:[#allocation2 + $0x88] sm:$0xe]
        %vm1606 = vcmask 1042432
        %vm1607 = vcmask 1046532
        %vm1608 = vmor %vm1606, %vm1607
        %v1609 = vrot.slane %v1558, 5
        %v1610 = vrot.slane %v1609, 4
        %v1611 = vrot.slane %v994, 5
        %v1612 = vsel %vm1608, %v1610, %v1611
        %v1613 = vrot.slane %v1559, 5
        %v1614 = vrot.slane %v1613, 4
        %v1615 = vrot.slane %v995, 5
        %v1616 = vsel %vm1608, %v1614, %v1615
        %v1617 = vrot.slane %v1560, 5
        %v1618 = vrot.slane %v1617, 4
        %v1619 = vrot.slane %v996, 5
        %v1620 = vsel %vm1608, %v1618, %v1619
        %v1621 = vrot.slane %v1561, 5
        %v1622 = vrot.slane %v1621, 4
        %v1623 = vrot.slane %v997, 5
        %v1624 = vsel %vm1608, %v1622, %v1623
        %v1625 = vrot.slane %v1562, 5
        %v1626 = vrot.slane %v1625, 4
        %v1627 = vrot.slane %v998, 5
        %v1628 = vsel %vm1608, %v1626, %v1627
        %v1629 = vrot.slane %v1563, 5
        %v1630 = vrot.slane %v1629, 4
        %v1631 = vrot.slane %v999, 5
        %v1632 = vsel %vm1608, %v1630, %v1631
        %v1633 = vrot.slane %v1564, 5
        %v1634 = vrot.slane %v1633, 4
        %v1635 = vrot.slane %v1000, 5
        %v1636 = vsel %vm1608, %v1634, %v1635
        %v1637 = vrot.slane %v1565, 5
        %v1638 = vrot.slane %v1637, 4
        %v1639 = vrot.slane %v1001, 5
        %v1640 = vsel %vm1608, %v1638, %v1639
        %v1641 = vrot.slane %v1566, 5
        %v1642 = vrot.slane %v1641, 4
        %v1643 = vrot.slane %v1002, 5
        %v1644 = vsel %vm1608, %v1642, %v1643
        %v1645 = vrot.slane %v1567, 5
        %v1646 = vrot.slane %v1645, 4
        %v1647 = vrot.slane %v1003, 5
        %v1648 = vsel %vm1608, %v1646, %v1647
        %v1649 = vrot.slane %v1568, 5
        %v1650 = vrot.slane %v1649, 4
        %v1651 = vrot.slane %v1004, 5
        %v1652 = vsel %vm1608, %v1650, %v1651
        %v1653 = vrot.slane %v1569, 5
        %v1654 = vrot.slane %v1653, 4
        %v1655 = vrot.slane %v1005, 5
        %v1656 = vsel %vm1608, %v1654, %v1655
        %v1657 = vrot.slane %v1570, 5
        %v1658 = vrot.slane %v1657, 4
        %v1659 = vrot.slane %v1006, 5
        %v1660 = vsel %vm1608, %v1658, %v1659
        %v1661 = vrot.slane %v1571, 5
        %v1662 = vrot.slane %v1661, 4
        %v1663 = vrot.slane %v1007, 5
        %v1664 = vsel %vm1608, %v1662, %v1663
        %v1665 = vrot.slane %v1572, 5
        %v1666 = vrot.slane %v1665, 4
        %v1667 = vrot.slane %v1008, 5
        %v1668 = vsel %vm1608, %v1666, %v1667
        %v1669 = vrot.slane %v1573, 5
        %v1670 = vrot.slane %v1669, 4
        %v1671 = vrot.slane %v1009, 5
        %v1672 = vsel %vm1608, %v1670, %v1671
        %v1673 = vld [vmem:[%s3 + $0x10] sm:$0xf]
        %v1674 = vld [vmem:[%s3 + $0x14] sm:$0xf]
        %v1675 = vunpack.c.l.b16 %v1612
        %v1676 = vunpack.c.l.b16 %v1616
        %v1677 = vunpack.c.l.b16 %v1620
        %v1678 = vunpack.c.l.b16 %v1624
        %v1679 = vunpack.c.l.b16 %v1628
        %v1680 = vunpack.c.l.b16 %v1632
        %v1681 = vunpack.c.l.b16 %v1636
        %v1682 = vunpack.c.l.b16 %v1640
        %v1683 = vunpack.c.l.b16 %v1644
        %v1684 = vunpack.c.l.b16 %v1648
        %v1685 = vunpack.c.l.b16 %v1652
        %v1686 = vunpack.c.l.b16 %v1656
        %v1687 = vunpack.c.l.b16 %v1660
        %v1688 = vunpack.c.l.b16 %v1664
        %v1689 = vunpack.c.l.b16 %v1668
        %v1690 = vunpack.c.l.b16 %v1672
        %v1691 = vpack.c.b16 %v1676, %v1675
        %v1692 = vpack.c.b16 %v1678, %v1677
        %v1693 = vpack.c.b16 %v1680, %v1679
        %v1694 = vpack.c.b16 %v1682, %v1681
        %v1695 = vpack.c.b16 %v1684, %v1683
        %v1696 = vpack.c.b16 %v1686, %v1685
        %v1697 = vpack.c.b16 %v1688, %v1687
        %v1698 = vpack.c.b16 %v1690, %v1689
        %v1701 = vunpack.c.l.b16 %v1673
        %v1702 = vunpack.c.l.b16 %v1674
        %v1703 = vpack.c.b16 %v1702, %v1701
        %v1706 = vsel %vm1269, %v1691, 0
        %v1709 = vsel %vm1269, %v1692, 0
        %v1712 = vsel %vm1269, %v1693, 0
        %v1715 = vsel %vm1269, %v1694, 0
        %v1718 = vsel %vm1269, %v1695, 0
        %v1721 = vsel %vm1269, %v1696, 0
        %v1724 = vsel %vm1269, %v1697, 0
        %v1727 = vsel %vm1269, %v1698, 0
        %1729 = vmatprep.subr.bf16.mxu0 0
        %1730 = vmatpush1.bf16.msra.mxu0 0
        %1731 = vmatprep.subr.bf16.mxu0 0
        %1732 = vmatpush1.bf16.msra.mxu0 0
        %1733 = vmatprep.subr.bf16.mxu0 0
        %1734 = vmatpush1.bf16.msra.mxu0 0
        %1735 = vmatprep.subr.bf16.mxu0 0
        %1736 = vmatpush1.bf16.msra.mxu0 0
        %1737 = vmatprep.subr.bf16.mxu0 0
        %1738 = vmatpush1.bf16.msra.mxu0 0
        %1739 = vmatprep.subr.bf16.mxu0 0
        %1740 = vmatpush1.bf16.msra.mxu0 0
        %1741 = vmatprep.subr.bf16.mxu0 0
        %1742 = vmatpush1.bf16.msra.mxu0 0
        %1743 = vmatprep.subr.bf16.mxu0 0
        %1744 = vmatpush1.bf16.msra.mxu0 %v1703
        %1745 = vmatprep.subr.bf16.mxu0 0
        %1746 = vmatpush2.bf16.msra.mxu0 0
        %1747 = vmatprep.subr.bf16.mxu0 0
        %1748 = vmatpush2.bf16.msra.mxu0 0
        %1749 = vmatprep.subr.bf16.mxu0 0
        %1750 = vmatpush2.bf16.msra.mxu0 0
        %1751 = vmatprep.subr.bf16.mxu0 0
        %1752 = vmatpush2.bf16.msra.mxu0 0
        %1753 = vmatprep.subr.bf16.mxu0 0
        %1754 = vmatpush2.bf16.msra.mxu0 0
        %1755 = vmatprep.subr.bf16.mxu0 0
        %1756 = vmatpush2.bf16.msra.mxu0 0
        %1757 = vmatprep.subr.bf16.mxu0 0
        %1758 = vmatpush2.bf16.msra.mxu0 0
        %1759 = vmatprep.subr.bf16.mxu0 0
        %1760 = vmatpush2.bf16.msra.mxu0 0
        %1761 = vmatprep.mubr.bf16.mxu0 0
        %1762 = vmatmul.mubr.bf16.gmra.mxu0 %v1706
        %v1763 = vpop.f32.mrf.mxu0
        %v1764 = vadd.f32 0.0, %v1763
        %v1765 = vpop.f32.mrf.mxu0
        %v1766 = vpop.f32.mrf.mxu0
        %v1767 = vadd.f32 0.0, %v1766
        %v1768 = vpop.f32.mrf.mxu0
        %1769 = vmatprep.mubr.bf16.mxu0 0
        %1770 = vmatmul.mubr.bf16.gmra.mxu0 %v1709
        %v1771 = vpop.f32.mrf.mxu0
        %v1772 = vadd.f32 0.0, %v1771
        %v1773 = vpop.f32.mrf.mxu0
        %v1774 = vpop.f32.mrf.mxu0
        %v1775 = vadd.f32 0.0, %v1774
        %v1776 = vpop.f32.mrf.mxu0
        %1777 = vmatprep.mubr.bf16.mxu0 0
        %1778 = vmatmul.mubr.bf16.gmra.mxu0 %v1712
        %v1779 = vpop.f32.mrf.mxu0
        %v1780 = vadd.f32 0.0, %v1779
        %v1781 = vpop.f32.mrf.mxu0
        %v1782 = vpop.f32.mrf.mxu0
        %v1783 = vadd.f32 0.0, %v1782
        %v1784 = vpop.f32.mrf.mxu0
        %1785 = vmatprep.mubr.bf16.mxu0 0
        %1786 = vmatmul.mubr.bf16.gmra.mxu0 %v1715
        %v1787 = vpop.f32.mrf.mxu0
        %v1788 = vadd.f32 0.0, %v1787
        %v1789 = vpop.f32.mrf.mxu0
        %v1790 = vpop.f32.mrf.mxu0
        %v1791 = vadd.f32 0.0, %v1790
        %v1792 = vpop.f32.mrf.mxu0
        %1793 = vmatprep.mubr.bf16.mxu0 0
        %1794 = vmatmul.mubr.bf16.gmra.mxu0 %v1718
        %v1795 = vpop.f32.mrf.mxu0
        %v1796 = vadd.f32 0.0, %v1795
        %v1797 = vpop.f32.mrf.mxu0
        %v1798 = vpop.f32.mrf.mxu0
        %v1799 = vadd.f32 0.0, %v1798
        %v1800 = vpop.f32.mrf.mxu0
        %1801 = vmatprep.mubr.bf16.mxu0 0
        %1802 = vmatmul.mubr.bf16.gmra.mxu0 %v1721
        %v1803 = vpop.f32.mrf.mxu0
        %v1804 = vadd.f32 0.0, %v1803
        %v1805 = vpop.f32.mrf.mxu0
        %v1806 = vpop.f32.mrf.mxu0
        %v1807 = vadd.f32 0.0, %v1806
        %v1808 = vpop.f32.mrf.mxu0
        %1809 = vmatprep.mubr.bf16.mxu0 0
        %1810 = vmatmul.mubr.bf16.gmra.mxu0 %v1724
        %v1811 = vpop.f32.mrf.mxu0
        %v1812 = vadd.f32 0.0, %v1811
        %v1813 = vpop.f32.mrf.mxu0
        %v1814 = vpop.f32.mrf.mxu0
        %v1815 = vadd.f32 0.0, %v1814
        %v1816 = vpop.f32.mrf.mxu0
        %1817 = vmatprep.mubr.bf16.mxu0 0
        %1818 = vmatmul.mubr.bf16.gmra.mxu0 %v1727
        %v1819 = vpop.f32.mrf.mxu0
        %v1820 = vadd.f32 0.0, %v1819
        %v1821 = vpop.f32.mrf.mxu0
        %v1822 = vpop.f32.mrf.mxu0
        %v1823 = vadd.f32 0.0, %v1822
        %v1824 = vpop.f32.mrf.mxu0
        %1825 = vdwg.mxu0
        %v1826 = vadd.f32 %v1496, %v1764
        %v1827 = vadd.f32 %v1499, %v1767
        %v1828 = vadd.f32 %v1504, %v1772
        %v1829 = vadd.f32 %v1507, %v1775
        %v1830 = vadd.f32 %v1512, %v1780
        %v1831 = vadd.f32 %v1515, %v1783
        %v1832 = vadd.f32 %v1520, %v1788
        %v1833 = vadd.f32 %v1523, %v1791
        %v1834 = vadd.f32 %v1528, %v1796
        %v1835 = vadd.f32 %v1531, %v1799
        %v1836 = vadd.f32 %v1536, %v1804
        %v1837 = vadd.f32 %v1539, %v1807
        %v1838 = vadd.f32 %v1544, %v1812
        %v1839 = vadd.f32 %v1547, %v1815
        %v1840 = vadd.f32 %v1552, %v1820
        %v1841 = vadd.f32 %v1555, %v1823
        %v1842 = vld [vmem:[%s877] sm:$0xf]
        %v1843 = vld [vmem:[%s877 + $0x8] sm:$0xf]
        %v1844 = vld [vmem:[%s877 + $0x10] sm:$0xf]
        %v1845 = vld [vmem:[%s877 + $0x18] sm:$0xf]
        %v1846 = vld [vmem:[%s877 + $0x20] sm:$0xf]
        %v1847 = vld [vmem:[%s877 + $0x28] sm:$0xf]
        %v1848 = vld [vmem:[%s877 + $0x30] sm:$0xf]
        %v1849 = vld [vmem:[%s877 + $0x38] sm:$0xf]
        %v1850 = vld [vmem:[%s877 + $0x50] sm:$0xf]
        %v1851 = vld [vmem:[%s877 + $0x58] sm:$0xf]
        %v1852 = vld [vmem:[%s877 + $0x60] sm:$0xf]
        %v1853 = vld [vmem:[%s877 + $0x68] sm:$0xf]
        %v1854 = vld [vmem:[%s877 + $0x70] sm:$0xf]
        %v1855 = vld [vmem:[%s877 + $0x78] sm:$0xf]
        %v1856 = vld [vmem:[%s877 + $0x80] sm:$0xf]
        %v1857 = vld [vmem:[%s877 + $0x88] sm:$0xf]
        %v1858 = vld [vmem:[%s3 + $0x18] sm:$0xf]
        %v1859 = vld [vmem:[%s3 + $0x1c] sm:$0xf]
        %v1876 = vunpack.c.l.b16 %v1842
        %v1877 = vunpack.c.l.b16 %v1843
        %v1878 = vunpack.c.l.b16 %v1844
        %v1879 = vunpack.c.l.b16 %v1845
        %v1880 = vunpack.c.l.b16 %v1846
        %v1881 = vunpack.c.l.b16 %v1847
        %v1882 = vunpack.c.l.b16 %v1848
        %v1883 = vunpack.c.l.b16 %v1849
        %v1884 = vunpack.c.l.b16 %v1850
        %v1885 = vunpack.c.l.b16 %v1851
        %v1886 = vunpack.c.l.b16 %v1852
        %v1887 = vunpack.c.l.b16 %v1853
        %v1888 = vunpack.c.l.b16 %v1854
        %v1889 = vunpack.c.l.b16 %v1855
        %v1890 = vunpack.c.l.b16 %v1856
        %v1891 = vunpack.c.l.b16 %v1857
        %v1892 = vpack.c.b16 %v1877, %v1876
        %v1893 = vpack.c.b16 %v1879, %v1878
        %v1894 = vpack.c.b16 %v1881, %v1880
        %v1895 = vpack.c.b16 %v1883, %v1882
        %v1896 = vpack.c.b16 %v1885, %v1884
        %v1897 = vpack.c.b16 %v1887, %v1886
        %v1898 = vpack.c.b16 %v1889, %v1888
        %v1899 = vpack.c.b16 %v1891, %v1890
        %v1902 = vunpack.c.l.b16 %v1858
        %v1903 = vunpack.c.l.b16 %v1859
        %v1904 = vpack.c.b16 %v1903, %v1902
        %v1907 = vsel %vm1269, %v1892, 0
        %v1910 = vsel %vm1269, %v1893, 0
        %v1913 = vsel %vm1269, %v1894, 0
        %v1916 = vsel %vm1269, %v1895, 0
        %v1919 = vsel %vm1269, %v1896, 0
        %v1922 = vsel %vm1269, %v1897, 0
        %v1925 = vsel %vm1269, %v1898, 0
        %v1928 = vsel %vm1269, %v1899, 0
        %1930 = vmatprep.subr.bf16.mxu0 0
        %1931 = vmatpush1.bf16.msra.mxu0 0
        %1932 = vmatprep.subr.bf16.mxu0 0
        %1933 = vmatpush1.bf16.msra.mxu0 0
        %1934 = vmatprep.subr.bf16.mxu0 0
        %1935 = vmatpush1.bf16.msra.mxu0 0
        %1936 = vmatprep.subr.bf16.mxu0 0
        %1937 = vmatpush1.bf16.msra.mxu0 0
        %1938 = vmatprep.subr.bf16.mxu0 0
        %1939 = vmatpush1.bf16.msra.mxu0 0
        %1940 = vmatprep.subr.bf16.mxu0 0
        %1941 = vmatpush1.bf16.msra.mxu0 0
        %1942 = vmatprep.subr.bf16.mxu0 0
        %1943 = vmatpush1.bf16.msra.mxu0 0
        %1944 = vmatprep.subr.bf16.mxu0 0
        %1945 = vmatpush1.bf16.msra.mxu0 %v1904
        %1946 = vmatprep.subr.bf16.mxu0 0
        %1947 = vmatpush2.bf16.msra.mxu0 0
        %1948 = vmatprep.subr.bf16.mxu0 0
        %1949 = vmatpush2.bf16.msra.mxu0 0
        %1950 = vmatprep.subr.bf16.mxu0 0
        %1951 = vmatpush2.bf16.msra.mxu0 0
        %1952 = vmatprep.subr.bf16.mxu0 0
        %1953 = vmatpush2.bf16.msra.mxu0 0
        %1954 = vmatprep.subr.bf16.mxu0 0
        %1955 = vmatpush2.bf16.msra.mxu0 0
        %1956 = vmatprep.subr.bf16.mxu0 0
        %1957 = vmatpush2.bf16.msra.mxu0 0
        %1958 = vmatprep.subr.bf16.mxu0 0
        %1959 = vmatpush2.bf16.msra.mxu0 0
        %1960 = vmatprep.subr.bf16.mxu0 0
        %1961 = vmatpush2.bf16.msra.mxu0 0
        %1962 = vmatprep.mubr.bf16.mxu0 0
        %1963 = vmatmul.mubr.bf16.gmra.mxu0 %v1907
        %v1964 = vpop.f32.mrf.mxu0
        %v1965 = vadd.f32 0.0, %v1964
        %v1966 = vpop.f32.mrf.mxu0
        %v1967 = vpop.f32.mrf.mxu0
        %v1968 = vadd.f32 0.0, %v1967
        %v1969 = vpop.f32.mrf.mxu0
        %1970 = vmatprep.mubr.bf16.mxu0 0
        %1971 = vmatmul.mubr.bf16.gmra.mxu0 %v1910
        %v1972 = vpop.f32.mrf.mxu0
        %v1973 = vadd.f32 0.0, %v1972
        %v1974 = vpop.f32.mrf.mxu0
        %v1975 = vpop.f32.mrf.mxu0
        %v1976 = vadd.f32 0.0, %v1975
        %v1977 = vpop.f32.mrf.mxu0
        %1978 = vmatprep.mubr.bf16.mxu0 0
        %1979 = vmatmul.mubr.bf16.gmra.mxu0 %v1913
        %v1980 = vpop.f32.mrf.mxu0
        %v1981 = vadd.f32 0.0, %v1980
        %v1982 = vpop.f32.mrf.mxu0
        %v1983 = vpop.f32.mrf.mxu0
        %v1984 = vadd.f32 0.0, %v1983
        %v1985 = vpop.f32.mrf.mxu0
        %1986 = vmatprep.mubr.bf16.mxu0 0
        %1987 = vmatmul.mubr.bf16.gmra.mxu0 %v1916
        %v1988 = vpop.f32.mrf.mxu0
        %v1989 = vadd.f32 0.0, %v1988
        %v1990 = vpop.f32.mrf.mxu0
        %v1991 = vpop.f32.mrf.mxu0
        %v1992 = vadd.f32 0.0, %v1991
        %v1993 = vpop.f32.mrf.mxu0
        %1994 = vmatprep.mubr.bf16.mxu0 0
        %1995 = vmatmul.mubr.bf16.gmra.mxu0 %v1919
        %v1996 = vpop.f32.mrf.mxu0
        %v1997 = vadd.f32 0.0, %v1996
        %v1998 = vpop.f32.mrf.mxu0
        %v1999 = vpop.f32.mrf.mxu0
        %v2000 = vadd.f32 0.0, %v1999
        %v2001 = vpop.f32.mrf.mxu0
        %2002 = vmatprep.mubr.bf16.mxu0 0
        %2003 = vmatmul.mubr.bf16.gmra.mxu0 %v1922
        %v2004 = vpop.f32.mrf.mxu0
        %v2005 = vadd.f32 0.0, %v2004
        %v2006 = vpop.f32.mrf.mxu0
        %v2007 = vpop.f32.mrf.mxu0
        %v2008 = vadd.f32 0.0, %v2007
        %v2009 = vpop.f32.mrf.mxu0
        %2010 = vmatprep.mubr.bf16.mxu0 0
        %2011 = vmatmul.mubr.bf16.gmra.mxu0 %v1925
        %v2012 = vpop.f32.mrf.mxu0
        %v2013 = vadd.f32 0.0, %v2012
        %v2014 = vpop.f32.mrf.mxu0
        %v2015 = vpop.f32.mrf.mxu0
        %v2016 = vadd.f32 0.0, %v2015
        %v2017 = vpop.f32.mrf.mxu0
        %2018 = vmatprep.mubr.bf16.mxu0 0
        %2019 = vmatmul.mubr.bf16.gmra.mxu0 %v1928
        %v2020 = vpop.f32.mrf.mxu0
        %v2021 = vadd.f32 0.0, %v2020
        %v2022 = vpop.f32.mrf.mxu0
        %v2023 = vpop.f32.mrf.mxu0
        %v2024 = vadd.f32 0.0, %v2023
        %v2025 = vpop.f32.mrf.mxu0
        %2026 = vdwg.mxu0
        %v2027 = vadd.f32 %v1826, %v1965
        %v2028 = vadd.f32 %v1827, %v1968
        %v2029 = vadd.f32 %v1828, %v1973
        %v2030 = vadd.f32 %v1829, %v1976
        %v2031 = vadd.f32 %v1830, %v1981
        %v2032 = vadd.f32 %v1831, %v1984
        %v2033 = vadd.f32 %v1832, %v1989
        %v2034 = vadd.f32 %v1833, %v1992
        %v2035 = vadd.f32 %v1834, %v1997
        %v2036 = vadd.f32 %v1835, %v2000
        %v2037 = vadd.f32 %v1836, %v2005
        %v2038 = vadd.f32 %v1837, %v2008
        %v2039 = vadd.f32 %v1838, %v2013
        %v2040 = vadd.f32 %v1839, %v2016
        %v2041 = vadd.f32 %v1840, %v2021
        %v2042 = vadd.f32 %v1841, %v2024
        %v2043 = vld [vmem:[%s877] sm:$0xf]
        %v2044 = vld [vmem:[%s877 + $0x4] sm:$0x1]
        %v2045 = vld [vmem:[%s877 + $0x8] sm:$0xf]
        %v2046 = vld [vmem:[%s877 + $0xc] sm:$0x1]
        %v2047 = vld [vmem:[%s877 + $0x10] sm:$0xf]
        %v2048 = vld [vmem:[%s877 + $0x14] sm:$0x1]
        %v2049 = vld [vmem:[%s877 + $0x18] sm:$0xf]
        %v2050 = vld [vmem:[%s877 + $0x1c] sm:$0x1]
        %v2051 = vld [vmem:[%s877 + $0x20] sm:$0xf]
        %v2052 = vld [vmem:[%s877 + $0x24] sm:$0x1]
        %v2053 = vld [vmem:[%s877 + $0x28] sm:$0xf]
        %v2054 = vld [vmem:[%s877 + $0x2c] sm:$0x1]
        %v2055 = vld [vmem:[%s877 + $0x30] sm:$0xf]
        %v2056 = vld [vmem:[%s877 + $0x34] sm:$0x1]
        %v2057 = vld [vmem:[%s877 + $0x38] sm:$0xf]
        %v2058 = vld [vmem:[%s877 + $0x3c] sm:$0x1]
        %v2059 = vld [vmem:[%s877 + $0x50] sm:$0xf]
        %v2060 = vld [vmem:[%s877 + $0x54] sm:$0x1]
        %v2061 = vld [vmem:[%s877 + $0x58] sm:$0xf]
        %v2062 = vld [vmem:[%s877 + $0x5c] sm:$0x1]
        %v2063 = vld [vmem:[%s877 + $0x60] sm:$0xf]
        %v2064 = vld [vmem:[%s877 + $0x64] sm:$0x1]
        %v2065 = vld [vmem:[%s877 + $0x68] sm:$0xf]
        %v2066 = vld [vmem:[%s877 + $0x6c] sm:$0x1]
        %v2067 = vld [vmem:[%s877 + $0x70] sm:$0xf]
        %v2068 = vld [vmem:[%s877 + $0x74] sm:$0x1]
        %v2069 = vld [vmem:[%s877 + $0x78] sm:$0xf]
        %v2070 = vld [vmem:[%s877 + $0x7c] sm:$0x1]
        %v2071 = vld [vmem:[%s877 + $0x80] sm:$0xf]
        %v2072 = vld [vmem:[%s877 + $0x84] sm:$0x1]
        %v2073 = vld [vmem:[%s877 + $0x88] sm:$0xf]
        %v2074 = vld [vmem:[%s877 + $0x8c] sm:$0x1]
        %v2076 = vshrl.u32 %v2043, 16
        %v2078 = vrot.slane %v2076, 4
        %v2079 = vshll.u32 %v2043, 16
        %v2081 = vrot.slane %v2079, 5
        %v2082 = vor.u32 %v2078, %v2081
        %v2083 = vrot.slane %v2082, 4
        %v2085 = vshll.u32 %v2044, 16
        %v2087 = vrot.slane %v2085, 5
        %v2088 = vsel %vm1012, %v2083, %v2087
        %v2090 = vshrl.u32 %v2045, 16
        %v2092 = vrot.slane %v2090, 4
        %v2093 = vshll.u32 %v2045, 16
        %v2095 = vrot.slane %v2093, 5
        %v2096 = vor.u32 %v2092, %v2095
        %v2097 = vrot.slane %v2096, 4
        %v2099 = vshll.u32 %v2046, 16
        %v2101 = vrot.slane %v2099, 5
        %v2102 = vsel %vm1012, %v2097, %v2101
        %v2104 = vshrl.u32 %v2047, 16
        %v2106 = vrot.slane %v2104, 4
        %v2107 = vshll.u32 %v2047, 16
        %v2109 = vrot.slane %v2107, 5
        %v2110 = vor.u32 %v2106, %v2109
        %v2111 = vrot.slane %v2110, 4
        %v2113 = vshll.u32 %v2048, 16
        %v2115 = vrot.slane %v2113, 5
        %v2116 = vsel %vm1012, %v2111, %v2115
        %v2118 = vshrl.u32 %v2049, 16
        %v2120 = vrot.slane %v2118, 4
        %v2121 = vshll.u32 %v2049, 16
        %v2123 = vrot.slane %v2121, 5
        %v2124 = vor.u32 %v2120, %v2123
        %v2125 = vrot.slane %v2124, 4
        %v2127 = vshll.u32 %v2050, 16
        %v2129 = vrot.slane %v2127, 5
        %v2130 = vsel %vm1012, %v2125, %v2129
        %v2132 = vshrl.u32 %v2051, 16
        %v2134 = vrot.slane %v2132, 4
        %v2135 = vshll.u32 %v2051, 16
        %v2137 = vrot.slane %v2135, 5
        %v2138 = vor.u32 %v2134, %v2137
        %v2139 = vrot.slane %v2138, 4
        %v2141 = vshll.u32 %v2052, 16
        %v2143 = vrot.slane %v2141, 5
        %v2144 = vsel %vm1012, %v2139, %v2143
        %v2146 = vshrl.u32 %v2053, 16
        %v2148 = vrot.slane %v2146, 4
        %v2149 = vshll.u32 %v2053, 16
        %v2151 = vrot.slane %v2149, 5
        %v2152 = vor.u32 %v2148, %v2151
        %v2153 = vrot.slane %v2152, 4
        %v2155 = vshll.u32 %v2054, 16
        %v2157 = vrot.slane %v2155, 5
        %v2158 = vsel %vm1012, %v2153, %v2157
        %v2160 = vshrl.u32 %v2055, 16
        %v2162 = vrot.slane %v2160, 4
        %v2163 = vshll.u32 %v2055, 16
        %v2165 = vrot.slane %v2163, 5
        %v2166 = vor.u32 %v2162, %v2165
        %v2167 = vrot.slane %v2166, 4
        %v2169 = vshll.u32 %v2056, 16
        %v2171 = vrot.slane %v2169, 5
        %v2172 = vsel %vm1012, %v2167, %v2171
        %v2174 = vshrl.u32 %v2057, 16
        %v2176 = vrot.slane %v2174, 4
        %v2177 = vshll.u32 %v2057, 16
        %v2179 = vrot.slane %v2177, 5
        %v2180 = vor.u32 %v2176, %v2179
        %v2181 = vrot.slane %v2180, 4
        %v2183 = vshll.u32 %v2058, 16
        %v2185 = vrot.slane %v2183, 5
        %v2186 = vsel %vm1012, %v2181, %v2185
        %v2188 = vshrl.u32 %v2059, 16
        %v2190 = vrot.slane %v2188, 4
        %v2191 = vshll.u32 %v2059, 16
        %v2193 = vrot.slane %v2191, 5
        %v2194 = vor.u32 %v2190, %v2193
        %v2195 = vrot.slane %v2194, 4
        %v2197 = vshll.u32 %v2060, 16
        %v2199 = vrot.slane %v2197, 5
        %v2200 = vsel %vm1012, %v2195, %v2199
        %v2202 = vshrl.u32 %v2061, 16
        %v2204 = vrot.slane %v2202, 4
        %v2205 = vshll.u32 %v2061, 16
        %v2207 = vrot.slane %v2205, 5
        %v2208 = vor.u32 %v2204, %v2207
        %v2209 = vrot.slane %v2208, 4
        %v2211 = vshll.u32 %v2062, 16
        %v2213 = vrot.slane %v2211, 5
        %v2214 = vsel %vm1012, %v2209, %v2213
        %v2216 = vshrl.u32 %v2063, 16
        %v2218 = vrot.slane %v2216, 4
        %v2219 = vshll.u32 %v2063, 16
        %v2221 = vrot.slane %v2219, 5
        %v2222 = vor.u32 %v2218, %v2221
        %v2223 = vrot.slane %v2222, 4
        %v2225 = vshll.u32 %v2064, 16
        %v2227 = vrot.slane %v2225, 5
        %v2228 = vsel %vm1012, %v2223, %v2227
        %v2230 = vshrl.u32 %v2065, 16
        %v2232 = vrot.slane %v2230, 4
        %v2233 = vshll.u32 %v2065, 16
        %v2235 = vrot.slane %v2233, 5
        %v2236 = vor.u32 %v2232, %v2235
        %v2237 = vrot.slane %v2236, 4
        %v2239 = vshll.u32 %v2066, 16
        %v2241 = vrot.slane %v2239, 5
        %v2242 = vsel %vm1012, %v2237, %v2241
        %v2244 = vshrl.u32 %v2067, 16
        %v2246 = vrot.slane %v2244, 4
        %v2247 = vshll.u32 %v2067, 16
        %v2249 = vrot.slane %v2247, 5
        %v2250 = vor.u32 %v2246, %v2249
        %v2251 = vrot.slane %v2250, 4
        %v2253 = vshll.u32 %v2068, 16
        %v2255 = vrot.slane %v2253, 5
        %v2256 = vsel %vm1012, %v2251, %v2255
        %v2258 = vshrl.u32 %v2069, 16
        %v2260 = vrot.slane %v2258, 4
        %v2261 = vshll.u32 %v2069, 16
        %v2263 = vrot.slane %v2261, 5
        %v2264 = vor.u32 %v2260, %v2263
        %v2265 = vrot.slane %v2264, 4
        %v2267 = vshll.u32 %v2070, 16
        %v2269 = vrot.slane %v2267, 5
        %v2270 = vsel %vm1012, %v2265, %v2269
        %v2272 = vshrl.u32 %v2071, 16
        %v2274 = vrot.slane %v2272, 4
        %v2275 = vshll.u32 %v2071, 16
        %v2277 = vrot.slane %v2275, 5
        %v2278 = vor.u32 %v2274, %v2277
        %v2279 = vrot.slane %v2278, 4
        %v2281 = vshll.u32 %v2072, 16
        %v2283 = vrot.slane %v2281, 5
        %v2284 = vsel %vm1012, %v2279, %v2283
        %v2286 = vshrl.u32 %v2073, 16
        %v2288 = vrot.slane %v2286, 4
        %v2289 = vshll.u32 %v2073, 16
        %v2291 = vrot.slane %v2289, 5
        %v2292 = vor.u32 %v2288, %v2291
        %v2293 = vrot.slane %v2292, 4
        %v2295 = vshll.u32 %v2074, 16
        %v2297 = vrot.slane %v2295, 5
        %v2298 = vsel %vm1012, %v2293, %v2297
        %v2299 = vld [vmem:[%s3 + $0x20] sm:$0xf]
        %v2300 = vld [vmem:[%s3 + $0x24] sm:$0xf]
        %v2301 = vunpack.c.l.b16 %v2088
        %v2302 = vunpack.c.l.b16 %v2102
        %v2303 = vunpack.c.l.b16 %v2116
        %v2304 = vunpack.c.l.b16 %v2130
        %v2305 = vunpack.c.l.b16 %v2144
        %v2306 = vunpack.c.l.b16 %v2158
        %v2307 = vunpack.c.l.b16 %v2172
        %v2308 = vunpack.c.l.b16 %v2186
        %v2309 = vunpack.c.l.b16 %v2200
        %v2310 = vunpack.c.l.b16 %v2214
        %v2311 = vunpack.c.l.b16 %v2228
        %v2312 = vunpack.c.l.b16 %v2242
        %v2313 = vunpack.c.l.b16 %v2256
        %v2314 = vunpack.c.l.b16 %v2270
        %v2315 = vunpack.c.l.b16 %v2284
        %v2316 = vunpack.c.l.b16 %v2298
        %v2317 = vpack.c.b16 %v2302, %v2301
        %v2318 = vpack.c.b16 %v2304, %v2303
        %v2319 = vpack.c.b16 %v2306, %v2305
        %v2320 = vpack.c.b16 %v2308, %v2307
        %v2321 = vpack.c.b16 %v2310, %v2309
        %v2322 = vpack.c.b16 %v2312, %v2311
        %v2323 = vpack.c.b16 %v2314, %v2313
        %v2324 = vpack.c.b16 %v2316, %v2315
        %v2327 = vunpack.c.l.b16 %v2299
        %v2328 = vunpack.c.l.b16 %v2300
        %v2329 = vpack.c.b16 %v2328, %v2327
        %v2332 = vsel %vm1269, %v2317, 0
        %v2335 = vsel %vm1269, %v2318, 0
        %v2338 = vsel %vm1269, %v2319, 0
        %v2341 = vsel %vm1269, %v2320, 0
        %v2344 = vsel %vm1269, %v2321, 0
        %v2347 = vsel %vm1269, %v2322, 0
        %v2350 = vsel %vm1269, %v2323, 0
        %v2353 = vsel %vm1269, %v2324, 0
        %2355 = vmatprep.subr.bf16.mxu0 0
        %2356 = vmatpush1.bf16.msra.mxu0 0
        %2357 = vmatprep.subr.bf16.mxu0 0
        %2358 = vmatpush1.bf16.msra.mxu0 0
        %2359 = vmatprep.subr.bf16.mxu0 0
        %2360 = vmatpush1.bf16.msra.mxu0 0
        %2361 = vmatprep.subr.bf16.mxu0 0
        %2362 = vmatpush1.bf16.msra.mxu0 0
        %2363 = vmatprep.subr.bf16.mxu0 0
        %2364 = vmatpush1.bf16.msra.mxu0 0
        %2365 = vmatprep.subr.bf16.mxu0 0
        %2366 = vmatpush1.bf16.msra.mxu0 0
        %2367 = vmatprep.subr.bf16.mxu0 0
        %2368 = vmatpush1.bf16.msra.mxu0 0
        %2369 = vmatprep.subr.bf16.mxu0 0
        %2370 = vmatpush1.bf16.msra.mxu0 %v2329
        %2371 = vmatprep.subr.bf16.mxu0 0
        %2372 = vmatpush2.bf16.msra.mxu0 0
        %2373 = vmatprep.subr.bf16.mxu0 0
        %2374 = vmatpush2.bf16.msra.mxu0 0
        %2375 = vmatprep.subr.bf16.mxu0 0
        %2376 = vmatpush2.bf16.msra.mxu0 0
        %2377 = vmatprep.subr.bf16.mxu0 0
        %2378 = vmatpush2.bf16.msra.mxu0 0
        %2379 = vmatprep.subr.bf16.mxu0 0
        %2380 = vmatpush2.bf16.msra.mxu0 0
        %2381 = vmatprep.subr.bf16.mxu0 0
        %2382 = vmatpush2.bf16.msra.mxu0 0
        %2383 = vmatprep.subr.bf16.mxu0 0
        %2384 = vmatpush2.bf16.msra.mxu0 0
        %2385 = vmatprep.subr.bf16.mxu0 0
        %2386 = vmatpush2.bf16.msra.mxu0 0
        %2387 = vmatprep.mubr.bf16.mxu0 0
        %2388 = vmatmul.mubr.bf16.gmra.mxu0 %v2332
        %v2389 = vpop.f32.mrf.mxu0
        %v2390 = vadd.f32 0.0, %v2389
        %v2391 = vpop.f32.mrf.mxu0
        %v2392 = vpop.f32.mrf.mxu0
        %v2393 = vadd.f32 0.0, %v2392
        %v2394 = vpop.f32.mrf.mxu0
        %2395 = vmatprep.mubr.bf16.mxu0 0
        %2396 = vmatmul.mubr.bf16.gmra.mxu0 %v2335
        %v2397 = vpop.f32.mrf.mxu0
        %v2398 = vadd.f32 0.0, %v2397
        %v2399 = vpop.f32.mrf.mxu0
        %v2400 = vpop.f32.mrf.mxu0
        %v2401 = vadd.f32 0.0, %v2400
        %v2402 = vpop.f32.mrf.mxu0
        %2403 = vmatprep.mubr.bf16.mxu0 0
        %2404 = vmatmul.mubr.bf16.gmra.mxu0 %v2338
        %v2405 = vpop.f32.mrf.mxu0
        %v2406 = vadd.f32 0.0, %v2405
        %v2407 = vpop.f32.mrf.mxu0
        %v2408 = vpop.f32.mrf.mxu0
        %v2409 = vadd.f32 0.0, %v2408
        %v2410 = vpop.f32.mrf.mxu0
        %2411 = vmatprep.mubr.bf16.mxu0 0
        %2412 = vmatmul.mubr.bf16.gmra.mxu0 %v2341
        %v2413 = vpop.f32.mrf.mxu0
        %v2414 = vadd.f32 0.0, %v2413
        %v2415 = vpop.f32.mrf.mxu0
        %v2416 = vpop.f32.mrf.mxu0
        %v2417 = vadd.f32 0.0, %v2416
        %v2418 = vpop.f32.mrf.mxu0
        %2419 = vmatprep.mubr.bf16.mxu0 0
        %2420 = vmatmul.mubr.bf16.gmra.mxu0 %v2344
        %v2421 = vpop.f32.mrf.mxu0
        %v2422 = vadd.f32 0.0, %v2421
        %v2423 = vpop.f32.mrf.mxu0
        %v2424 = vpop.f32.mrf.mxu0
        %v2425 = vadd.f32 0.0, %v2424
        %v2426 = vpop.f32.mrf.mxu0
        %2427 = vmatprep.mubr.bf16.mxu0 0
        %2428 = vmatmul.mubr.bf16.gmra.mxu0 %v2347
        %v2429 = vpop.f32.mrf.mxu0
        %v2430 = vadd.f32 0.0, %v2429
        %v2431 = vpop.f32.mrf.mxu0
        %v2432 = vpop.f32.mrf.mxu0
        %v2433 = vadd.f32 0.0, %v2432
        %v2434 = vpop.f32.mrf.mxu0
        %2435 = vmatprep.mubr.bf16.mxu0 0
        %2436 = vmatmul.mubr.bf16.gmra.mxu0 %v2350
        %v2437 = vpop.f32.mrf.mxu0
        %v2438 = vadd.f32 0.0, %v2437
        %v2439 = vpop.f32.mrf.mxu0
        %v2440 = vpop.f32.mrf.mxu0
        %v2441 = vadd.f32 0.0, %v2440
        %v2442 = vpop.f32.mrf.mxu0
        %2443 = vmatprep.mubr.bf16.mxu0 0
        %2444 = vmatmul.mubr.bf16.gmra.mxu0 %v2353
        %v2445 = vpop.f32.mrf.mxu0
        %v2446 = vadd.f32 0.0, %v2445
        %v2447 = vpop.f32.mrf.mxu0
        %v2448 = vpop.f32.mrf.mxu0
        %v2449 = vadd.f32 0.0, %v2448
        %v2450 = vpop.f32.mrf.mxu0
        %2451 = vdwg.mxu0
        %v2452 = vadd.f32 %v2027, %v2390
        %v2453 = vadd.f32 %v2028, %v2393
        %v2454 = vadd.f32 %v2029, %v2398
        %v2455 = vadd.f32 %v2030, %v2401
        %v2456 = vadd.f32 %v2031, %v2406
        %v2457 = vadd.f32 %v2032, %v2409
        %v2458 = vadd.f32 %v2033, %v2414
        %v2459 = vadd.f32 %v2034, %v2417
        %v2460 = vadd.f32 %v2035, %v2422
        %v2461 = vadd.f32 %v2036, %v2425
        %v2462 = vadd.f32 %v2037, %v2430
        %v2463 = vadd.f32 %v2038, %v2433
        %v2464 = vadd.f32 %v2039, %v2438
        %v2465 = vadd.f32 %v2040, %v2441
        %v2466 = vadd.f32 %v2041, %v2446
        %v2467 = vadd.f32 %v2042, %v2449
        %v2468 = vld [vmem:[%s877] sm:$0xe]
        %v2469 = vld [vmem:[%s877 + $0x8] sm:$0xe]
        %v2470 = vld [vmem:[%s877 + $0x10] sm:$0xe]
        %v2471 = vld [vmem:[%s877 + $0x18] sm:$0xe]
        %v2472 = vld [vmem:[%s877 + $0x20] sm:$0xe]
        %v2473 = vld [vmem:[%s877 + $0x28] sm:$0xe]
        %v2474 = vld [vmem:[%s877 + $0x30] sm:$0xe]
        %v2475 = vld [vmem:[%s877 + $0x38] sm:$0xe]
        %v2476 = vld [vmem:[%s877 + $0x50] sm:$0xe]
        %v2477 = vld [vmem:[%s877 + $0x58] sm:$0xe]
        %v2478 = vld [vmem:[%s877 + $0x60] sm:$0xe]
        %v2479 = vld [vmem:[%s877 + $0x68] sm:$0xe]
        %v2480 = vld [vmem:[%s877 + $0x70] sm:$0xe]
        %v2481 = vld [vmem:[%s877 + $0x78] sm:$0xe]
        %v2482 = vld [vmem:[%s877 + $0x80] sm:$0xe]
        %v2483 = vld [vmem:[%s877 + $0x88] sm:$0xe]
        %v2516 = vrot.slane %v2468, 5
        %v2517 = vrot.slane %v2516, 4
        %v2518 = vrot.slane %v2044, 5
        %v2519 = vsel %vm1608, %v2517, %v2518
        %v2520 = vrot.slane %v2469, 5
        %v2521 = vrot.slane %v2520, 4
        %v2522 = vrot.slane %v2046, 5
        %v2523 = vsel %vm1608, %v2521, %v2522
        %v2524 = vrot.slane %v2470, 5
        %v2525 = vrot.slane %v2524, 4
        %v2526 = vrot.slane %v2048, 5
        %v2527 = vsel %vm1608, %v2525, %v2526
        %v2528 = vrot.slane %v2471, 5
        %v2529 = vrot.slane %v2528, 4
        %v2530 = vrot.slane %v2050, 5
        %v2531 = vsel %vm1608, %v2529, %v2530
        %v2532 = vrot.slane %v2472, 5
        %v2533 = vrot.slane %v2532, 4
        %v2534 = vrot.slane %v2052, 5
        %v2535 = vsel %vm1608, %v2533, %v2534
        %v2536 = vrot.slane %v2473, 5
        %v2537 = vrot.slane %v2536, 4
        %v2538 = vrot.slane %v2054, 5
        %v2539 = vsel %vm1608, %v2537, %v2538
        %v2540 = vrot.slane %v2474, 5
        %v2541 = vrot.slane %v2540, 4
        %v2542 = vrot.slane %v2056, 5
        %v2543 = vsel %vm1608, %v2541, %v2542
        %v2544 = vrot.slane %v2475, 5
        %v2545 = vrot.slane %v2544, 4
        %v2546 = vrot.slane %v2058, 5
        %v2547 = vsel %vm1608, %v2545, %v2546
        %v2548 = vrot.slane %v2476, 5
        %v2549 = vrot.slane %v2548, 4
        %v2550 = vrot.slane %v2060, 5
        %v2551 = vsel %vm1608, %v2549, %v2550
        %v2552 = vrot.slane %v2477, 5
        %v2553 = vrot.slane %v2552, 4
        %v2554 = vrot.slane %v2062, 5
        %v2555 = vsel %vm1608, %v2553, %v2554
        %v2556 = vrot.slane %v2478, 5
        %v2557 = vrot.slane %v2556, 4
        %v2558 = vrot.slane %v2064, 5
        %v2559 = vsel %vm1608, %v2557, %v2558
        %v2560 = vrot.slane %v2479, 5
        %v2561 = vrot.slane %v2560, 4
        %v2562 = vrot.slane %v2066, 5
        %v2563 = vsel %vm1608, %v2561, %v2562
        %v2564 = vrot.slane %v2480, 5
        %v2565 = vrot.slane %v2564, 4
        %v2566 = vrot.slane %v2068, 5
        %v2567 = vsel %vm1608, %v2565, %v2566
        %v2568 = vrot.slane %v2481, 5
        %v2569 = vrot.slane %v2568, 4
        %v2570 = vrot.slane %v2070, 5
        %v2571 = vsel %vm1608, %v2569, %v2570
        %v2572 = vrot.slane %v2482, 5
        %v2573 = vrot.slane %v2572, 4
        %v2574 = vrot.slane %v2072, 5
        %v2575 = vsel %vm1608, %v2573, %v2574
        %v2576 = vrot.slane %v2483, 5
        %v2577 = vrot.slane %v2576, 4
        %v2578 = vrot.slane %v2074, 5
        %v2579 = vsel %vm1608, %v2577, %v2578
        %v2580 = vld [vmem:[%s3 + $0x28] sm:$0xf]
        %v2581 = vld [vmem:[%s3 + $0x2c] sm:$0xf]
        %v2582 = vunpack.c.l.b16 %v2519
        %v2583 = vunpack.c.l.b16 %v2523
        %v2584 = vunpack.c.l.b16 %v2527
        %v2585 = vunpack.c.l.b16 %v2531
        %v2586 = vunpack.c.l.b16 %v2535
        %v2587 = vunpack.c.l.b16 %v2539
        %v2588 = vunpack.c.l.b16 %v2543
        %v2589 = vunpack.c.l.b16 %v2547
        %v2590 = vunpack.c.l.b16 %v2551
        %v2591 = vunpack.c.l.b16 %v2555
        %v2592 = vunpack.c.l.b16 %v2559
        %v2593 = vunpack.c.l.b16 %v2563
        %v2594 = vunpack.c.l.b16 %v2567
        %v2595 = vunpack.c.l.b16 %v2571
        %v2596 = vunpack.c.l.b16 %v2575
        %v2597 = vunpack.c.l.b16 %v2579
        %v2598 = vpack.c.b16 %v2583, %v2582
        %v2599 = vpack.c.b16 %v2585, %v2584
        %v2600 = vpack.c.b16 %v2587, %v2586
        %v2601 = vpack.c.b16 %v2589, %v2588
        %v2602 = vpack.c.b16 %v2591, %v2590
        %v2603 = vpack.c.b16 %v2593, %v2592
        %v2604 = vpack.c.b16 %v2595, %v2594
        %v2605 = vpack.c.b16 %v2597, %v2596
        %v2608 = vunpack.c.l.b16 %v2580
        %v2609 = vunpack.c.l.b16 %v2581
        %v2610 = vpack.c.b16 %v2609, %v2608
        %v2613 = vsel %vm1269, %v2598, 0
        %v2616 = vsel %vm1269, %v2599, 0
        %v2619 = vsel %vm1269, %v2600, 0
        %v2622 = vsel %vm1269, %v2601, 0
        %v2625 = vsel %vm1269, %v2602, 0
        %v2628 = vsel %vm1269, %v2603, 0
        %v2631 = vsel %vm1269, %v2604, 0
        %v2634 = vsel %vm1269, %v2605, 0
        %2636 = vmatprep.subr.bf16.mxu0 0
        %2637 = vmatpush1.bf16.msra.mxu0 0
        %2638 = vmatprep.subr.bf16.mxu0 0
        %2639 = vmatpush1.bf16.msra.mxu0 0
        %2640 = vmatprep.subr.bf16.mxu0 0
        %2641 = vmatpush1.bf16.msra.mxu0 0
        %2642 = vmatprep.subr.bf16.mxu0 0
        %2643 = vmatpush1.bf16.msra.mxu0 0
        %2644 = vmatprep.subr.bf16.mxu0 0
        %2645 = vmatpush1.bf16.msra.mxu0 0
        %2646 = vmatprep.subr.bf16.mxu0 0
        %2647 = vmatpush1.bf16.msra.mxu0 0
        %2648 = vmatprep.subr.bf16.mxu0 0
        %2649 = vmatpush1.bf16.msra.mxu0 0
        %2650 = vmatprep.subr.bf16.mxu0 0
        %2651 = vmatpush1.bf16.msra.mxu0 %v2610
        %2652 = vmatprep.subr.bf16.mxu0 0
        %2653 = vmatpush2.bf16.msra.mxu0 0
        %2654 = vmatprep.subr.bf16.mxu0 0
        %2655 = vmatpush2.bf16.msra.mxu0 0
        %2656 = vmatprep.subr.bf16.mxu0 0
        %2657 = vmatpush2.bf16.msra.mxu0 0
        %2658 = vmatprep.subr.bf16.mxu0 0
        %2659 = vmatpush2.bf16.msra.mxu0 0
        %2660 = vmatprep.subr.bf16.mxu0 0
        %2661 = vmatpush2.bf16.msra.mxu0 0
        %2662 = vmatprep.subr.bf16.mxu0 0
        %2663 = vmatpush2.bf16.msra.mxu0 0
        %2664 = vmatprep.subr.bf16.mxu0 0
        %2665 = vmatpush2.bf16.msra.mxu0 0
        %2666 = vmatprep.subr.bf16.mxu0 0
        %2667 = vmatpush2.bf16.msra.mxu0 0
        %2668 = vmatprep.mubr.bf16.mxu0 0
        %2669 = vmatmul.mubr.bf16.gmra.mxu0 %v2613
        %v2670 = vpop.f32.mrf.mxu0
        %v2671 = vadd.f32 0.0, %v2670
        %v2672 = vpop.f32.mrf.mxu0
        %v2673 = vpop.f32.mrf.mxu0
        %v2674 = vadd.f32 0.0, %v2673
        %v2675 = vpop.f32.mrf.mxu0
        %2676 = vmatprep.mubr.bf16.mxu0 0
        %2677 = vmatmul.mubr.bf16.gmra.mxu0 %v2616
        %v2678 = vpop.f32.mrf.mxu0
        %v2679 = vadd.f32 0.0, %v2678
        %v2680 = vpop.f32.mrf.mxu0
        %v2681 = vpop.f32.mrf.mxu0
        %v2682 = vadd.f32 0.0, %v2681
        %v2683 = vpop.f32.mrf.mxu0
        %2684 = vmatprep.mubr.bf16.mxu0 0
        %2685 = vmatmul.mubr.bf16.gmra.mxu0 %v2619
        %v2686 = vpop.f32.mrf.mxu0
        %v2687 = vadd.f32 0.0, %v2686
        %v2688 = vpop.f32.mrf.mxu0
        %v2689 = vpop.f32.mrf.mxu0
        %v2690 = vadd.f32 0.0, %v2689
        %v2691 = vpop.f32.mrf.mxu0
        %2692 = vmatprep.mubr.bf16.mxu0 0
        %2693 = vmatmul.mubr.bf16.gmra.mxu0 %v2622
        %v2694 = vpop.f32.mrf.mxu0
        %v2695 = vadd.f32 0.0, %v2694
        %v2696 = vpop.f32.mrf.mxu0
        %v2697 = vpop.f32.mrf.mxu0
        %v2698 = vadd.f32 0.0, %v2697
        %v2699 = vpop.f32.mrf.mxu0
        %2700 = vmatprep.mubr.bf16.mxu0 0
        %2701 = vmatmul.mubr.bf16.gmra.mxu0 %v2625
        %v2702 = vpop.f32.mrf.mxu0
        %v2703 = vadd.f32 0.0, %v2702
        %v2704 = vpop.f32.mrf.mxu0
        %v2705 = vpop.f32.mrf.mxu0
        %v2706 = vadd.f32 0.0, %v2705
        %v2707 = vpop.f32.mrf.mxu0
        %2708 = vmatprep.mubr.bf16.mxu0 0
        %2709 = vmatmul.mubr.bf16.gmra.mxu0 %v2628
        %v2710 = vpop.f32.mrf.mxu0
        %v2711 = vadd.f32 0.0, %v2710
        %v2712 = vpop.f32.mrf.mxu0
        %v2713 = vpop.f32.mrf.mxu0
        %v2714 = vadd.f32 0.0, %v2713
        %v2715 = vpop.f32.mrf.mxu0
        %2716 = vmatprep.mubr.bf16.mxu0 0
        %2717 = vmatmul.mubr.bf16.gmra.mxu0 %v2631
        %v2718 = vpop.f32.mrf.mxu0
        %v2719 = vadd.f32 0.0, %v2718
        %v2720 = vpop.f32.mrf.mxu0
        %v2721 = vpop.f32.mrf.mxu0
        %v2722 = vadd.f32 0.0, %v2721
        %v2723 = vpop.f32.mrf.mxu0
        %2724 = vmatprep.mubr.bf16.mxu0 0
        %2725 = vmatmul.mubr.bf16.gmra.mxu0 %v2634
        %v2726 = vpop.f32.mrf.mxu0
        %v2727 = vadd.f32 0.0, %v2726
        %v2728 = vpop.f32.mrf.mxu0
        %v2729 = vpop.f32.mrf.mxu0
        %v2730 = vadd.f32 0.0, %v2729
        %v2731 = vpop.f32.mrf.mxu0
        %2732 = vdwg.mxu0
        %v2733 = vadd.f32 %v2452, %v2671
        %v2734 = vadd.f32 %v2453, %v2674
        %v2735 = vadd.f32 %v2454, %v2679
        %v2736 = vadd.f32 %v2455, %v2682
        %v2737 = vadd.f32 %v2456, %v2687
        %v2738 = vadd.f32 %v2457, %v2690
        %v2739 = vadd.f32 %v2458, %v2695
        %v2740 = vadd.f32 %v2459, %v2698
        %v2741 = vadd.f32 %v2460, %v2703
        %v2742 = vadd.f32 %v2461, %v2706
        %v2743 = vadd.f32 %v2462, %v2711
        %v2744 = vadd.f32 %v2463, %v2714
        %v2745 = vadd.f32 %v2464, %v2719
        %v2746 = vadd.f32 %v2465, %v2722
        %v2747 = vadd.f32 %v2466, %v2727
        %v2748 = vadd.f32 %v2467, %v2730
        %s2749 = scalar_lea.vmem [#allocation2], 16
        %v2750 = vld [vmem:[%s2749] sm:$0xf]
        %v2751 = vld [vmem:[%s2749 + $0x8] sm:$0xf]
        %v2752 = vld [vmem:[%s2749 + $0x10] sm:$0xf]
        %v2753 = vld [vmem:[%s2749 + $0x18] sm:$0xf]
        %v2754 = vld [vmem:[%s2749 + $0x20] sm:$0xf]
        %v2755 = vld [vmem:[%s2749 + $0x28] sm:$0xf]
        %v2756 = vld [vmem:[%s2749 + $0x30] sm:$0xf]
        %v2757 = vld [vmem:[%s2749 + $0x38] sm:$0xf]
        %v2758 = vld [vmem:[%s2749 + $0x50] sm:$0xf]
        %v2759 = vld [vmem:[%s2749 + $0x58] sm:$0xf]
        %v2760 = vld [vmem:[%s2749 + $0x60] sm:$0xf]
        %v2761 = vld [vmem:[%s2749 + $0x68] sm:$0xf]
        %v2762 = vld [vmem:[%s2749 + $0x70] sm:$0xf]
        %v2763 = vld [vmem:[%s2749 + $0x78] sm:$0xf]
        %v2764 = vld [vmem:[%s2749 + $0x80] sm:$0xf]
        %v2765 = vld [vmem:[%s2749 + $0x88] sm:$0xf]
        %v2766 = vld [vmem:[%s3 + $0x30] sm:$0xf]
        %v2767 = vld [vmem:[%s3 + $0x34] sm:$0xf]
        %v2784 = vunpack.c.l.b16 %v2750
        %v2785 = vunpack.c.l.b16 %v2751
        %v2786 = vunpack.c.l.b16 %v2752
        %v2787 = vunpack.c.l.b16 %v2753
        %v2788 = vunpack.c.l.b16 %v2754
        %v2789 = vunpack.c.l.b16 %v2755
        %v2790 = vunpack.c.l.b16 %v2756
        %v2791 = vunpack.c.l.b16 %v2757
        %v2792 = vunpack.c.l.b16 %v2758
        %v2793 = vunpack.c.l.b16 %v2759
        %v2794 = vunpack.c.l.b16 %v2760
        %v2795 = vunpack.c.l.b16 %v2761
        %v2796 = vunpack.c.l.b16 %v2762
        %v2797 = vunpack.c.l.b16 %v2763
        %v2798 = vunpack.c.l.b16 %v2764
        %v2799 = vunpack.c.l.b16 %v2765
        %v2800 = vpack.c.b16 %v2785, %v2784
        %v2801 = vpack.c.b16 %v2787, %v2786
        %v2802 = vpack.c.b16 %v2789, %v2788
        %v2803 = vpack.c.b16 %v2791, %v2790
        %v2804 = vpack.c.b16 %v2793, %v2792
        %v2805 = vpack.c.b16 %v2795, %v2794
        %v2806 = vpack.c.b16 %v2797, %v2796
        %v2807 = vpack.c.b16 %v2799, %v2798
        %v2810 = vunpack.c.l.b16 %v2766
        %v2811 = vunpack.c.l.b16 %v2767
        %v2812 = vpack.c.b16 %v2811, %v2810
        %v2815 = vsel %vm1269, %v2800, 0
        %v2818 = vsel %vm1269, %v2801, 0
        %v2821 = vsel %vm1269, %v2802, 0
        %v2824 = vsel %vm1269, %v2803, 0
        %v2827 = vsel %vm1269, %v2804, 0
        %v2830 = vsel %vm1269, %v2805, 0
        %v2833 = vsel %vm1269, %v2806, 0
        %v2836 = vsel %vm1269, %v2807, 0
        %2838 = vmatprep.subr.bf16.mxu0 0
        %2839 = vmatpush1.bf16.msra.mxu0 0
        %2840 = vmatprep.subr.bf16.mxu0 0
        %2841 = vmatpush1.bf16.msra.mxu0 0
        %2842 = vmatprep.subr.bf16.mxu0 0
        %2843 = vmatpush1.bf16.msra.mxu0 0
        %2844 = vmatprep.subr.bf16.mxu0 0
        %2845 = vmatpush1.bf16.msra.mxu0 0
        %2846 = vmatprep.subr.bf16.mxu0 0
        %2847 = vmatpush1.bf16.msra.mxu0 0
        %2848 = vmatprep.subr.bf16.mxu0 0
        %2849 = vmatpush1.bf16.msra.mxu0 0
        %2850 = vmatprep.subr.bf16.mxu0 0
        %2851 = vmatpush1.bf16.msra.mxu0 0
        %2852 = vmatprep.subr.bf16.mxu0 0
        %2853 = vmatpush1.bf16.msra.mxu0 %v2812
        %2854 = vmatprep.subr.bf16.mxu0 0
        %2855 = vmatpush2.bf16.msra.mxu0 0
        %2856 = vmatprep.subr.bf16.mxu0 0
        %2857 = vmatpush2.bf16.msra.mxu0 0
        %2858 = vmatprep.subr.bf16.mxu0 0
        %2859 = vmatpush2.bf16.msra.mxu0 0
        %2860 = vmatprep.subr.bf16.mxu0 0
        %2861 = vmatpush2.bf16.msra.mxu0 0
        %2862 = vmatprep.subr.bf16.mxu0 0
        %2863 = vmatpush2.bf16.msra.mxu0 0
        %2864 = vmatprep.subr.bf16.mxu0 0
        %2865 = vmatpush2.bf16.msra.mxu0 0
        %2866 = vmatprep.subr.bf16.mxu0 0
        %2867 = vmatpush2.bf16.msra.mxu0 0
        %2868 = vmatprep.subr.bf16.mxu0 0
        %2869 = vmatpush2.bf16.msra.mxu0 0
        %2870 = vmatprep.mubr.bf16.mxu0 0
        %2871 = vmatmul.mubr.bf16.gmra.mxu0 %v2815
        %v2872 = vpop.f32.mrf.mxu0
        %v2873 = vadd.f32 0.0, %v2872
        %v2874 = vpop.f32.mrf.mxu0
        %v2875 = vpop.f32.mrf.mxu0
        %v2876 = vadd.f32 0.0, %v2875
        %v2877 = vpop.f32.mrf.mxu0
        %2878 = vmatprep.mubr.bf16.mxu0 0
        %2879 = vmatmul.mubr.bf16.gmra.mxu0 %v2818
        %v2880 = vpop.f32.mrf.mxu0
        %v2881 = vadd.f32 0.0, %v2880
        %v2882 = vpop.f32.mrf.mxu0
        %v2883 = vpop.f32.mrf.mxu0
        %v2884 = vadd.f32 0.0, %v2883
        %v2885 = vpop.f32.mrf.mxu0
        %2886 = vmatprep.mubr.bf16.mxu0 0
        %2887 = vmatmul.mubr.bf16.gmra.mxu0 %v2821
        %v2888 = vpop.f32.mrf.mxu0
        %v2889 = vadd.f32 0.0, %v2888
        %v2890 = vpop.f32.mrf.mxu0
        %v2891 = vpop.f32.mrf.mxu0
        %v2892 = vadd.f32 0.0, %v2891
        %v2893 = vpop.f32.mrf.mxu0
        %2894 = vmatprep.mubr.bf16.mxu0 0
        %2895 = vmatmul.mubr.bf16.gmra.mxu0 %v2824
        %v2896 = vpop.f32.mrf.mxu0
        %v2897 = vadd.f32 0.0, %v2896
        %v2898 = vpop.f32.mrf.mxu0
        %v2899 = vpop.f32.mrf.mxu0
        %v2900 = vadd.f32 0.0, %v2899
        %v2901 = vpop.f32.mrf.mxu0
        %2902 = vmatprep.mubr.bf16.mxu0 0
        %2903 = vmatmul.mubr.bf16.gmra.mxu0 %v2827
        %v2904 = vpop.f32.mrf.mxu0
        %v2905 = vadd.f32 0.0, %v2904
        %v2906 = vpop.f32.mrf.mxu0
        %v2907 = vpop.f32.mrf.mxu0
        %v2908 = vadd.f32 0.0, %v2907
        %v2909 = vpop.f32.mrf.mxu0
        %2910 = vmatprep.mubr.bf16.mxu0 0
        %2911 = vmatmul.mubr.bf16.gmra.mxu0 %v2830
        %v2912 = vpop.f32.mrf.mxu0
        %v2913 = vadd.f32 0.0, %v2912
        %v2914 = vpop.f32.mrf.mxu0
        %v2915 = vpop.f32.mrf.mxu0
        %v2916 = vadd.f32 0.0, %v2915
        %v2917 = vpop.f32.mrf.mxu0
        %2918 = vmatprep.mubr.bf16.mxu0 0
        %2919 = vmatmul.mubr.bf16.gmra.mxu0 %v2833
        %v2920 = vpop.f32.mrf.mxu0
        %v2921 = vadd.f32 0.0, %v2920
        %v2922 = vpop.f32.mrf.mxu0
        %v2923 = vpop.f32.mrf.mxu0
        %v2924 = vadd.f32 0.0, %v2923
        %v2925 = vpop.f32.mrf.mxu0
        %2926 = vmatprep.mubr.bf16.mxu0 0
        %2927 = vmatmul.mubr.bf16.gmra.mxu0 %v2836
        %v2928 = vpop.f32.mrf.mxu0
        %v2929 = vadd.f32 0.0, %v2928
        %v2930 = vpop.f32.mrf.mxu0
        %v2931 = vpop.f32.mrf.mxu0
        %v2932 = vadd.f32 0.0, %v2931
        %v2933 = vpop.f32.mrf.mxu0
        %2934 = vdwg.mxu0
        %v2935 = vadd.f32 %v2733, %v2873
        %v2936 = vadd.f32 %v2734, %v2876
        %v2937 = vadd.f32 %v2735, %v2881
        %v2938 = vadd.f32 %v2736, %v2884
        %v2939 = vadd.f32 %v2737, %v2889
        %v2940 = vadd.f32 %v2738, %v2892
        %v2941 = vadd.f32 %v2739, %v2897
        %v2942 = vadd.f32 %v2740, %v2900
        %v2943 = vadd.f32 %v2741, %v2905
        %v2944 = vadd.f32 %v2742, %v2908
        %v2945 = vadd.f32 %v2743, %v2913
        %v2946 = vadd.f32 %v2744, %v2916
        %v2947 = vadd.f32 %v2745, %v2921
        %v2948 = vadd.f32 %v2746, %v2924
        %v2949 = vadd.f32 %v2747, %v2929
        %v2950 = vadd.f32 %v2748, %v2932
        %v2951 = vld [vmem:[%s2749] sm:$0xf]
        %v2952 = vld [vmem:[%s2749 + $0x4] sm:$0x1]
        %v2953 = vld [vmem:[%s2749 + $0x8] sm:$0xf]
        %v2954 = vld [vmem:[%s2749 + $0xc] sm:$0x1]
        %v2955 = vld [vmem:[%s2749 + $0x10] sm:$0xf]
        %v2956 = vld [vmem:[%s2749 + $0x14] sm:$0x1]
        %v2957 = vld [vmem:[%s2749 + $0x18] sm:$0xf]
        %v2958 = vld [vmem:[%s2749 + $0x1c] sm:$0x1]
        %v2959 = vld [vmem:[%s2749 + $0x20] sm:$0xf]
        %v2960 = vld [vmem:[%s2749 + $0x24] sm:$0x1]
        %v2961 = vld [vmem:[%s2749 + $0x28] sm:$0xf]
        %v2962 = vld [vmem:[%s2749 + $0x2c] sm:$0x1]
        %v2963 = vld [vmem:[%s2749 + $0x30] sm:$0xf]
        %v2964 = vld [vmem:[%s2749 + $0x34] sm:$0x1]
        %v2965 = vld [vmem:[%s2749 + $0x38] sm:$0xf]
        %v2966 = vld [vmem:[%s2749 + $0x3c] sm:$0x1]
        %v2967 = vld [vmem:[%s2749 + $0x50] sm:$0xf]
        %v2968 = vld [vmem:[%s2749 + $0x54] sm:$0x1]
        %v2969 = vld [vmem:[%s2749 + $0x58] sm:$0xf]
        %v2970 = vld [vmem:[%s2749 + $0x5c] sm:$0x1]
        %v2971 = vld [vmem:[%s2749 + $0x60] sm:$0xf]
        %v2972 = vld [vmem:[%s2749 + $0x64] sm:$0x1]
        %v2973 = vld [vmem:[%s2749 + $0x68] sm:$0xf]
        %v2974 = vld [vmem:[%s2749 + $0x6c] sm:$0x1]
        %v2975 = vld [vmem:[%s2749 + $0x70] sm:$0xf]
        %v2976 = vld [vmem:[%s2749 + $0x74] sm:$0x1]
        %v2977 = vld [vmem:[%s2749 + $0x78] sm:$0xf]
        %v2978 = vld [vmem:[%s2749 + $0x7c] sm:$0x1]
        %v2979 = vld [vmem:[%s2749 + $0x80] sm:$0xf]
        %v2980 = vld [vmem:[%s2749 + $0x84] sm:$0x1]
        %v2981 = vld [vmem:[%s2749 + $0x88] sm:$0xf]
        %v2982 = vld [vmem:[%s2749 + $0x8c] sm:$0x1]
        %v2984 = vshrl.u32 %v2951, 16
        %v2986 = vrot.slane %v2984, 4
        %v2987 = vshll.u32 %v2951, 16
        %v2989 = vrot.slane %v2987, 5
        %v2990 = vor.u32 %v2986, %v2989
        %v2991 = vrot.slane %v2990, 4
        %v2993 = vshll.u32 %v2952, 16
        %v2995 = vrot.slane %v2993, 5
        %v2996 = vsel %vm1012, %v2991, %v2995
        %v2998 = vshrl.u32 %v2953, 16
        %v3000 = vrot.slane %v2998, 4
        %v3001 = vshll.u32 %v2953, 16
        %v3003 = vrot.slane %v3001, 5
        %v3004 = vor.u32 %v3000, %v3003
        %v3005 = vrot.slane %v3004, 4
        %v3007 = vshll.u32 %v2954, 16
        %v3009 = vrot.slane %v3007, 5
        %v3010 = vsel %vm1012, %v3005, %v3009
        %v3012 = vshrl.u32 %v2955, 16
        %v3014 = vrot.slane %v3012, 4
        %v3015 = vshll.u32 %v2955, 16
        %v3017 = vrot.slane %v3015, 5
        %v3018 = vor.u32 %v3014, %v3017
        %v3019 = vrot.slane %v3018, 4
        %v3021 = vshll.u32 %v2956, 16
        %v3023 = vrot.slane %v3021, 5
        %v3024 = vsel %vm1012, %v3019, %v3023
        %v3026 = vshrl.u32 %v2957, 16
        %v3028 = vrot.slane %v3026, 4
        %v3029 = vshll.u32 %v2957, 16
        %v3031 = vrot.slane %v3029, 5
        %v3032 = vor.u32 %v3028, %v3031
        %v3033 = vrot.slane %v3032, 4
        %v3035 = vshll.u32 %v2958, 16
        %v3037 = vrot.slane %v3035, 5
        %v3038 = vsel %vm1012, %v3033, %v3037
        %v3040 = vshrl.u32 %v2959, 16
        %v3042 = vrot.slane %v3040, 4
        %v3043 = vshll.u32 %v2959, 16
        %v3045 = vrot.slane %v3043, 5
        %v3046 = vor.u32 %v3042, %v3045
        %v3047 = vrot.slane %v3046, 4
        %v3049 = vshll.u32 %v2960, 16
        %v3051 = vrot.slane %v3049, 5
        %v3052 = vsel %vm1012, %v3047, %v3051
        %v3054 = vshrl.u32 %v2961, 16
        %v3056 = vrot.slane %v3054, 4
        %v3057 = vshll.u32 %v2961, 16
        %v3059 = vrot.slane %v3057, 5
        %v3060 = vor.u32 %v3056, %v3059
        %v3061 = vrot.slane %v3060, 4
        %v3063 = vshll.u32 %v2962, 16
        %v3065 = vrot.slane %v3063, 5
        %v3066 = vsel %vm1012, %v3061, %v3065
        %v3068 = vshrl.u32 %v2963, 16
        %v3070 = vrot.slane %v3068, 4
        %v3071 = vshll.u32 %v2963, 16
        %v3073 = vrot.slane %v3071, 5
        %v3074 = vor.u32 %v3070, %v3073
        %v3075 = vrot.slane %v3074, 4
        %v3077 = vshll.u32 %v2964, 16
        %v3079 = vrot.slane %v3077, 5
        %v3080 = vsel %vm1012, %v3075, %v3079
        %v3082 = vshrl.u32 %v2965, 16
        %v3084 = vrot.slane %v3082, 4
        %v3085 = vshll.u32 %v2965, 16
        %v3087 = vrot.slane %v3085, 5
        %v3088 = vor.u32 %v3084, %v3087
        %v3089 = vrot.slane %v3088, 4
        %v3091 = vshll.u32 %v2966, 16
        %v3093 = vrot.slane %v3091, 5
        %v3094 = vsel %vm1012, %v3089, %v3093
        %v3096 = vshrl.u32 %v2967, 16
        %v3098 = vrot.slane %v3096, 4
        %v3099 = vshll.u32 %v2967, 16
        %v3101 = vrot.slane %v3099, 5
        %v3102 = vor.u32 %v3098, %v3101
        %v3103 = vrot.slane %v3102, 4
        %v3105 = vshll.u32 %v2968, 16
        %v3107 = vrot.slane %v3105, 5
        %v3108 = vsel %vm1012, %v3103, %v3107
        %v3110 = vshrl.u32 %v2969, 16
        %v3112 = vrot.slane %v3110, 4
        %v3113 = vshll.u32 %v2969, 16
        %v3115 = vrot.slane %v3113, 5
        %v3116 = vor.u32 %v3112, %v3115
        %v3117 = vrot.slane %v3116, 4
        %v3119 = vshll.u32 %v2970, 16
        %v3121 = vrot.slane %v3119, 5
        %v3122 = vsel %vm1012, %v3117, %v3121
        %v3124 = vshrl.u32 %v2971, 16
        %v3126 = vrot.slane %v3124, 4
        %v3127 = vshll.u32 %v2971, 16
        %v3129 = vrot.slane %v3127, 5
        %v3130 = vor.u32 %v3126, %v3129
        %v3131 = vrot.slane %v3130, 4
        %v3133 = vshll.u32 %v2972, 16
        %v3135 = vrot.slane %v3133, 5
        %v3136 = vsel %vm1012, %v3131, %v3135
        %v3138 = vshrl.u32 %v2973, 16
        %v3140 = vrot.slane %v3138, 4
        %v3141 = vshll.u32 %v2973, 16
        %v3143 = vrot.slane %v3141, 5
        %v3144 = vor.u32 %v3140, %v3143
        %v3145 = vrot.slane %v3144, 4
        %v3147 = vshll.u32 %v2974, 16
        %v3149 = vrot.slane %v3147, 5
        %v3150 = vsel %vm1012, %v3145, %v3149
        %v3152 = vshrl.u32 %v2975, 16
        %v3154 = vrot.slane %v3152, 4
        %v3155 = vshll.u32 %v2975, 16
        %v3157 = vrot.slane %v3155, 5
        %v3158 = vor.u32 %v3154, %v3157
        %v3159 = vrot.slane %v3158, 4
        %v3161 = vshll.u32 %v2976, 16
        %v3163 = vrot.slane %v3161, 5
        %v3164 = vsel %vm1012, %v3159, %v3163
        %v3166 = vshrl.u32 %v2977, 16
        %v3168 = vrot.slane %v3166, 4
        %v3169 = vshll.u32 %v2977, 16
        %v3171 = vrot.slane %v3169, 5
        %v3172 = vor.u32 %v3168, %v3171
        %v3173 = vrot.slane %v3172, 4
        %v3175 = vshll.u32 %v2978, 16
        %v3177 = vrot.slane %v3175, 5
        %v3178 = vsel %vm1012, %v3173, %v3177
        %v3180 = vshrl.u32 %v2979, 16
        %v3182 = vrot.slane %v3180, 4
        %v3183 = vshll.u32 %v2979, 16
        %v3185 = vrot.slane %v3183, 5
        %v3186 = vor.u32 %v3182, %v3185
        %v3187 = vrot.slane %v3186, 4
        %v3189 = vshll.u32 %v2980, 16
        %v3191 = vrot.slane %v3189, 5
        %v3192 = vsel %vm1012, %v3187, %v3191
        %v3194 = vshrl.u32 %v2981, 16
        %v3196 = vrot.slane %v3194, 4
        %v3197 = vshll.u32 %v2981, 16
        %v3199 = vrot.slane %v3197, 5
        %v3200 = vor.u32 %v3196, %v3199
        %v3201 = vrot.slane %v3200, 4
        %v3203 = vshll.u32 %v2982, 16
        %v3205 = vrot.slane %v3203, 5
        %v3206 = vsel %vm1012, %v3201, %v3205
        %v3207 = vld [vmem:[%s3 + $0x38] sm:$0xf]
        %v3208 = vld [vmem:[%s3 + $0x3c] sm:$0xf]
        %v3209 = vunpack.c.l.b16 %v2996
        %v3210 = vunpack.c.l.b16 %v3010
        %v3211 = vunpack.c.l.b16 %v3024
        %v3212 = vunpack.c.l.b16 %v3038
        %v3213 = vunpack.c.l.b16 %v3052
        %v3214 = vunpack.c.l.b16 %v3066
        %v3215 = vunpack.c.l.b16 %v3080
        %v3216 = vunpack.c.l.b16 %v3094
        %v3217 = vunpack.c.l.b16 %v3108
        %v3218 = vunpack.c.l.b16 %v3122
        %v3219 = vunpack.c.l.b16 %v3136
        %v3220 = vunpack.c.l.b16 %v3150
        %v3221 = vunpack.c.l.b16 %v3164
        %v3222 = vunpack.c.l.b16 %v3178
        %v3223 = vunpack.c.l.b16 %v3192
        %v3224 = vunpack.c.l.b16 %v3206
        %v3225 = vpack.c.b16 %v3210, %v3209
        %v3226 = vpack.c.b16 %v3212, %v3211
        %v3227 = vpack.c.b16 %v3214, %v3213
        %v3228 = vpack.c.b16 %v3216, %v3215
        %v3229 = vpack.c.b16 %v3218, %v3217
        %v3230 = vpack.c.b16 %v3220, %v3219
        %v3231 = vpack.c.b16 %v3222, %v3221
        %v3232 = vpack.c.b16 %v3224, %v3223
        %v3235 = vunpack.c.l.b16 %v3207
        %v3236 = vunpack.c.l.b16 %v3208
        %v3237 = vpack.c.b16 %v3236, %v3235
        %v3240 = vsel %vm1269, %v3225, 0
        %v3243 = vsel %vm1269, %v3226, 0
        %v3246 = vsel %vm1269, %v3227, 0
        %v3249 = vsel %vm1269, %v3228, 0
        %v3252 = vsel %vm1269, %v3229, 0
        %v3255 = vsel %vm1269, %v3230, 0
        %v3258 = vsel %vm1269, %v3231, 0
        %v3261 = vsel %vm1269, %v3232, 0
        %3263 = vmatprep.subr.bf16.mxu0 0
        %3264 = vmatpush1.bf16.msra.mxu0 0
        %3265 = vmatprep.subr.bf16.mxu0 0
        %3266 = vmatpush1.bf16.msra.mxu0 0
        %3267 = vmatprep.subr.bf16.mxu0 0
        %3268 = vmatpush1.bf16.msra.mxu0 0
        %3269 = vmatprep.subr.bf16.mxu0 0
        %3270 = vmatpush1.bf16.msra.mxu0 0
        %3271 = vmatprep.subr.bf16.mxu0 0
        %3272 = vmatpush1.bf16.msra.mxu0 0
        %3273 = vmatprep.subr.bf16.mxu0 0
        %3274 = vmatpush1.bf16.msra.mxu0 0
        %3275 = vmatprep.subr.bf16.mxu0 0
        %3276 = vmatpush1.bf16.msra.mxu0 0
        %3277 = vmatprep.subr.bf16.mxu0 0
        %3278 = vmatpush1.bf16.msra.mxu0 %v3237
        %3279 = vmatprep.subr.bf16.mxu0 0
        %3280 = vmatpush2.bf16.msra.mxu0 0
        %3281 = vmatprep.subr.bf16.mxu0 0
        %3282 = vmatpush2.bf16.msra.mxu0 0
        %3283 = vmatprep.subr.bf16.mxu0 0
        %3284 = vmatpush2.bf16.msra.mxu0 0
        %3285 = vmatprep.subr.bf16.mxu0 0
        %3286 = vmatpush2.bf16.msra.mxu0 0
        %3287 = vmatprep.subr.bf16.mxu0 0
        %3288 = vmatpush2.bf16.msra.mxu0 0
        %3289 = vmatprep.subr.bf16.mxu0 0
        %3290 = vmatpush2.bf16.msra.mxu0 0
        %3291 = vmatprep.subr.bf16.mxu0 0
        %3292 = vmatpush2.bf16.msra.mxu0 0
        %3293 = vmatprep.subr.bf16.mxu0 0
        %3294 = vmatpush2.bf16.msra.mxu0 0
        %3295 = vmatprep.mubr.bf16.mxu0 0
        %3296 = vmatmul.mubr.bf16.gmra.mxu0 %v3240
        %v3297 = vpop.f32.mrf.mxu0
        %v3298 = vadd.f32 0.0, %v3297
        %v3299 = vpop.f32.mrf.mxu0
        %v3300 = vpop.f32.mrf.mxu0
        %v3301 = vadd.f32 0.0, %v3300
        %v3302 = vpop.f32.mrf.mxu0
        %3303 = vmatprep.mubr.bf16.mxu0 0
        %3304 = vmatmul.mubr.bf16.gmra.mxu0 %v3243
        %v3305 = vpop.f32.mrf.mxu0
        %v3306 = vadd.f32 0.0, %v3305
        %v3307 = vpop.f32.mrf.mxu0
        %v3308 = vpop.f32.mrf.mxu0
        %v3309 = vadd.f32 0.0, %v3308
        %v3310 = vpop.f32.mrf.mxu0
        %3311 = vmatprep.mubr.bf16.mxu0 0
        %3312 = vmatmul.mubr.bf16.gmra.mxu0 %v3246
        %v3313 = vpop.f32.mrf.mxu0
        %v3314 = vadd.f32 0.0, %v3313
        %v3315 = vpop.f32.mrf.mxu0
        %v3316 = vpop.f32.mrf.mxu0
        %v3317 = vadd.f32 0.0, %v3316
        %v3318 = vpop.f32.mrf.mxu0
        %3319 = vmatprep.mubr.bf16.mxu0 0
        %3320 = vmatmul.mubr.bf16.gmra.mxu0 %v3249
        %v3321 = vpop.f32.mrf.mxu0
        %v3322 = vadd.f32 0.0, %v3321
        %v3323 = vpop.f32.mrf.mxu0
        %v3324 = vpop.f32.mrf.mxu0
        %v3325 = vadd.f32 0.0, %v3324
        %v3326 = vpop.f32.mrf.mxu0
        %3327 = vmatprep.mubr.bf16.mxu0 0
        %3328 = vmatmul.mubr.bf16.gmra.mxu0 %v3252
        %v3329 = vpop.f32.mrf.mxu0
        %v3330 = vadd.f32 0.0, %v3329
        %v3331 = vpop.f32.mrf.mxu0
        %v3332 = vpop.f32.mrf.mxu0
        %v3333 = vadd.f32 0.0, %v3332
        %v3334 = vpop.f32.mrf.mxu0
        %3335 = vmatprep.mubr.bf16.mxu0 0
        %3336 = vmatmul.mubr.bf16.gmra.mxu0 %v3255
        %v3337 = vpop.f32.mrf.mxu0
        %v3338 = vadd.f32 0.0, %v3337
        %v3339 = vpop.f32.mrf.mxu0
        %v3340 = vpop.f32.mrf.mxu0
        %v3341 = vadd.f32 0.0, %v3340
        %v3342 = vpop.f32.mrf.mxu0
        %3343 = vmatprep.mubr.bf16.mxu0 0
        %3344 = vmatmul.mubr.bf16.gmra.mxu0 %v3258
        %v3345 = vpop.f32.mrf.mxu0
        %v3346 = vadd.f32 0.0, %v3345
        %v3347 = vpop.f32.mrf.mxu0
        %v3348 = vpop.f32.mrf.mxu0
        %v3349 = vadd.f32 0.0, %v3348
        %v3350 = vpop.f32.mrf.mxu0
        %3351 = vmatprep.mubr.bf16.mxu0 0
        %3352 = vmatmul.mubr.bf16.gmra.mxu0 %v3261
        %v3353 = vpop.f32.mrf.mxu0
        %v3354 = vadd.f32 0.0, %v3353
        %v3355 = vpop.f32.mrf.mxu0
        %v3356 = vpop.f32.mrf.mxu0
        %v3357 = vadd.f32 0.0, %v3356
        %v3358 = vpop.f32.mrf.mxu0
        %3359 = vdwg.mxu0
        %v3360 = vadd.f32 %v2935, %v3298
        %v3361 = vadd.f32 %v2936, %v3301
        %v3362 = vadd.f32 %v2937, %v3306
        %v3363 = vadd.f32 %v2938, %v3309
        %v3364 = vadd.f32 %v2939, %v3314
        %v3365 = vadd.f32 %v2940, %v3317
        %v3366 = vadd.f32 %v2941, %v3322
        %v3367 = vadd.f32 %v2942, %v3325
        %v3368 = vadd.f32 %v2943, %v3330
        %v3369 = vadd.f32 %v2944, %v3333
        %v3370 = vadd.f32 %v2945, %v3338
        %v3371 = vadd.f32 %v2946, %v3341
        %v3372 = vadd.f32 %v2947, %v3346
        %v3373 = vadd.f32 %v2948, %v3349
        %v3374 = vadd.f32 %v2949, %v3354
        %v3375 = vadd.f32 %v2950, %v3357
        %v3376 = vld [vmem:[%s2749] sm:$0xe]
        %v3377 = vld [vmem:[%s2749 + $0x8] sm:$0xe]
        %v3378 = vld [vmem:[%s2749 + $0x10] sm:$0xe]
        %v3379 = vld [vmem:[%s2749 + $0x18] sm:$0xe]
        %v3380 = vld [vmem:[%s2749 + $0x20] sm:$0xe]
        %v3381 = vld [vmem:[%s2749 + $0x28] sm:$0xe]
        %v3382 = vld [vmem:[%s2749 + $0x30] sm:$0xe]
        %v3383 = vld [vmem:[%s2749 + $0x38] sm:$0xe]
        %v3384 = vld [vmem:[%s2749 + $0x50] sm:$0xe]
        %v3385 = vld [vmem:[%s2749 + $0x58] sm:$0xe]
        %v3386 = vld [vmem:[%s2749 + $0x60] sm:$0xe]
        %v3387 = vld [vmem:[%s2749 + $0x68] sm:$0xe]
        %v3388 = vld [vmem:[%s2749 + $0x70] sm:$0xe]
        %v3389 = vld [vmem:[%s2749 + $0x78] sm:$0xe]
        %v3390 = vld [vmem:[%s2749 + $0x80] sm:$0xe]
        %v3391 = vld [vmem:[%s2749 + $0x88] sm:$0xe]
        %v3424 = vrot.slane %v3376, 5
        %v3425 = vrot.slane %v3424, 4
        %v3426 = vrot.slane %v2952, 5
        %v3427 = vsel %vm1608, %v3425, %v3426
        %v3428 = vrot.slane %v3377, 5
        %v3429 = vrot.slane %v3428, 4
        %v3430 = vrot.slane %v2954, 5
        %v3431 = vsel %vm1608, %v3429, %v3430
        %v3432 = vrot.slane %v3378, 5
        %v3433 = vrot.slane %v3432, 4
        %v3434 = vrot.slane %v2956, 5
        %v3435 = vsel %vm1608, %v3433, %v3434
        %v3436 = vrot.slane %v3379, 5
        %v3437 = vrot.slane %v3436, 4
        %v3438 = vrot.slane %v2958, 5
        %v3439 = vsel %vm1608, %v3437, %v3438
        %v3440 = vrot.slane %v3380, 5
        %v3441 = vrot.slane %v3440, 4
        %v3442 = vrot.slane %v2960, 5
        %v3443 = vsel %vm1608, %v3441, %v3442
        %v3444 = vrot.slane %v3381, 5
        %v3445 = vrot.slane %v3444, 4
        %v3446 = vrot.slane %v2962, 5
        %v3447 = vsel %vm1608, %v3445, %v3446
        %v3448 = vrot.slane %v3382, 5
        %v3449 = vrot.slane %v3448, 4
        %v3450 = vrot.slane %v2964, 5
        %v3451 = vsel %vm1608, %v3449, %v3450
        %v3452 = vrot.slane %v3383, 5
        %v3453 = vrot.slane %v3452, 4
        %v3454 = vrot.slane %v2966, 5
        %v3455 = vsel %vm1608, %v3453, %v3454
        %v3456 = vrot.slane %v3384, 5
        %v3457 = vrot.slane %v3456, 4
        %v3458 = vrot.slane %v2968, 5
        %v3459 = vsel %vm1608, %v3457, %v3458
        %v3460 = vrot.slane %v3385, 5
        %v3461 = vrot.slane %v3460, 4
        %v3462 = vrot.slane %v2970, 5
        %v3463 = vsel %vm1608, %v3461, %v3462
        %v3464 = vrot.slane %v3386, 5
        %v3465 = vrot.slane %v3464, 4
        %v3466 = vrot.slane %v2972, 5
        %v3467 = vsel %vm1608, %v3465, %v3466
        %v3468 = vrot.slane %v3387, 5
        %v3469 = vrot.slane %v3468, 4
        %v3470 = vrot.slane %v2974, 5
        %v3471 = vsel %vm1608, %v3469, %v3470
        %v3472 = vrot.slane %v3388, 5
        %v3473 = vrot.slane %v3472, 4
        %v3474 = vrot.slane %v2976, 5
        %v3475 = vsel %vm1608, %v3473, %v3474
        %v3476 = vrot.slane %v3389, 5
        %v3477 = vrot.slane %v3476, 4
        %v3478 = vrot.slane %v2978, 5
        %v3479 = vsel %vm1608, %v3477, %v3478
        %v3480 = vrot.slane %v3390, 5
        %v3481 = vrot.slane %v3480, 4
        %v3482 = vrot.slane %v2980, 5
        %v3483 = vsel %vm1608, %v3481, %v3482
        %v3484 = vrot.slane %v3391, 5
        %v3485 = vrot.slane %v3484, 4
        %v3486 = vrot.slane %v2982, 5
        %v3487 = vsel %vm1608, %v3485, %v3486
        %v3488 = vld [vmem:[%s3 + $0x40] sm:$0xf]
        %v3489 = vld [vmem:[%s3 + $0x44] sm:$0xf]
        %v3490 = vunpack.c.l.b16 %v3427
        %v3491 = vunpack.c.l.b16 %v3431
        %v3492 = vunpack.c.l.b16 %v3435
        %v3493 = vunpack.c.l.b16 %v3439
        %v3494 = vunpack.c.l.b16 %v3443
        %v3495 = vunpack.c.l.b16 %v3447
        %v3496 = vunpack.c.l.b16 %v3451
        %v3497 = vunpack.c.l.b16 %v3455
        %v3498 = vunpack.c.l.b16 %v3459
        %v3499 = vunpack.c.l.b16 %v3463
        %v3500 = vunpack.c.l.b16 %v3467
        %v3501 = vunpack.c.l.b16 %v3471
        %v3502 = vunpack.c.l.b16 %v3475
        %v3503 = vunpack.c.l.b16 %v3479
        %v3504 = vunpack.c.l.b16 %v3483
        %v3505 = vunpack.c.l.b16 %v3487
        %v3506 = vpack.c.b16 %v3491, %v3490
        %v3507 = vpack.c.b16 %v3493, %v3492
        %v3508 = vpack.c.b16 %v3495, %v3494
        %v3509 = vpack.c.b16 %v3497, %v3496
        %v3510 = vpack.c.b16 %v3499, %v3498
        %v3511 = vpack.c.b16 %v3501, %v3500
        %v3512 = vpack.c.b16 %v3503, %v3502
        %v3513 = vpack.c.b16 %v3505, %v3504
        %v3516 = vunpack.c.l.b16 %v3488
        %v3517 = vunpack.c.l.b16 %v3489
        %v3518 = vpack.c.b16 %v3517, %v3516
        %v3521 = vsel %vm1269, %v3506, 0
        %v3524 = vsel %vm1269, %v3507, 0
        %v3527 = vsel %vm1269, %v3508, 0
        %v3530 = vsel %vm1269, %v3509, 0
        %v3533 = vsel %vm1269, %v3510, 0
        %v3536 = vsel %vm1269, %v3511, 0
        %v3539 = vsel %vm1269, %v3512, 0
        %v3542 = vsel %vm1269, %v3513, 0
        %3544 = vmatprep.subr.bf16.mxu0 0
        %3545 = vmatpush1.bf16.msra.mxu0 0
        %3546 = vmatprep.subr.bf16.mxu0 0
        %3547 = vmatpush1.bf16.msra.mxu0 0
        %3548 = vmatprep.subr.bf16.mxu0 0
        %3549 = vmatpush1.bf16.msra.mxu0 0
        %3550 = vmatprep.subr.bf16.mxu0 0
        %3551 = vmatpush1.bf16.msra.mxu0 0
        %3552 = vmatprep.subr.bf16.mxu0 0
        %3553 = vmatpush1.bf16.msra.mxu0 0
        %3554 = vmatprep.subr.bf16.mxu0 0
        %3555 = vmatpush1.bf16.msra.mxu0 0
        %3556 = vmatprep.subr.bf16.mxu0 0
        %3557 = vmatpush1.bf16.msra.mxu0 0
        %3558 = vmatprep.subr.bf16.mxu0 0
        %3559 = vmatpush1.bf16.msra.mxu0 %v3518
        %3560 = vmatprep.subr.bf16.mxu0 0
        %3561 = vmatpush2.bf16.msra.mxu0 0
        %3562 = vmatprep.subr.bf16.mxu0 0
        %3563 = vmatpush2.bf16.msra.mxu0 0
        %3564 = vmatprep.subr.bf16.mxu0 0
        %3565 = vmatpush2.bf16.msra.mxu0 0
        %3566 = vmatprep.subr.bf16.mxu0 0
        %3567 = vmatpush2.bf16.msra.mxu0 0
        %3568 = vmatprep.subr.bf16.mxu0 0
        %3569 = vmatpush2.bf16.msra.mxu0 0
        %3570 = vmatprep.subr.bf16.mxu0 0
        %3571 = vmatpush2.bf16.msra.mxu0 0
        %3572 = vmatprep.subr.bf16.mxu0 0
        %3573 = vmatpush2.bf16.msra.mxu0 0
        %3574 = vmatprep.subr.bf16.mxu0 0
        %3575 = vmatpush2.bf16.msra.mxu0 0
        %3576 = vmatprep.mubr.bf16.mxu0 0
        %3577 = vmatmul.mubr.bf16.gmra.mxu0 %v3521
        %v3578 = vpop.f32.mrf.mxu0
        %v3579 = vadd.f32 0.0, %v3578
        %v3580 = vpop.f32.mrf.mxu0
        %v3581 = vpop.f32.mrf.mxu0
        %v3582 = vadd.f32 0.0, %v3581
        %v3583 = vpop.f32.mrf.mxu0
        %3584 = vmatprep.mubr.bf16.mxu0 0
        %3585 = vmatmul.mubr.bf16.gmra.mxu0 %v3524
        %v3586 = vpop.f32.mrf.mxu0
        %v3587 = vadd.f32 0.0, %v3586
        %v3588 = vpop.f32.mrf.mxu0
        %v3589 = vpop.f32.mrf.mxu0
        %v3590 = vadd.f32 0.0, %v3589
        %v3591 = vpop.f32.mrf.mxu0
        %3592 = vmatprep.mubr.bf16.mxu0 0
        %3593 = vmatmul.mubr.bf16.gmra.mxu0 %v3527
        %v3594 = vpop.f32.mrf.mxu0
        %v3595 = vadd.f32 0.0, %v3594
        %v3596 = vpop.f32.mrf.mxu0
        %v3597 = vpop.f32.mrf.mxu0
        %v3598 = vadd.f32 0.0, %v3597
        %v3599 = vpop.f32.mrf.mxu0
        %3600 = vmatprep.mubr.bf16.mxu0 0
        %3601 = vmatmul.mubr.bf16.gmra.mxu0 %v3530
        %v3602 = vpop.f32.mrf.mxu0
        %v3603 = vadd.f32 0.0, %v3602
        %v3604 = vpop.f32.mrf.mxu0
        %v3605 = vpop.f32.mrf.mxu0
        %v3606 = vadd.f32 0.0, %v3605
        %v3607 = vpop.f32.mrf.mxu0
        %3608 = vmatprep.mubr.bf16.mxu0 0
        %3609 = vmatmul.mubr.bf16.gmra.mxu0 %v3533
        %v3610 = vpop.f32.mrf.mxu0
        %v3611 = vadd.f32 0.0, %v3610
        %v3612 = vpop.f32.mrf.mxu0
        %v3613 = vpop.f32.mrf.mxu0
        %v3614 = vadd.f32 0.0, %v3613
        %v3615 = vpop.f32.mrf.mxu0
        %3616 = vmatprep.mubr.bf16.mxu0 0
        %3617 = vmatmul.mubr.bf16.gmra.mxu0 %v3536
        %v3618 = vpop.f32.mrf.mxu0
        %v3619 = vadd.f32 0.0, %v3618
        %v3620 = vpop.f32.mrf.mxu0
        %v3621 = vpop.f32.mrf.mxu0
        %v3622 = vadd.f32 0.0, %v3621
        %v3623 = vpop.f32.mrf.mxu0
        %3624 = vmatprep.mubr.bf16.mxu0 0
        %3625 = vmatmul.mubr.bf16.gmra.mxu0 %v3539
        %v3626 = vpop.f32.mrf.mxu0
        %v3627 = vadd.f32 0.0, %v3626
        %v3628 = vpop.f32.mrf.mxu0
        %v3629 = vpop.f32.mrf.mxu0
        %v3630 = vadd.f32 0.0, %v3629
        %v3631 = vpop.f32.mrf.mxu0
        %3632 = vmatprep.mubr.bf16.mxu0 0
        %3633 = vmatmul.mubr.bf16.gmra.mxu0 %v3542
        %v3634 = vpop.f32.mrf.mxu0
        %v3635 = vadd.f32 0.0, %v3634
        %v3636 = vpop.f32.mrf.mxu0
        %v3637 = vpop.f32.mrf.mxu0
        %v3638 = vadd.f32 0.0, %v3637
        %v3639 = vpop.f32.mrf.mxu0
        %3640 = vdwg.mxu0
        %v3641 = vadd.f32 %v3360, %v3579
        %v3642 = vadd.f32 %v3361, %v3582
        %v3643 = vadd.f32 %v3362, %v3587
        %v3644 = vadd.f32 %v3363, %v3590
        %v3645 = vadd.f32 %v3364, %v3595
        %v3646 = vadd.f32 %v3365, %v3598
        %v3647 = vadd.f32 %v3366, %v3603
        %v3648 = vadd.f32 %v3367, %v3606
        %v3649 = vadd.f32 %v3368, %v3611
        %v3650 = vadd.f32 %v3369, %v3614
        %v3651 = vadd.f32 %v3370, %v3619
        %v3652 = vadd.f32 %v3371, %v3622
        %v3653 = vadd.f32 %v3372, %v3627
        %v3654 = vadd.f32 %v3373, %v3630
        %v3655 = vadd.f32 %v3374, %v3635
        %v3656 = vadd.f32 %v3375, %v3638
        %v3657 = vld [vmem:[%s4] sm:$0x1]
        %v3659 = vlaneseq
        %v3660 = vshrl.u32 %v3659, 7
        %v3661 = vsub.s32 0, %v3660
        %v3662 = vrot.slane %v3657, %v3661
        %v3664 = vadd.f32 %v3641, %v3662
        %v3665 = vadd.f32 %v3642, %v3662
        %v3666 = vadd.f32 %v3643, %v3662
        %v3667 = vadd.f32 %v3644, %v3662
        %v3668 = vadd.f32 %v3645, %v3662
        %v3669 = vadd.f32 %v3646, %v3662
        %v3670 = vadd.f32 %v3647, %v3662
        %v3671 = vadd.f32 %v3648, %v3662
        %v3672 = vadd.f32 %v3649, %v3662
        %v3673 = vadd.f32 %v3650, %v3662
        %v3674 = vadd.f32 %v3651, %v3662
        %v3675 = vadd.f32 %v3652, %v3662
        %v3676 = vadd.f32 %v3653, %v3662
        %v3677 = vadd.f32 %v3654, %v3662
        %v3678 = vadd.f32 %v3655, %v3662
        %v3679 = vadd.f32 %v3656, %v3662
        %v3680 = vmax.f32 %v3664, 0.0
        %v3681 = vmax.f32 %v3665, 0.0
        %v3682 = vmax.f32 %v3666, 0.0
        %v3683 = vmax.f32 %v3667, 0.0
        %v3684 = vmax.f32 %v3668, 0.0
        %v3685 = vmax.f32 %v3669, 0.0
        %v3686 = vmax.f32 %v3670, 0.0
        %v3687 = vmax.f32 %v3671, 0.0
        %v3688 = vmax.f32 %v3672, 0.0
        %v3689 = vmax.f32 %v3673, 0.0
        %v3690 = vmax.f32 %v3674, 0.0
        %v3691 = vmax.f32 %v3675, 0.0
        %v3692 = vmax.f32 %v3676, 0.0
        %v3693 = vmax.f32 %v3677, 0.0
        %v3694 = vmax.f32 %v3678, 0.0
        %v3695 = vmax.f32 %v3679, 0.0
        %v3696 = vpack.c.bf16 %v3681, %v3680
        %v3697 = vpack.c.bf16 %v3683, %v3682
        %v3698 = vpack.c.bf16 %v3685, %v3684
        %v3699 = vpack.c.bf16 %v3687, %v3686
        %v3700 = vpack.c.bf16 %v3689, %v3688
        %v3701 = vpack.c.bf16 %v3691, %v3690
        %v3702 = vpack.c.bf16 %v3693, %v3692
        %v3703 = vpack.c.bf16 %v3695, %v3694
        %v3704 = vld [vmem:[%s5] sm:$0xf]
        %v3705 = vld [vmem:[%s5 + $0x4] sm:$0xf]
        %v3706 = vld [vmem:[%s6] sm:$0x1]
        %v3708 = vlaneseq
        %v3709 = vshrl.u32 %v3708, 7
        %v3710 = vsub.s32 0, %v3709
        %v3711 = vrot.slane %v3706, %v3710
        %v3715 = vunpack.c.l.b16 %v3704
        %v3716 = vunpack.c.l.b16 %v3705
        %v3717 = vpack.c.b16 %v3716, %v3715
        %v3720 = vsel %vm1269, %v3696, 0
        %v3723 = vsel %vm1269, %v3697, 0
        %v3726 = vsel %vm1269, %v3698, 0
        %v3729 = vsel %vm1269, %v3699, 0
        %v3732 = vsel %vm1269, %v3700, 0
        %v3735 = vsel %vm1269, %v3701, 0
        %v3738 = vsel %vm1269, %v3702, 0
        %v3741 = vsel %vm1269, %v3703, 0
        %3743 = vmatprep.subr.bf16.mxu0 0
        %3744 = vmatpush1.bf16.msra.mxu0 0
        %3745 = vmatprep.subr.bf16.mxu0 0
        %3746 = vmatpush1.bf16.msra.mxu0 0
        %3747 = vmatprep.subr.bf16.mxu0 0
        %3748 = vmatpush1.bf16.msra.mxu0 0
        %3749 = vmatprep.subr.bf16.mxu0 0
        %3750 = vmatpush1.bf16.msra.mxu0 0
        %3751 = vmatprep.subr.bf16.mxu0 0
        %3752 = vmatpush1.bf16.msra.mxu0 0
        %3753 = vmatprep.subr.bf16.mxu0 0
        %3754 = vmatpush1.bf16.msra.mxu0 0
        %3755 = vmatprep.subr.bf16.mxu0 0
        %3756 = vmatpush1.bf16.msra.mxu0 0
        %3757 = vmatprep.subr.bf16.mxu0 0
        %3758 = vmatpush1.bf16.msra.mxu0 %v3717
        %3759 = vmatprep.subr.bf16.mxu0 0
        %3760 = vmatpush2.bf16.msra.mxu0 0
        %3761 = vmatprep.subr.bf16.mxu0 0
        %3762 = vmatpush2.bf16.msra.mxu0 0
        %3763 = vmatprep.subr.bf16.mxu0 0
        %3764 = vmatpush2.bf16.msra.mxu0 0
        %3765 = vmatprep.subr.bf16.mxu0 0
        %3766 = vmatpush2.bf16.msra.mxu0 0
        %3767 = vmatprep.subr.bf16.mxu0 0
        %3768 = vmatpush2.bf16.msra.mxu0 0
        %3769 = vmatprep.subr.bf16.mxu0 0
        %3770 = vmatpush2.bf16.msra.mxu0 0
        %3771 = vmatprep.subr.bf16.mxu0 0
        %3772 = vmatpush2.bf16.msra.mxu0 0
        %3773 = vmatprep.subr.bf16.mxu0 0
        %3774 = vmatpush2.bf16.msra.mxu0 0
        %3775 = vmatprep.mubr.bf16.mxu0 0
        %3776 = vmatmul.mubr.bf16.gmra.mxu0 %v3720
        %v3777 = vpop.f32.mrf.mxu0
        %v3778 = vadd.f32 %v3711, %v3777
        %v3779 = vpop.f32.mrf.mxu0
        %v3780 = vpop.f32.mrf.mxu0
        %v3781 = vadd.f32 %v3711, %v3780
        %v3782 = vpop.f32.mrf.mxu0
        %3783 = vmatprep.mubr.bf16.mxu0 0
        %3784 = vmatmul.mubr.bf16.gmra.mxu0 %v3723
        %v3785 = vpop.f32.mrf.mxu0
        %v3786 = vadd.f32 %v3711, %v3785
        %v3787 = vpop.f32.mrf.mxu0
        %v3788 = vpop.f32.mrf.mxu0
        %v3789 = vadd.f32 %v3711, %v3788
        %v3790 = vpop.f32.mrf.mxu0
        %3791 = vmatprep.mubr.bf16.mxu0 0
        %3792 = vmatmul.mubr.bf16.gmra.mxu0 %v3726
        %v3793 = vpop.f32.mrf.mxu0
        %v3794 = vadd.f32 %v3711, %v3793
        %v3795 = vpop.f32.mrf.mxu0
        %v3796 = vpop.f32.mrf.mxu0
        %v3797 = vadd.f32 %v3711, %v3796
        %v3798 = vpop.f32.mrf.mxu0
        %3799 = vmatprep.mubr.bf16.mxu0 0
        %3800 = vmatmul.mubr.bf16.gmra.mxu0 %v3729
        %v3801 = vpop.f32.mrf.mxu0
        %v3802 = vadd.f32 %v3711, %v3801
        %v3803 = vpop.f32.mrf.mxu0
        %v3804 = vpop.f32.mrf.mxu0
        %v3805 = vadd.f32 %v3711, %v3804
        %v3806 = vpop.f32.mrf.mxu0
        %3807 = vmatprep.mubr.bf16.mxu0 0
        %3808 = vmatmul.mubr.bf16.gmra.mxu0 %v3732
        %v3809 = vpop.f32.mrf.mxu0
        %v3810 = vadd.f32 %v3711, %v3809
        %v3811 = vpop.f32.mrf.mxu0
        %v3812 = vpop.f32.mrf.mxu0
        %v3813 = vadd.f32 %v3711, %v3812
        %v3814 = vpop.f32.mrf.mxu0
        %3815 = vmatprep.mubr.bf16.mxu0 0
        %3816 = vmatmul.mubr.bf16.gmra.mxu0 %v3735
        %v3817 = vpop.f32.mrf.mxu0
        %v3818 = vadd.f32 %v3711, %v3817
        %v3819 = vpop.f32.mrf.mxu0
        %v3820 = vpop.f32.mrf.mxu0
        %v3821 = vadd.f32 %v3711, %v3820
        %v3822 = vpop.f32.mrf.mxu0
        %3823 = vmatprep.mubr.bf16.mxu0 0
        %3824 = vmatmul.mubr.bf16.gmra.mxu0 %v3738
        %v3825 = vpop.f32.mrf.mxu0
        %v3826 = vadd.f32 %v3711, %v3825
        %v3827 = vpop.f32.mrf.mxu0
        %v3828 = vpop.f32.mrf.mxu0
        %v3829 = vadd.f32 %v3711, %v3828
        %v3830 = vpop.f32.mrf.mxu0
        %3831 = vmatprep.mubr.bf16.mxu0 0
        %3832 = vmatmul.mubr.bf16.gmra.mxu0 %v3741
        %v3833 = vpop.f32.mrf.mxu0
        %v3834 = vadd.f32 %v3711, %v3833
        %v3835 = vpop.f32.mrf.mxu0
        %v3836 = vpop.f32.mrf.mxu0
        %v3837 = vadd.f32 %v3711, %v3836
        %v3838 = vpop.f32.mrf.mxu0
        %3839 = vdwg.mxu0
        %v3840 = vld [vmem:[%s267] sm:$0xf]
        %v3841 = vld [vmem:[%s267 + $0x4] sm:$0xf]
        %v3842 = vld [vmem:[%s267 + $0x8] sm:$0xf]
        %v3843 = vld [vmem:[%s267 + $0xc] sm:$0xf]
        %v3844 = vld [vmem:[%s267 + $0x10] sm:$0xf]
        %v3845 = vld [vmem:[%s267 + $0x14] sm:$0xf]
        %v3846 = vld [vmem:[%s267 + $0x18] sm:$0xf]
        %v3847 = vld [vmem:[%s267 + $0x1c] sm:$0xf]
        %v3848 = vld [vmem:[%s267 + $0x20] sm:$0xf]
        %v3849 = vld [vmem:[%s267 + $0x24] sm:$0xf]
        %v3850 = vld [vmem:[%s267 + $0x28] sm:$0xf]
        %v3851 = vld [vmem:[%s267 + $0x2c] sm:$0xf]
        %v3852 = vld [vmem:[%s267 + $0x30] sm:$0xf]
        %v3853 = vld [vmem:[%s267 + $0x34] sm:$0xf]
        %v3854 = vld [vmem:[%s267 + $0x38] sm:$0xf]
        %v3855 = vld [vmem:[%s267 + $0x3c] sm:$0xf]
        %v3856 = vunpack.c.l.bf16 %v3840
        %v3857 = vunpack.c.l.bf16 %v3841
        %v3858 = vunpack.c.l.bf16 %v3842
        %v3859 = vunpack.c.l.bf16 %v3843
        %v3860 = vunpack.c.l.bf16 %v3844
        %v3861 = vunpack.c.l.bf16 %v3845
        %v3862 = vunpack.c.l.bf16 %v3846
        %v3863 = vunpack.c.l.bf16 %v3847
        %v3864 = vunpack.c.l.bf16 %v3848
        %v3865 = vunpack.c.l.bf16 %v3849
        %v3866 = vunpack.c.l.bf16 %v3850
        %v3867 = vunpack.c.l.bf16 %v3851
        %v3868 = vunpack.c.l.bf16 %v3852
        %v3869 = vunpack.c.l.bf16 %v3853
        %v3870 = vunpack.c.l.bf16 %v3854
        %v3871 = vunpack.c.l.bf16 %v3855
        %v3872 = vadd.f32 %v3778, %v3856
        %v3873 = vadd.f32 %v3781, %v3857
        %v3874 = vadd.f32 %v3786, %v3858
        %v3875 = vadd.f32 %v3789, %v3859
        %v3876 = vadd.f32 %v3794, %v3860
        %v3877 = vadd.f32 %v3797, %v3861
        %v3878 = vadd.f32 %v3802, %v3862
        %v3879 = vadd.f32 %v3805, %v3863
        %v3880 = vadd.f32 %v3810, %v3864
        %v3881 = vadd.f32 %v3813, %v3865
        %v3882 = vadd.f32 %v3818, %v3866
        %v3883 = vadd.f32 %v3821, %v3867
        %v3884 = vadd.f32 %v3826, %v3868
        %v3885 = vadd.f32 %v3829, %v3869
        %v3886 = vadd.f32 %v3834, %v3870
        %v3887 = vadd.f32 %v3837, %v3871
        %v3888 = vmax.f32 %v3872, 0.0
        %v3889 = vmax.f32 %v3873, 0.0
        %v3890 = vmax.f32 %v3874, 0.0
        %v3891 = vmax.f32 %v3875, 0.0
        %v3892 = vmax.f32 %v3876, 0.0
        %v3893 = vmax.f32 %v3877, 0.0
        %v3894 = vmax.f32 %v3878, 0.0
        %v3895 = vmax.f32 %v3879, 0.0
        %v3896 = vmax.f32 %v3880, 0.0
        %v3897 = vmax.f32 %v3881, 0.0
        %v3898 = vmax.f32 %v3882, 0.0
        %v3899 = vmax.f32 %v3883, 0.0
        %v3900 = vmax.f32 %v3884, 0.0
        %v3901 = vmax.f32 %v3885, 0.0
        %v3902 = vmax.f32 %v3886, 0.0
        %v3903 = vmax.f32 %v3887, 0.0
        %v3904 = vpack.c.bf16 %v3888, %v3888
        %v3905 = vpack.c.bf16 %v3889, %v3889
        %v3906 = vpack.c.bf16 %v3890, %v3890
        %v3907 = vpack.c.bf16 %v3891, %v3891
        %v3908 = vpack.c.bf16 %v3892, %v3892
        %v3909 = vpack.c.bf16 %v3893, %v3893
        %v3910 = vpack.c.bf16 %v3894, %v3894
        %v3911 = vpack.c.bf16 %v3895, %v3895
        %v3912 = vpack.c.bf16 %v3896, %v3896
        %v3913 = vpack.c.bf16 %v3897, %v3897
        %v3914 = vpack.c.bf16 %v3898, %v3898
        %v3915 = vpack.c.bf16 %v3899, %v3899
        %v3916 = vpack.c.bf16 %v3900, %v3900
        %v3917 = vpack.c.bf16 %v3901, %v3901
        %v3918 = vpack.c.bf16 %v3902, %v3902
        %v3919 = vpack.c.bf16 %v3903, %v3903
        %vm3920 = vcmask 519168
        %3921 = vst.msk [vmem:[%s297] sm:$0xf] %vm3920, %v3904
        %3922 = vst.msk [vmem:[%s297 + $0x4] sm:$0xf] %vm3920, %v3905
        %3923 = vst.msk [vmem:[%s297 + $0x8] sm:$0xf] %vm3920, %v3906
        %3924 = vst.msk [vmem:[%s297 + $0xc] sm:$0xf] %vm3920, %v3907
        %3925 = vst.msk [vmem:[%s297 + $0x10] sm:$0xf] %vm3920, %v3908
        %3926 = vst.msk [vmem:[%s297 + $0x14] sm:$0xf] %vm3920, %v3909
        %3927 = vst.msk [vmem:[%s297 + $0x18] sm:$0xf] %vm3920, %v3910
        %3928 = vst.msk [vmem:[%s297 + $0x1c] sm:$0xf] %vm3920, %v3911
        %3929 = vst.msk [vmem:[%s297 + $0x20] sm:$0xf] %vm3920, %v3912
        %3930 = vst.msk [vmem:[%s297 + $0x24] sm:$0xf] %vm3920, %v3913
        %3931 = vst.msk [vmem:[%s297 + $0x28] sm:$0xf] %vm3920, %v3914
        %3932 = vst.msk [vmem:[%s297 + $0x2c] sm:$0xf] %vm3920, %v3915
        %3933 = vst.msk [vmem:[%s297 + $0x30] sm:$0xf] %vm3920, %v3916
        %3934 = vst.msk [vmem:[%s297 + $0x34] sm:$0xf] %vm3920, %v3917
        %3935 = vst.msk [vmem:[%s297 + $0x38] sm:$0xf] %vm3920, %v3918
        %3936 = vst.msk [vmem:[%s297 + $0x3c] sm:$0xf] %vm3920, %v3919
        %s3937 = sand.u32 %s184, 1
        %s3938 = scalar_lea.sflag [#allocation5], %s3937
        %s3939 = sand.u32 %s184, 1
        %s3940 = smul.addr %s3939, 64
        %s3941 = scalar_lea.vmem [#allocation6], %s3940
        // Predicated region
        $region53: #{tpu_custom_call.1} parent=47 // pred_check
          %p3942 = pneg %p194
        $region54: #{tpu_custom_call.1} parent=47 // pred_check_branch
          %3944 = sbr.rel (%p3942) target = $region56
        $region55: #{tpu_custom_call.1} parent=47 // pred_region
          %s3945 = smul.u32 2, %s24
          %s3947 = ssub.s32 1024, 1024
          %3948 = vsyncadd %s3938, %s3947
          %s3949 = smul.addr %s3945, 8
          %s3950 = smul.addr %s3949, 64
          %s3951 = scalar_lea.hbm %s7, %s3950
          %s3952 = sshll.u32 %s3941, 4
          %s3953 = int_to_ptr.vmem [resolvable:$true] %s3952
          %3958 = dma.vmem_to_hbm [thread:$0]  %s3953, 1024, %s3951, %s3938, 64, 64, 4
        $region56: #{tpu_custom_call.1} parent=47 // pred_fallthru
          _
      $region48: #{tpu_custom_call.1} parent=5 // pred_fallthru
        _
      %p3959 = scmp.le.s32.totalorder 2, %s19
      // Predicated region
      $region57: #{tpu_custom_call.1} parent=5 // pred_check
        %p3960 = pneg %p3959
      $region58: #{tpu_custom_call.1} parent=5 // pred_check_branch
        %3962 = sbr.rel (%p3960) target = $region60
      $region59: #{tpu_custom_call.1} parent=5 // pred_region
        %s3963 = ssub.s32 %s19, 2
        // Predicated region
        $region61: #{tpu_custom_call.1} parent=59 // pred_check
          %p3964 = pneg %p200
        $region62: #{tpu_custom_call.1} parent=59 // pred_check_branch
          %3966 = sbr.rel (%p3964) target = $region64
        $region63: #{tpu_custom_call.1} parent=59 // pred_region
          %s3967 = sand.u32 %s185, 1
          %s3968 = scalar_lea.sflag [#allocation5], %s3967
          %s3969 = sand.u32 %s185, 1
          %s3970 = smul.addr %s3969, 64
          %s3971 = scalar_lea.vmem [#allocation6], %s3970
          %3972 = dma.done %s3968, 1024
        $region64: #{tpu_custom_call.1} parent=59 // pred_fallthru
          _
      $region60: #{tpu_custom_call.1} parent=5 // pred_fallthru
        _
    $region6: #{tpu_custom_call.1} parent=1 // loop_footer
      %s23 = sadd.s32 1, %s19
    $region7: #{tpu_custom_call.1} parent=1 // loop_footer_branch
      %18 = sbr.rel target = $region3
    $region8: #{tpu_custom_call.1} parent=1 // loop_exit
      _
    %3973 = vsyncpa [#allocation4], 1
    %s3974 = scalar_lea.sflag [#allocation4], 1
    %3975 = vsyncpa %s3974, 1
    %3976 = vsyncpa [#allocation5], 1
    %s3977 = scalar_lea.sflag [#allocation5], 1
    %3978 = vsyncpa %s3977, 1

</llo_original>
